<compile_context>
chip_gen: v7x
topology: tpu7x:2x2x1
jax: 0.10.0
libtpu: 0.0.40
codegen_flags: <defaults>
</compile_context>

<pallas_src>
import functools

import jax
import jax.numpy as jnp
from jax.experimental import pallas as pl
from jax.experimental.pallas import tpu as pltpu

NEURONS = 32

# Column layout of the packed (32, 128) parameter slab.
_W2_LO, _W2_HI = 0, 32        # w2  (32, 32)
_W3_LO, _W3_HI = 32, 64       # w3  (32, 32)
_W1X_COL = 64                 # w1[:, 0]  (acts on x)
_W1T_COL = 65                 # w1[:, 1]  (acts on t)
_B1_COL = 66
_B2_COL = 67
_B3_COL = 68
_W4_COL = 69                  # w4[0, :] stored as a column
_B4_COL = 70                  # scalar at row 0


def _round_up(n, m):
    return ((n + m - 1) // m) * m


def _has_bf16_vpu():
    """bf16 VPU/EUP exists on v6e (Trillium) and later; v5e/v5p/v4/... lack it."""
    try:
        kind = jax.devices()[0].device_kind.lower()
    except Exception:
        return False
    for old in ("v2", "v3", "v4", "v5"):
        if old in kind:
            return False
    return ("v6" in kind) or ("v7" in kind) or ("trillium" in kind) or ("7x" in kind)


def _pack_params(params):
    """Pack the 4 Linear layers into one (32, 128) f32 slab (single VMEM input)."""
    w1, b1, w2, b2, w3, b3, w4, b4 = params
    slab = jnp.zeros((NEURONS, 128), jnp.float32)
    slab = slab.at[:, _W2_LO:_W2_HI].set(w2)
    slab = slab.at[:, _W3_LO:_W3_HI].set(w3)
    slab = slab.at[:, _W1X_COL].set(w1[:, 0])
    slab = slab.at[:, _W1T_COL].set(w1[:, 1])
    slab = slab.at[:, _B1_COL].set(b1[:, 0])
    slab = slab.at[:, _B2_COL].set(b2[:, 0])
    slab = slab.at[:, _B3_COL].set(b3[:, 0])
    slab = slab.at[:, _W4_COL].set(w4[0, :])
    slab = slab.at[0, _B4_COL].set(b4[0, 0])
    return slab


def _mlp_kernel(x_ref, t_ref, p_ref, out_ref, *, compute_dtype, mxu_precision):
    """Whole 4-layer MLP on one batch tile. Activations are (32, tile)."""
    x = x_ref[...]                                   # (1, tile) f32
    t = t_ref[...]                                   # (1, tile) f32

    # Static slices of the packed parameter slab (single full-block input).
    w2 = p_ref[:, _W2_LO:_W2_HI]                     # (32, 32)
    w3 = p_ref[:, _W3_LO:_W3_HI]                     # (32, 32)
    w1x = p_ref[:, _W1X_COL:_W1X_COL + 1]            # (32, 1)
    w1t = p_ref[:, _W1T_COL:_W1T_COL + 1]            # (32, 1)
    b1 = p_ref[:, _B1_COL:_B1_COL + 1]               # (32, 1)
    b2 = p_ref[:, _B2_COL:_B2_COL + 1]               # (32, 1)
    b3 = p_ref[:, _B3_COL:_B3_COL + 1]               # (32, 1)
    w4 = p_ref[:, _W4_COL:_W4_COL + 1]               # (32, 1)
    b4 = p_ref[0:1, _B4_COL:_B4_COL + 1]             # (1, 1)

    # Layer 1: K=2 contraction as broadcasted FMAs on the VPU (f32), then tanh.
    z1 = w1x * x + w1t * t + b1                      # (32, tile) f32
    h = jnp.tanh(z1.astype(compute_dtype))

    # Layers 2 & 3: (32,32)@(32,tile) wide-N matmuls on the MXU, f32 accumulation.
    z2 = jnp.dot(w2.astype(compute_dtype), h,
                 preferred_element_type=jnp.float32, precision=mxu_precision) + b2
    h = jnp.tanh(z2.astype(compute_dtype))
    z3 = jnp.dot(w3.astype(compute_dtype), h,
                 preferred_element_type=jnp.float32, precision=mxu_precision) + b3
    h = jnp.tanh(z3.astype(compute_dtype))

    # Output layer (M=1): VPU multiply + sublane (XLU) reduce — skips the MXU
    # drain tail for a 1-row result.  Done in f32 for accuracy.
    out = jnp.sum(w4 * h.astype(jnp.float32), axis=0, keepdims=True) + b4
    out_ref[...] = out.astype(out_ref.dtype)         # (1, tile) lane-dense store


def e1net_forward(x, t, params, *, tile_m=4096, compute_dtype=None):
    """x, t: (N, 1) float32 column vectors. Returns (N, 1) float32.

    compute_dtype=None auto-selects bf16 on v6e/v7x and f32 on v5e and older.
    tile_m is the batch tile (rounded to a multiple of 256); the batch is
    zero-padded to a multiple of the tile, so any N is accepted.
    """
    N = x.shape[0]
    if compute_dtype is None:
        compute_dtype = jnp.bfloat16 if _has_bf16_vpu() else jnp.float32
    # f32 path: force exact f32 MXU accumulation (MXU is far from saturated).
    mxu_precision = (jax.lax.Precision.HIGHEST
                     if compute_dtype == jnp.float32 else None)

    # (N,1) -> (1,N) is a pure reshape (same memory order): lane-dense slabs,
    # no HBM concatenate round trip.
    x_row = x.reshape(1, N).astype(jnp.float32)
    t_row = t.reshape(1, N).astype(jnp.float32)

    # Effective tile: multiple of 256 (unmasked lane-dense stores), capped by N.
    tile = min(_round_up(max(tile_m, 256), 256), _round_up(N, 256))
    n_pad = _round_up(N, tile)
    if n_pad != N:
        pad = n_pad - N
        x_row = jnp.pad(x_row, ((0, 0), (0, pad)))
        t_row = jnp.pad(t_row, ((0, 0), (0, pad)))

    slab = _pack_params(params)

    kernel = functools.partial(_mlp_kernel,
                               compute_dtype=compute_dtype,
                               mxu_precision=mxu_precision)

    lane_spec = pl.BlockSpec((1, tile), lambda i: (0, i))

    out_row = pl.pallas_call(
        kernel,
        out_shape=jax.ShapeDtypeStruct((1, n_pad), jnp.float32),
        grid_spec=pltpu.PrefetchScalarGridSpec(
            num_scalar_prefetch=0,
            grid=(n_pad // tile,),
            in_specs=[
                lane_spec,                                   # x  (batch on lanes)
                lane_spec,                                   # t
                pl.BlockSpec(slab.shape, lambda i: (0, 0)),  # packed params (one DMA)
            ],
            out_specs=lane_spec,                             # lane-dense (1, tile)
        ),
        compiler_params=pltpu.CompilerParams(
            # Batch axis is embarrassingly parallel -> v7x's 2 TCs split it;
            # no-op on v5e/v6e.  Keep tiles moderate (<= ~16K) so the same
            # config fits v7x's smaller VMEM; 32 MiB is ample headroom here.
            dimension_semantics=("parallel",),
            vmem_limit_bytes=32 * 1024 * 1024),
    )(x_row, t_row, slab)

    return out_row[0, :N].reshape(N, 1)


def init_e1net_params(key):
    """Deterministic init matching the PyTorch module's shapes.

    Weights stored (out_features, in_features) like PyTorch (xavier_uniform_);
    biases (out_features, 1).  nn.Linear's default bias init is
    uniform(-1/sqrt(fan_in), 1/sqrt(fan_in)).
    """
    dims = [(2, NEURONS), (NEURONS, NEURONS), (NEURONS, NEURONS), (NEURONS, 1)]
    params = []
    for fan_in, fan_out in dims:
        key, kw, kb = jax.random.split(key, 3)
        limit = jnp.sqrt(6.0 / (fan_in + fan_out))          # xavier uniform
        w = jax.random.uniform(kw, (fan_out, fan_in), jnp.float32, -limit, limit)
        bbound = 1.0 / jnp.sqrt(jnp.float32(fan_in))
        b = jax.random.uniform(kb, (fan_out, 1), jnp.float32, -bbound, bbound)
        params.extend([w, b])
    return tuple(params)


def e1net_reference(x, t, params):
    """Pure-JAX reference (exact f32 math, identical semantics)."""
    w1, b1, w2, b2, w3, b3, w4, b4 = params
    hp = jax.lax.Precision.HIGHEST
    h = jnp.concatenate([x, t], axis=1)                      # (N, 2)
    h = jnp.tanh(jnp.dot(h, w1.T, precision=hp) + b1.T)
    h = jnp.tanh(jnp.dot(h, w2.T, precision=hp) + b2.T)
    h = jnp.tanh(jnp.dot(h, w3.T, precision=hp) + b3.T)
    return jnp.dot(h, w4.T, precision=hp) + b4.T


if __name__ == "__main__":
    key = jax.random.PRNGKey(0)
    key, kx, kt = jax.random.split(key, 3)

    N = 1000                       # deliberately not tile-aligned: exercises padding
    x = jax.random.normal(kx, (N, 1), jnp.float32)
    t = jax.random.normal(kt, (N, 1), jnp.float32)

    params = init_e1net_params(key)
    ref = e1net_reference(x, t, params)

    # Exact f32 compute path: must match the f32 reference tightly.
    out = e1net_forward(x, t, params, compute_dtype=jnp.float32)
    out = jax.block_until_ready(out)
    assert out.shape == (N, 1)
    assert jnp.allclose(out, ref, atol=1e-5, rtol=1e-5), "f32 path mismatch vs reference"

    # Auto compute dtype (bf16 on v6e/v7x, f32 on v5e and older): the perf path.
    out_fast = jax.block_until_ready(e1net_forward(x, t, params))
    assert out_fast.shape == (N, 1)
    assert bool(jnp.all(jnp.isfinite(out_fast)))
    assert jnp.allclose(out_fast, ref, atol=1e-1, rtol=1e-1), "fast path sanity check failed"

    print("KERNEL_OK")
</pallas_src>

<mosaic_0001>
module attributes {stable_mosaic.version = 11 : i64} {
  func.func @_mlp_kernel(%arg0: i32, %arg1: memref<1x1024xf32, #tpu.memory_space<vmem>>, %arg2: memref<1x1024xf32, #tpu.memory_space<vmem>>, %arg3: memref<32x128xf32, #tpu.memory_space<vmem>>, %arg4: memref<1x1024xf32, #tpu.memory_space<vmem>>) attributes {dimension_semantics = [#tpu.dimension_semantics<parallel>], iteration_bounds = array<i64: 1>, scalar_prefetch = 0 : i64, scratch_operands = 0 : i64, tpu.core_type = #tpu.core_type<tc>, window_params = [{transform_indices = @transform_0, window_bounds = array<i64: 1, 1024>}, {transform_indices = @transform_1, window_bounds = array<i64: 1, 1024>}, {pipeline_mode = #tpu.pipeline_mode<synchronous>, transform_indices = @transform_2, window_bounds = array<i64: 32, 128>}, {transform_indices = @transform_3, window_bounds = array<i64: 1, 1024>}]} {
    %c0 = arith.constant 0 : index
    %c0_0 = arith.constant 0 : index
    %0 = vector.load %arg1[%c0, %c0_0] : memref<1x1024xf32, #tpu.memory_space<vmem>>, vector<1x1024xf32>
    %c0_1 = arith.constant 0 : index
    %c0_2 = arith.constant 0 : index
    %1 = vector.load %arg2[%c0_1, %c0_2] : memref<1x1024xf32, #tpu.memory_space<vmem>>, vector<1x1024xf32>
    %c0_3 = arith.constant 0 : index
    %c0_4 = arith.constant 0 : index
    %2 = vector.load %arg3[%c0_3, %c0_4] : memref<32x128xf32, #tpu.memory_space<vmem>>, vector<32x32xf32>
    %c0_5 = arith.constant 0 : index
    %c32 = arith.constant 32 : index
    %3 = vector.load %arg3[%c0_5, %c32] : memref<32x128xf32, #tpu.memory_space<vmem>>, vector<32x32xf32>
    %c0_6 = arith.constant 0 : index
    %c64 = arith.constant 64 : index
    %4 = vector.load %arg3[%c0_6, %c64] : memref<32x128xf32, #tpu.memory_space<vmem>>, vector<32x1xf32>
    %c0_7 = arith.constant 0 : index
    %c65 = arith.constant 65 : index
    %5 = vector.load %arg3[%c0_7, %c65] : memref<32x128xf32, #tpu.memory_space<vmem>>, vector<32x1xf32>
    %c0_8 = arith.constant 0 : index
    %c66 = arith.constant 66 : index
    %6 = vector.load %arg3[%c0_8, %c66] : memref<32x128xf32, #tpu.memory_space<vmem>>, vector<32x1xf32>
    %c0_9 = arith.constant 0 : index
    %c67 = arith.constant 67 : index
    %7 = vector.load %arg3[%c0_9, %c67] : memref<32x128xf32, #tpu.memory_space<vmem>>, vector<32x1xf32>
    %c0_10 = arith.constant 0 : index
    %c68 = arith.constant 68 : index
    %8 = vector.load %arg3[%c0_10, %c68] : memref<32x128xf32, #tpu.memory_space<vmem>>, vector<32x1xf32>
    %c0_11 = arith.constant 0 : index
    %c69 = arith.constant 69 : index
    %9 = vector.load %arg3[%c0_11, %c69] : memref<32x128xf32, #tpu.memory_space<vmem>>, vector<32x1xf32>
    %c0_12 = arith.constant 0 : index
    %c70 = arith.constant 70 : index
    %10 = vector.load %arg3[%c0_12, %c70] : memref<32x128xf32, #tpu.memory_space<vmem>>, vector<1x1xf32>
    %11 = vector.broadcast %4 : vector<32x1xf32> to vector<32x1024xf32>
    %12 = vector.broadcast %0 : vector<1x1024xf32> to vector<32x1024xf32>
    %13 = arith.mulf %11, %12 : vector<32x1024xf32>
    %14 = vector.broadcast %5 : vector<32x1xf32> to vector<32x1024xf32>
    %15 = vector.broadcast %1 : vector<1x1024xf32> to vector<32x1024xf32>
    %16 = arith.mulf %14, %15 : vector<32x1024xf32>
    %17 = arith.addf %13, %16 : vector<32x1024xf32>
    %18 = vector.broadcast %6 : vector<32x1xf32> to vector<32x1024xf32>
    %19 = arith.addf %17, %18 : vector<32x1024xf32>
    %20 = math.tanh %19 : vector<32x1024xf32>
    %cst = arith.constant dense<0.000000e+00> : vector<32x1024xf32>
    %21 = tpu.matmul %2, %20, %cst {dimension_numbers = #tpu.dot_dimension_numbers<[1], [0], [0], [1], [0, 0, 1, 1], [], []>, precision = #tpu.contract_precision<fp32>} : vector<32x32xf32>, vector<32x1024xf32>, vector<32x1024xf32> -> vector<32x1024xf32>
    %22 = vector.broadcast %7 : vector<32x1xf32> to vector<32x1024xf32>
    %23 = arith.addf %21, %22 : vector<32x1024xf32>
    %24 = math.tanh %23 : vector<32x1024xf32>
    %cst_13 = arith.constant dense<0.000000e+00> : vector<32x1024xf32>
    %25 = tpu.matmul %3, %24, %cst_13 {dimension_numbers = #tpu.dot_dimension_numbers<[1], [0], [0], [1], [0, 0, 1, 1], [], []>, precision = #tpu.contract_precision<fp32>} : vector<32x32xf32>, vector<32x1024xf32>, vector<32x1024xf32> -> vector<32x1024xf32>
    %26 = vector.broadcast %8 : vector<32x1xf32> to vector<32x1024xf32>
    %27 = arith.addf %25, %26 : vector<32x1024xf32>
    %28 = math.tanh %27 : vector<32x1024xf32>
    %29 = vector.broadcast %9 : vector<32x1xf32> to vector<32x1024xf32>
    %30 = arith.mulf %29, %28 : vector<32x1024xf32>
    %cst_14 = arith.constant dense<0.000000e+00> : vector<1024xf32>
    %31 = vector.multi_reduction <add>, %30, %cst_14 [0] : vector<32x1024xf32> to vector<1024xf32>
    %32 = vector.shape_cast %31 : vector<1024xf32> to vector<1x1024xf32>
    %33 = vector.broadcast %10 : vector<1x1xf32> to vector<1x1024xf32>
    %34 = arith.addf %32, %33 : vector<1x1024xf32>
    %c0_15 = arith.constant 0 : index
    %c0_16 = arith.constant 0 : index
    %35 = vector.load %arg4[%c0_15, %c0_16] : memref<1x1024xf32, #tpu.memory_space<vmem>>, vector<1x1024xf32>
    tpu.vector_store %arg4[%c0_15, %c0_16], %34 {strides = array<i32>} : memref<1x1024xf32, #tpu.memory_space<vmem>>, vector<1x1024xf32>,
    return
  }
  func.func @transform_0(%arg0: i32) -> (i32, i32) {
    %c0_i32 = arith.constant 0 : i32
    %c0_i32_0 = arith.constant 0 : i32
    return %c0_i32, %arg0 : i32, i32
  }
  func.func @transform_1(%arg0: i32) -> (i32, i32) {
    %c0_i32 = arith.constant 0 : i32
    %c0_i32_0 = arith.constant 0 : i32
    return %c0_i32, %arg0 : i32, i32
  }
  func.func @transform_2(%arg0: i32) -> (i32, i32) {
    %c0_i32 = arith.constant 0 : i32
    %c0_i32_0 = arith.constant 0 : i32
    %c0_i32_1 = arith.constant 0 : i32
    return %c0_i32, %c0_i32_0 : i32, i32
  }
  func.func @transform_3(%arg0: i32) -> (i32, i32) {
    %c0_i32 = arith.constant 0 : i32
    %c0_i32_0 = arith.constant 0 : i32
    return %c0_i32, %arg0 : i32, i32
  }
}

</mosaic_0001>

<llo_original>
// kernel: tpu_custom_call.1
$region0: #{tpu_custom_call.1}
  #allocation0 [shape = 'u32[]', space=smem, size = 0x4, offset = 0x4, fixed_abs, tag = 'smem constant byte address 0x4 - core index']
  #allocation1 [shape = 'u32[144,128]{1,0:T(1,128)}', space=vmem, size = 0x12000, scoped, tag = 'internal scratch']
  %s0 = inlined_call_operand.hbm [shape: f32[1,1024], index: 0, kind: input, shape index: {}]
  %s1 = inlined_call_operand.hbm [shape: f32[1,1024], index: 1, kind: input, shape index: {}]
  %s2 = inlined_call_operand.hbm [shape: f32[32,128], index: 2, kind: input, shape index: {}]
  %s3 = inlined_call_operand.hbm [shape: f32[1,1024], index: 3, kind: output, shape index: {}]
  %s4 = sld [smem:[#allocation0]]
  $region34: #{tpu_custom_call.1} parent=0
    _
  %s6 = ssub.s32 1, %s4
  %s7 = scalar_select 0, %s6, %s4
  $region1: #{tpu_custom_call.1} parent=0
    #allocation2 [shape = 'u8[4096]{0}', space=vmem, size = 0x1000, scoped, tag = 'input window, operand 0, single buffered']
    #allocation3 [shape = 's32[1]{0}', space=sflag, size = 0x4, scoped, tag = 'scoped memory for tpu_custom_call.1']
    #allocation4 [shape = 's32[1]{0}', space=sflag, size = 0x4, scoped, tag = 'scoped memory for tpu_custom_call.1']
    #allocation5 [shape = 'u8[4096]{0}', space=vmem, size = 0x1000, scoped, tag = 'input window, operand 1, single buffered']
    #allocation6 [shape = 's32[1]{0}', space=sflag, size = 0x4, scoped, tag = 'scoped memory for tpu_custom_call.1']
    #allocation7 [shape = 'u8[16384]{0}', space=vmem, size = 0x4000, scoped, tag = 'input window, operand 2, single buffered']
    #allocation8 [shape = 'u8[4096]{0}', space=vmem, size = 0x1000, scoped, tag = 'output window, operand 0, single buffered']
    %8 = vsyncpa [#allocation3], 0
    %9 = vsyncpa [#allocation6], 0
    %10 = vsyncpa [#allocation4], 0
    // Predicated region
    $region2: #{tpu_custom_call.1} parent=1 // pred_check
      _
    $region3: #{tpu_custom_call.1} parent=1 // pred_check_branch
      %12 = sbr.rel (0) target = $region5
    $region4: #{tpu_custom_call.1} parent=1 // pred_region
      %s14 = ssub.s32 128, 128
      %15 = vsyncadd [#allocation3], %s14
      %s17 = sshll.u32 [#allocation2], 4
      %s18 = int_to_ptr.vmem [resolvable:$true] %s17
      %20 = dma.hbm_to_vmem [thread:$0]  %s0, 128, %s18, [#allocation3]
    $region5: #{tpu_custom_call.1} parent=1 // pred_fallthru
      _
    // Predicated region
    $region6: #{tpu_custom_call.1} parent=1 // pred_check
      _
    $region7: #{tpu_custom_call.1} parent=1 // pred_check_branch
      %22 = sbr.rel (0) target = $region9
    $region8: #{tpu_custom_call.1} parent=1 // pred_region
      %s24 = ssub.s32 128, 128
      %25 = vsyncadd [#allocation6], %s24
      %s27 = sshll.u32 [#allocation5], 4
      %s28 = int_to_ptr.vmem [resolvable:$true] %s27
      %30 = dma.hbm_to_vmem [thread:$0]  %s1, 128, %s28, [#allocation6]
    $region9: #{tpu_custom_call.1} parent=1 // pred_fallthru
      _
    // Predicated region
    $region10: #{tpu_custom_call.1} parent=1 // pred_check
      _
    $region11: #{tpu_custom_call.1} parent=1 // pred_check_branch
      %32 = sbr.rel (0) target = $region13
    $region12: #{tpu_custom_call.1} parent=1 // pred_region
      %s34 = ssub.s32 512, 512
      %35 = vsyncadd [#allocation6], %s34
      %s36 = sshll.u32 [#allocation7], 4
      %s37 = int_to_ptr.vmem [resolvable:$true] %s36
      %42 = dma.hbm_to_vmem [thread:$0]  %s2, 512, %s37, [#allocation6], 128, 128, 8
    $region13: #{tpu_custom_call.1} parent=1 // pred_fallthru
      _
    // Predicated region
    $region14: #{tpu_custom_call.1} parent=1 // pred_check
      _
    $region15: #{tpu_custom_call.1} parent=1 // pred_check_branch
      %44 = sbr.rel (0) target = $region17
    $region16: #{tpu_custom_call.1} parent=1 // pred_region
      %45 = dma.done [#allocation3], 128
    $region17: #{tpu_custom_call.1} parent=1 // pred_fallthru
      _
    // Predicated region
    $region18: #{tpu_custom_call.1} parent=1 // pred_check
      _
    $region19: #{tpu_custom_call.1} parent=1 // pred_check_branch
      %47 = sbr.rel (0) target = $region21
    $region20: #{tpu_custom_call.1} parent=1 // pred_region
      %48 = dma.done [#allocation6], 128
    $region21: #{tpu_custom_call.1} parent=1 // pred_fallthru
      _
    // Predicated region
    $region22: #{tpu_custom_call.1} parent=1 // pred_check
      _
    $region23: #{tpu_custom_call.1} parent=1 // pred_check_branch
      %50 = sbr.rel (0) target = $region25
    $region24: #{tpu_custom_call.1} parent=1 // pred_region
      %51 = dma.done [#allocation6], 512
    $region25: #{tpu_custom_call.1} parent=1 // pred_fallthru
      _
    %v52 = vld [vmem:[#allocation2] sm:$0xff]
    %v53 = vld [vmem:[#allocation5] sm:$0xff]
    %v54 = vld [vmem:[#allocation7] sm:$0xff]
    %v55 = vld [vmem:[#allocation7 + $0x8] sm:$0xff]
    %v56 = vld [vmem:[#allocation7 + $0x10] sm:$0xff]
    %v57 = vld [vmem:[#allocation7 + $0x18] sm:$0xff]
    %v58 = vld [vmem:[#allocation7] sm:$0x1]
    %60 = vset.pattern.permute.xlu0 64
    %61 = vperm.xlu0 %60, %v54
    %v62 = vpop.permute.xlu0 %61
    %65 = vset.pattern.permute.xlu0 64
    %66 = vperm.xlu0 %65, %v55
    %v67 = vpop.permute.xlu0 %66
    %70 = vset.pattern.permute.xlu0 64
    %71 = vperm.xlu0 %70, %v56
    %v72 = vpop.permute.xlu0 %71
    %75 = vset.pattern.permute.xlu0 64
    %76 = vperm.xlu0 %75, %v57
    %v77 = vpop.permute.xlu0 %76
    %v80 = vlaneseq
    %v81 = vshrl.u32 %v80, 7
    %v82 = vsub.s32 0, %v81
    %v83 = vrot.slane %v52, %v82
    %v84 = vlaneseq
    %v85 = vshrl.u32 %v84, 7
    %v86 = vsub.s32 1, %v85
    %v87 = vrot.slane %v52, %v86
    %v88 = vlaneseq
    %v89 = vshrl.u32 %v88, 7
    %v90 = vsub.s32 2, %v89
    %v91 = vrot.slane %v52, %v90
    %v92 = vlaneseq
    %v93 = vshrl.u32 %v92, 7
    %v94 = vsub.s32 3, %v93
    %v95 = vrot.slane %v52, %v94
    %v96 = vlaneseq
    %v97 = vshrl.u32 %v96, 7
    %v98 = vsub.s32 4, %v97
    %v99 = vrot.slane %v52, %v98
    %v100 = vlaneseq
    %v101 = vshrl.u32 %v100, 7
    %v102 = vsub.s32 5, %v101
    %v103 = vrot.slane %v52, %v102
    %v104 = vlaneseq
    %v105 = vshrl.u32 %v104, 7
    %v106 = vsub.s32 6, %v105
    %v107 = vrot.slane %v52, %v106
    %v108 = vlaneseq
    %v109 = vshrl.u32 %v108, 7
    %v110 = vsub.s32 7, %v109
    %v111 = vrot.slane %v52, %v110
    %v120 = vmul.f32 %v62, %v83
    %v121 = vmul.f32 %v62, %v87
    %v122 = vmul.f32 %v62, %v91
    %v123 = vmul.f32 %v62, %v95
    %v124 = vmul.f32 %v62, %v99
    %v125 = vmul.f32 %v62, %v103
    %v126 = vmul.f32 %v62, %v107
    %v127 = vmul.f32 %v62, %v111
    %v128 = vmul.f32 %v67, %v83
    %v129 = vmul.f32 %v67, %v87
    %v130 = vmul.f32 %v67, %v91
    %v131 = vmul.f32 %v67, %v95
    %v132 = vmul.f32 %v67, %v99
    %v133 = vmul.f32 %v67, %v103
    %v134 = vmul.f32 %v67, %v107
    %v135 = vmul.f32 %v67, %v111
    %v136 = vmul.f32 %v72, %v83
    %v137 = vmul.f32 %v72, %v87
    %v138 = vmul.f32 %v72, %v91
    %v139 = vmul.f32 %v72, %v95
    %v140 = vmul.f32 %v72, %v99
    %v141 = vmul.f32 %v72, %v103
    %v142 = vmul.f32 %v72, %v107
    %v143 = vmul.f32 %v72, %v111
    %v144 = vmul.f32 %v77, %v83
    %v145 = vmul.f32 %v77, %v87
    %v146 = vmul.f32 %v77, %v91
    %v147 = vmul.f32 %v77, %v95
    %v148 = vmul.f32 %v77, %v99
    %v149 = vmul.f32 %v77, %v103
    %v150 = vmul.f32 %v77, %v107
    %v151 = vmul.f32 %v77, %v111
    %152 = vset.pattern.permute.xlu0 65
    %153 = vperm.xlu0 %152, %v54
    %v154 = vpop.permute.xlu0 %153
    %156 = vset.pattern.permute.xlu0 65
    %157 = vperm.xlu0 %156, %v55
    %v158 = vpop.permute.xlu0 %157
    %160 = vset.pattern.permute.xlu0 65
    %161 = vperm.xlu0 %160, %v56
    %v162 = vpop.permute.xlu0 %161
    %164 = vset.pattern.permute.xlu0 65
    %165 = vperm.xlu0 %164, %v57
    %v166 = vpop.permute.xlu0 %165
    %v169 = vlaneseq
    %v170 = vshrl.u32 %v169, 7
    %v171 = vsub.s32 0, %v170
    %v172 = vrot.slane %v53, %v171
    %v173 = vlaneseq
    %v174 = vshrl.u32 %v173, 7
    %v175 = vsub.s32 1, %v174
    %v176 = vrot.slane %v53, %v175
    %v177 = vlaneseq
    %v178 = vshrl.u32 %v177, 7
    %v179 = vsub.s32 2, %v178
    %v180 = vrot.slane %v53, %v179
    %v181 = vlaneseq
    %v182 = vshrl.u32 %v181, 7
    %v183 = vsub.s32 3, %v182
    %v184 = vrot.slane %v53, %v183
    %v185 = vlaneseq
    %v186 = vshrl.u32 %v185, 7
    %v187 = vsub.s32 4, %v186
    %v188 = vrot.slane %v53, %v187
    %v189 = vlaneseq
    %v190 = vshrl.u32 %v189, 7
    %v191 = vsub.s32 5, %v190
    %v192 = vrot.slane %v53, %v191
    %v193 = vlaneseq
    %v194 = vshrl.u32 %v193, 7
    %v195 = vsub.s32 6, %v194
    %v196 = vrot.slane %v53, %v195
    %v197 = vlaneseq
    %v198 = vshrl.u32 %v197, 7
    %v199 = vsub.s32 7, %v198
    %v200 = vrot.slane %v53, %v199
    %v209 = vmul.f32 %v154, %v172
    %v210 = vmul.f32 %v154, %v176
    %v211 = vmul.f32 %v154, %v180
    %v212 = vmul.f32 %v154, %v184
    %v213 = vmul.f32 %v154, %v188
    %v214 = vmul.f32 %v154, %v192
    %v215 = vmul.f32 %v154, %v196
    %v216 = vmul.f32 %v154, %v200
    %v217 = vmul.f32 %v158, %v172
    %v218 = vmul.f32 %v158, %v176
    %v219 = vmul.f32 %v158, %v180
    %v220 = vmul.f32 %v158, %v184
    %v221 = vmul.f32 %v158, %v188
    %v222 = vmul.f32 %v158, %v192
    %v223 = vmul.f32 %v158, %v196
    %v224 = vmul.f32 %v158, %v200
    %v225 = vmul.f32 %v162, %v172
    %v226 = vmul.f32 %v162, %v176
    %v227 = vmul.f32 %v162, %v180
    %v228 = vmul.f32 %v162, %v184
    %v229 = vmul.f32 %v162, %v188
    %v230 = vmul.f32 %v162, %v192
    %v231 = vmul.f32 %v162, %v196
    %v232 = vmul.f32 %v162, %v200
    %v233 = vmul.f32 %v166, %v172
    %v234 = vmul.f32 %v166, %v176
    %v235 = vmul.f32 %v166, %v180
    %v236 = vmul.f32 %v166, %v184
    %v237 = vmul.f32 %v166, %v188
    %v238 = vmul.f32 %v166, %v192
    %v239 = vmul.f32 %v166, %v196
    %v240 = vmul.f32 %v166, %v200
    %v241 = vadd.f32 %v120, %v209
    %v242 = vadd.f32 %v121, %v210
    %v243 = vadd.f32 %v122, %v211
    %v244 = vadd.f32 %v123, %v212
    %v245 = vadd.f32 %v124, %v213
    %v246 = vadd.f32 %v125, %v214
    %v247 = vadd.f32 %v126, %v215
    %v248 = vadd.f32 %v127, %v216
    %v249 = vadd.f32 %v128, %v217
    %v250 = vadd.f32 %v129, %v218
    %v251 = vadd.f32 %v130, %v219
    %v252 = vadd.f32 %v131, %v220
    %v253 = vadd.f32 %v132, %v221
    %v254 = vadd.f32 %v133, %v222
    %v255 = vadd.f32 %v134, %v223
    %v256 = vadd.f32 %v135, %v224
    %v257 = vadd.f32 %v136, %v225
    %v258 = vadd.f32 %v137, %v226
    %v259 = vadd.f32 %v138, %v227
    %v260 = vadd.f32 %v139, %v228
    %v261 = vadd.f32 %v140, %v229
    %v262 = vadd.f32 %v141, %v230
    %v263 = vadd.f32 %v142, %v231
    %v264 = vadd.f32 %v143, %v232
    %v265 = vadd.f32 %v144, %v233
    %v266 = vadd.f32 %v145, %v234
    %v267 = vadd.f32 %v146, %v235
    %v268 = vadd.f32 %v147, %v236
    %v269 = vadd.f32 %v148, %v237
    %v270 = vadd.f32 %v149, %v238
    %v271 = vadd.f32 %v150, %v239
    %v272 = vadd.f32 %v151, %v240
    %273 = vset.pattern.permute.xlu0 66
    %274 = vperm.xlu0 %273, %v54
    %v275 = vpop.permute.xlu0 %274
    %277 = vset.pattern.permute.xlu0 66
    %278 = vperm.xlu0 %277, %v55
    %v279 = vpop.permute.xlu0 %278
    %281 = vset.pattern.permute.xlu0 66
    %282 = vperm.xlu0 %281, %v56
    %v283 = vpop.permute.xlu0 %282
    %285 = vset.pattern.permute.xlu0 66
    %286 = vperm.xlu0 %285, %v57
    %v287 = vpop.permute.xlu0 %286
    %v289 = vadd.f32 %v241, %v275
    %v290 = vadd.f32 %v242, %v275
    %v291 = vadd.f32 %v243, %v275
    %v292 = vadd.f32 %v244, %v275
    %v293 = vadd.f32 %v245, %v275
    %v294 = vadd.f32 %v246, %v275
    %v295 = vadd.f32 %v247, %v275
    %v296 = vadd.f32 %v248, %v275
    %v297 = vadd.f32 %v249, %v279
    %v298 = vadd.f32 %v250, %v279
    %v299 = vadd.f32 %v251, %v279
    %v300 = vadd.f32 %v252, %v279
    %v301 = vadd.f32 %v253, %v279
    %v302 = vadd.f32 %v254, %v279
    %v303 = vadd.f32 %v255, %v279
    %v304 = vadd.f32 %v256, %v279
    %v305 = vadd.f32 %v257, %v283
    %v306 = vadd.f32 %v258, %v283
    %v307 = vadd.f32 %v259, %v283
    %v308 = vadd.f32 %v260, %v283
    %v309 = vadd.f32 %v261, %v283
    %v310 = vadd.f32 %v262, %v283
    %v311 = vadd.f32 %v263, %v283
    %v312 = vadd.f32 %v264, %v283
    %v313 = vadd.f32 %v265, %v287
    %v314 = vadd.f32 %v266, %v287
    %v315 = vadd.f32 %v267, %v287
    %v316 = vadd.f32 %v268, %v287
    %v317 = vadd.f32 %v269, %v287
    %v318 = vadd.f32 %v270, %v287
    %v319 = vadd.f32 %v271, %v287
    %v320 = vadd.f32 %v272, %v287
    %v321 = vtanh.pop %v289
    %v322 = vtanh.pop %v290
    %v323 = vtanh.pop %v291
    %v324 = vtanh.pop %v292
    %v325 = vtanh.pop %v293
    %v326 = vtanh.pop %v294
    %v327 = vtanh.pop %v295
    %v328 = vtanh.pop %v296
    %v329 = vtanh.pop %v297
    %v330 = vtanh.pop %v298
    %v331 = vtanh.pop %v299
    %v332 = vtanh.pop %v300
    %v333 = vtanh.pop %v301
    %v334 = vtanh.pop %v302
    %v335 = vtanh.pop %v303
    %v336 = vtanh.pop %v304
    %v337 = vtanh.pop %v305
    %v338 = vtanh.pop %v306
    %v339 = vtanh.pop %v307
    %v340 = vtanh.pop %v308
    %v341 = vtanh.pop %v309
    %v342 = vtanh.pop %v310
    %v343 = vtanh.pop %v311
    %v344 = vtanh.pop %v312
    %v345 = vtanh.pop %v313
    %v346 = vtanh.pop %v314
    %v347 = vtanh.pop %v315
    %v348 = vtanh.pop %v316
    %v349 = vtanh.pop %v317
    %v350 = vtanh.pop %v318
    %v351 = vtanh.pop %v319
    %v352 = vtanh.pop %v320
    %353 = vset.pattern.permute.xlu0 67
    %354 = vperm.xlu0 %353, %v54
    %v355 = vpop.permute.xlu0 %354
    %357 = vset.pattern.permute.xlu0 67
    %358 = vperm.xlu0 %357, %v55
    %v359 = vpop.permute.xlu0 %358
    %361 = vset.pattern.permute.xlu0 67
    %362 = vperm.xlu0 %361, %v56
    %v363 = vpop.permute.xlu0 %362
    %365 = vset.pattern.permute.xlu0 67
    %366 = vperm.xlu0 %365, %v57
    %v367 = vpop.permute.xlu0 %366
    %vm369 = vcmask 261120
    %v370 = vsel %vm369, %v54, 0
    %v372 = vsel %vm369, %v55, 0
    %v374 = vsel %vm369, %v56, 0
    %v376 = vsel %vm369, %v57, 0
    %v378 = vand.u32 %v322, 4294901760
    %379 = vmatprep.subr.mxu0 %v378
    %v380 = vand.u32 %v321, 4294901760
    %381 = vmatpush1.msra.mxu0 %v380
    %v382 = vand.u32 %v330, 4294901760
    %383 = vmatprep.subr.mxu0 %v382
    %v384 = vand.u32 %v329, 4294901760
    %385 = vmatpush1.msra.mxu0 %v384
    %v386 = vand.u32 %v338, 4294901760
    %387 = vmatprep.subr.mxu0 %v386
    %v388 = vand.u32 %v337, 4294901760
    %389 = vmatpush1.msra.mxu0 %v388
    %v390 = vand.u32 %v346, 4294901760
    %391 = vmatprep.subr.mxu0 %v390
    %v392 = vand.u32 %v345, 4294901760
    %393 = vmatpush1.msra.mxu0 %v392
    %394 = vmatprep.subr.mxu0 0.0
    %395 = vmatpush1.msra.mxu0 0.0
    %396 = vmatprep.subr.mxu0 0.0
    %397 = vmatpush1.msra.mxu0 0.0
    %398 = vmatprep.subr.mxu0 0.0
    %399 = vmatpush1.msra.mxu0 0.0
    %400 = vmatprep.subr.mxu0 0.0
    %401 = vmatpush1.msra.mxu0 0.0
    %402 = vmatprep.subr.mxu0 0.0
    %403 = vmatpush1.msra.mxu0 0.0
    %404 = vmatprep.subr.mxu0 0.0
    %405 = vmatpush1.msra.mxu0 0.0
    %406 = vmatprep.subr.mxu0 0.0
    %407 = vmatpush1.msra.mxu0 0.0
    %408 = vmatprep.subr.mxu0 0.0
    %409 = vmatpush1.msra.mxu0 0.0
    %410 = vmatprep.subr.mxu0 0.0
    %411 = vmatpush1.msra.mxu0 0.0
    %412 = vmatprep.subr.mxu0 0.0
    %413 = vmatpush1.msra.mxu0 0.0
    %414 = vmatprep.subr.mxu0 0.0
    %415 = vmatpush1.msra.mxu0 0.0
    %416 = vmatprep.subr.mxu0 0.0
    %417 = vmatpush1.msra.mxu0 0.0
    %418 = vmatprep.subr.mxu0 0.0
    %419 = vmatpush1.msra.mxu0 0.0
    %420 = vmatprep.subr.mxu0 0.0
    %421 = vmatpush1.msra.mxu0 0.0
    %422 = vmatprep.subr.mxu0 0.0
    %423 = vmatpush1.msra.mxu0 0.0
    %424 = vmatprep.subr.mxu0 0.0
    %425 = vmatpush1.msra.mxu0 0.0
    %426 = vmatprep.subr.mxu0 0.0
    %427 = vmatpush1.msra.mxu0 0.0
    %428 = vmatprep.subr.mxu0 0.0
    %429 = vmatpush1.msra.mxu0 0.0
    %430 = vmatprep.subr.mxu0 0.0
    %431 = vmatpush1.msra.mxu0 0.0
    %432 = vmatprep.subr.mxu0 0.0
    %433 = vmatpush1.msra.mxu0 0.0
    %434 = vmatprep.subr.mxu0 0.0
    %435 = vmatpush1.msra.mxu0 0.0
    %436 = vmatprep.subr.mxu0 0.0
    %437 = vmatpush1.msra.mxu0 0.0
    %438 = vmatprep.subr.mxu0 0.0
    %439 = vmatpush1.msra.mxu0 0.0
    %440 = vmatprep.subr.mxu0 0.0
    %441 = vmatpush1.msra.mxu0 0.0
    %442 = vmatprep.subr.mxu0 0.0
    %443 = vmatpush1.msra.mxu0 0.0
    %444 = vmatprep.subr.mxu0 0.0
    %445 = vmatpush1.msra.mxu0 0.0
    %446 = vmatprep.subr.mxu0 0.0
    %447 = vmatpush1.msra.mxu0 0.0
    %448 = vmatprep.subr.mxu0 0.0
    %449 = vmatpush1.msra.mxu0 0.0
    %450 = vmatprep.mubr.f32.mxu0 0.0
    %v451 = vand.u32 %v370, 4294901760
    %v452 = vsub.f32 %v370, %v451
    %v453 = vand.u32 %v452, 4294901760
    %v454 = vsub.f32 %v452, %v453
    %v455 = vand.u32 %v454, 4294901760
    %456 = vmatmul.mubr.f32.gmra.mrb[0].mxu0 %v455
    %v457 = vpop.f32.mrb[0].mxu0
    %v458 = vadd.f32 %v355, %v457
    %v459 = vpop.f32.mrb[0].mxu0
    %v460 = vadd.f32 %v355, %v459
    %461 = vmatprep.mubr.f32.mxu0 0.0
    %v462 = vand.u32 %v372, 4294901760
    %v463 = vsub.f32 %v372, %v462
    %v464 = vand.u32 %v463, 4294901760
    %v465 = vsub.f32 %v463, %v464
    %v466 = vand.u32 %v465, 4294901760
    %467 = vmatmul.mubr.f32.gmra.mrb[0].mxu0 %v466
    %v468 = vpop.f32.mrb[0].mxu0
    %v469 = vadd.f32 %v359, %v468
    %v470 = vpop.f32.mrb[0].mxu0
    %v471 = vadd.f32 %v359, %v470
    %472 = vmatprep.mubr.f32.mxu0 0.0
    %v473 = vand.u32 %v374, 4294901760
    %v474 = vsub.f32 %v374, %v473
    %v475 = vand.u32 %v474, 4294901760
    %v476 = vsub.f32 %v474, %v475
    %v477 = vand.u32 %v476, 4294901760
    %478 = vmatmul.mubr.f32.gmra.mrb[0].mxu0 %v477
    %v479 = vpop.f32.mrb[0].mxu0
    %v480 = vadd.f32 %v363, %v479
    %v481 = vpop.f32.mrb[0].mxu0
    %v482 = vadd.f32 %v363, %v481
    %483 = vmatprep.mubr.f32.mxu0 0.0
    %v484 = vand.u32 %v376, 4294901760
    %v485 = vsub.f32 %v376, %v484
    %v486 = vand.u32 %v485, 4294901760
    %v487 = vsub.f32 %v485, %v486
    %v488 = vand.u32 %v487, 4294901760
    %489 = vmatmul.mubr.f32.gmra.mrb[0].mxu0 %v488
    %v490 = vpop.f32.mrb[0].mxu0
    %v491 = vadd.f32 %v367, %v490
    %v492 = vpop.f32.mrb[0].mxu0
    %v493 = vadd.f32 %v367, %v492
    %494 = vdwg.mxu0
    %v495 = vand.u32 %v322, 4294901760
    %v496 = vsub.f32 %v322, %v495
    %v497 = vand.u32 %v496, 4294901760
    %v498 = vsub.f32 %v496, %v497
    %v499 = vand.u32 %v498, 4294901760
    %500 = vmatprep.subr.mxu0 %v499
    %v501 = vand.u32 %v321, 4294901760
    %v502 = vsub.f32 %v321, %v501
    %v503 = vand.u32 %v502, 4294901760
    %v504 = vsub.f32 %v502, %v503
    %v505 = vand.u32 %v504, 4294901760
    %506 = vmatpush1.msra.mxu0 %v505
    %v507 = vand.u32 %v330, 4294901760
    %v508 = vsub.f32 %v330, %v507
    %v509 = vand.u32 %v508, 4294901760
    %v510 = vsub.f32 %v508, %v509
    %v511 = vand.u32 %v510, 4294901760
    %512 = vmatprep.subr.mxu0 %v511
    %v513 = vand.u32 %v329, 4294901760
    %v514 = vsub.f32 %v329, %v513
    %v515 = vand.u32 %v514, 4294901760
    %v516 = vsub.f32 %v514, %v515
    %v517 = vand.u32 %v516, 4294901760
    %518 = vmatpush1.msra.mxu0 %v517
    %v519 = vand.u32 %v338, 4294901760
    %v520 = vsub.f32 %v338, %v519
    %v521 = vand.u32 %v520, 4294901760
    %v522 = vsub.f32 %v520, %v521
    %v523 = vand.u32 %v522, 4294901760
    %524 = vmatprep.subr.mxu0 %v523
    %v525 = vand.u32 %v337, 4294901760
    %v526 = vsub.f32 %v337, %v525
    %v527 = vand.u32 %v526, 4294901760
    %v528 = vsub.f32 %v526, %v527
    %v529 = vand.u32 %v528, 4294901760
    %530 = vmatpush1.msra.mxu0 %v529
    %v531 = vand.u32 %v346, 4294901760
    %v532 = vsub.f32 %v346, %v531
    %v533 = vand.u32 %v532, 4294901760
    %v534 = vsub.f32 %v532, %v533
    %v535 = vand.u32 %v534, 4294901760
    %536 = vmatprep.subr.mxu0 %v535
    %v537 = vand.u32 %v345, 4294901760
    %v538 = vsub.f32 %v345, %v537
    %v539 = vand.u32 %v538, 4294901760
    %v540 = vsub.f32 %v538, %v539
    %v541 = vand.u32 %v540, 4294901760
    %542 = vmatpush1.msra.mxu0 %v541
    %543 = vmatprep.subr.mxu0 0.0
    %544 = vmatpush1.msra.mxu0 0.0
    %545 = vmatprep.subr.mxu0 0.0
    %546 = vmatpush1.msra.mxu0 0.0
    %547 = vmatprep.subr.mxu0 0.0
    %548 = vmatpush1.msra.mxu0 0.0
    %549 = vmatprep.subr.mxu0 0.0
    %550 = vmatpush1.msra.mxu0 0.0
    %551 = vmatprep.subr.mxu0 0.0
    %552 = vmatpush1.msra.mxu0 0.0
    %553 = vmatprep.subr.mxu0 0.0
    %554 = vmatpush1.msra.mxu0 0.0
    %555 = vmatprep.subr.mxu0 0.0
    %556 = vmatpush1.msra.mxu0 0.0
    %557 = vmatprep.subr.mxu0 0.0
    %558 = vmatpush1.msra.mxu0 0.0
    %559 = vmatprep.subr.mxu0 0.0
    %560 = vmatpush1.msra.mxu0 0.0
    %561 = vmatprep.subr.mxu0 0.0
    %562 = vmatpush1.msra.mxu0 0.0
    %563 = vmatprep.subr.mxu0 0.0
    %564 = vmatpush1.msra.mxu0 0.0
    %565 = vmatprep.subr.mxu0 0.0
    %566 = vmatpush1.msra.mxu0 0.0
    %567 = vmatprep.subr.mxu0 0.0
    %568 = vmatpush1.msra.mxu0 0.0
    %569 = vmatprep.subr.mxu0 0.0
    %570 = vmatpush1.msra.mxu0 0.0
    %571 = vmatprep.subr.mxu0 0.0
    %572 = vmatpush1.msra.mxu0 0.0
    %573 = vmatprep.subr.mxu0 0.0
    %574 = vmatpush1.msra.mxu0 0.0
    %575 = vmatprep.subr.mxu0 0.0
    %576 = vmatpush1.msra.mxu0 0.0
    %577 = vmatprep.subr.mxu0 0.0
    %578 = vmatpush1.msra.mxu0 0.0
    %579 = vmatprep.subr.mxu0 0.0
    %580 = vmatpush1.msra.mxu0 0.0
    %581 = vmatprep.subr.mxu0 0.0
    %582 = vmatpush1.msra.mxu0 0.0
    %583 = vmatprep.subr.mxu0 0.0
    %584 = vmatpush1.msra.mxu0 0.0
    %585 = vmatprep.subr.mxu0 0.0
    %586 = vmatpush1.msra.mxu0 0.0
    %587 = vmatprep.subr.mxu0 0.0
    %588 = vmatpush1.msra.mxu0 0.0
    %589 = vmatprep.subr.mxu0 0.0
    %590 = vmatpush1.msra.mxu0 0.0
    %591 = vmatprep.subr.mxu0 0.0
    %592 = vmatpush1.msra.mxu0 0.0
    %593 = vmatprep.subr.mxu0 0.0
    %594 = vmatpush1.msra.mxu0 0.0
    %595 = vmatprep.subr.mxu0 0.0
    %596 = vmatpush1.msra.mxu0 0.0
    %597 = vmatprep.subr.mxu0 0.0
    %598 = vmatpush1.msra.mxu0 0.0
    %599 = vmatprep.mubr.f32.mxu0 0.0
    %v600 = vand.u32 %v370, 4294901760
    %601 = vmatmul.mubr.f32.gmra.mrb[0].mxu0 %v600
    %v602 = vpop.f32.mrb[0].mxu0
    %v603 = vadd.f32 %v458, %v602
    %v604 = vpop.f32.mrb[0].mxu0
    %v605 = vadd.f32 %v460, %v604
    %606 = vmatprep.mubr.f32.mxu0 0.0
    %v607 = vand.u32 %v372, 4294901760
    %608 = vmatmul.mubr.f32.gmra.mrb[0].mxu0 %v607
    %v609 = vpop.f32.mrb[0].mxu0
    %v610 = vadd.f32 %v469, %v609
    %v611 = vpop.f32.mrb[0].mxu0
    %v612 = vadd.f32 %v471, %v611
    %613 = vmatprep.mubr.f32.mxu0 0.0
    %v614 = vand.u32 %v374, 4294901760
    %615 = vmatmul.mubr.f32.gmra.mrb[0].mxu0 %v614
    %v616 = vpop.f32.mrb[0].mxu0
    %v617 = vadd.f32 %v480, %v616
    %v618 = vpop.f32.mrb[0].mxu0
    %v619 = vadd.f32 %v482, %v618
    %620 = vmatprep.mubr.f32.mxu0 0.0
    %v621 = vand.u32 %v376, 4294901760
    %622 = vmatmul.mubr.f32.gmra.mrb[0].mxu0 %v621
    %v623 = vpop.f32.mrb[0].mxu0
    %v624 = vadd.f32 %v491, %v623
    %v625 = vpop.f32.mrb[0].mxu0
    %v626 = vadd.f32 %v493, %v625
    %627 = vdwg.mxu0
    %v628 = vand.u32 %v322, 4294901760
    %v629 = vsub.f32 %v322, %v628
    %630 = vmatprep.subr.mxu0 %v629
    %v631 = vand.u32 %v321, 4294901760
    %v632 = vsub.f32 %v321, %v631
    %633 = vmatpush1.msra.mxu0 %v632
    %v634 = vand.u32 %v330, 4294901760
    %v635 = vsub.f32 %v330, %v634
    %636 = vmatprep.subr.mxu0 %v635
    %v637 = vand.u32 %v329, 4294901760
    %v638 = vsub.f32 %v329, %v637
    %639 = vmatpush1.msra.mxu0 %v638
    %v640 = vand.u32 %v338, 4294901760
    %v641 = vsub.f32 %v338, %v640
    %642 = vmatprep.subr.mxu0 %v641
    %v643 = vand.u32 %v337, 4294901760
    %v644 = vsub.f32 %v337, %v643
    %645 = vmatpush1.msra.mxu0 %v644
    %v646 = vand.u32 %v346, 4294901760
    %v647 = vsub.f32 %v346, %v646
    %648 = vmatprep.subr.mxu0 %v647
    %v649 = vand.u32 %v345, 4294901760
    %v650 = vsub.f32 %v345, %v649
    %651 = vmatpush1.msra.mxu0 %v650
    %652 = vmatprep.subr.mxu0 0.0
    %653 = vmatpush1.msra.mxu0 0.0
    %654 = vmatprep.subr.mxu0 0.0
    %655 = vmatpush1.msra.mxu0 0.0
    %656 = vmatprep.subr.mxu0 0.0
    %657 = vmatpush1.msra.mxu0 0.0
    %658 = vmatprep.subr.mxu0 0.0
    %659 = vmatpush1.msra.mxu0 0.0
    %660 = vmatprep.subr.mxu0 0.0
    %661 = vmatpush1.msra.mxu0 0.0
    %662 = vmatprep.subr.mxu0 0.0
    %663 = vmatpush1.msra.mxu0 0.0
    %664 = vmatprep.subr.mxu0 0.0
    %665 = vmatpush1.msra.mxu0 0.0
    %666 = vmatprep.subr.mxu0 0.0
    %667 = vmatpush1.msra.mxu0 0.0
    %668 = vmatprep.subr.mxu0 0.0
    %669 = vmatpush1.msra.mxu0 0.0
    %670 = vmatprep.subr.mxu0 0.0
    %671 = vmatpush1.msra.mxu0 0.0
    %672 = vmatprep.subr.mxu0 0.0
    %673 = vmatpush1.msra.mxu0 0.0
    %674 = vmatprep.subr.mxu0 0.0
    %675 = vmatpush1.msra.mxu0 0.0
    %676 = vmatprep.subr.mxu0 0.0
    %677 = vmatpush1.msra.mxu0 0.0
    %678 = vmatprep.subr.mxu0 0.0
    %679 = vmatpush1.msra.mxu0 0.0
    %680 = vmatprep.subr.mxu0 0.0
    %681 = vmatpush1.msra.mxu0 0.0
    %682 = vmatprep.subr.mxu0 0.0
    %683 = vmatpush1.msra.mxu0 0.0
    %684 = vmatprep.subr.mxu0 0.0
    %685 = vmatpush1.msra.mxu0 0.0
    %686 = vmatprep.subr.mxu0 0.0
    %687 = vmatpush1.msra.mxu0 0.0
    %688 = vmatprep.subr.mxu0 0.0
    %689 = vmatpush1.msra.mxu0 0.0
    %690 = vmatprep.subr.mxu0 0.0
    %691 = vmatpush1.msra.mxu0 0.0
    %692 = vmatprep.subr.mxu0 0.0
    %693 = vmatpush1.msra.mxu0 0.0
    %694 = vmatprep.subr.mxu0 0.0
    %695 = vmatpush1.msra.mxu0 0.0
    %696 = vmatprep.subr.mxu0 0.0
    %697 = vmatpush1.msra.mxu0 0.0
    %698 = vmatprep.subr.mxu0 0.0
    %699 = vmatpush1.msra.mxu0 0.0
    %700 = vmatprep.subr.mxu0 0.0
    %701 = vmatpush1.msra.mxu0 0.0
    %702 = vmatprep.subr.mxu0 0.0
    %703 = vmatpush1.msra.mxu0 0.0
    %704 = vmatprep.subr.mxu0 0.0
    %705 = vmatpush1.msra.mxu0 0.0
    %706 = vmatprep.subr.mxu0 0.0
    %707 = vmatpush1.msra.mxu0 0.0
    %708 = vmatprep.mubr.f32.mxu0 0.0
    %v709 = vand.u32 %v370, 4294901760
    %v710 = vsub.f32 %v370, %v709
    %711 = vmatmul.mubr.f32.gmra.mrb[0].mxu0 %v710
    %v712 = vpop.f32.mrb[0].mxu0
    %v713 = vadd.f32 %v603, %v712
    %v714 = vpop.f32.mrb[0].mxu0
    %v715 = vadd.f32 %v605, %v714
    %716 = vmatprep.mubr.f32.mxu0 0.0
    %v717 = vand.u32 %v372, 4294901760
    %v718 = vsub.f32 %v372, %v717
    %719 = vmatmul.mubr.f32.gmra.mrb[0].mxu0 %v718
    %v720 = vpop.f32.mrb[0].mxu0
    %v721 = vadd.f32 %v610, %v720
    %v722 = vpop.f32.mrb[0].mxu0
    %v723 = vadd.f32 %v612, %v722
    %724 = vmatprep.mubr.f32.mxu0 0.0
    %v725 = vand.u32 %v374, 4294901760
    %v726 = vsub.f32 %v374, %v725
    %727 = vmatmul.mubr.f32.gmra.mrb[0].mxu0 %v726
    %v728 = vpop.f32.mrb[0].mxu0
    %v729 = vadd.f32 %v617, %v728
    %v730 = vpop.f32.mrb[0].mxu0
    %v731 = vadd.f32 %v619, %v730
    %732 = vmatprep.mubr.f32.mxu0 0.0
    %v733 = vand.u32 %v376, 4294901760
    %v734 = vsub.f32 %v376, %v733
    %735 = vmatmul.mubr.f32.gmra.mrb[0].mxu0 %v734
    %v736 = vpop.f32.mrb[0].mxu0
    %v737 = vadd.f32 %v624, %v736
    %v738 = vpop.f32.mrb[0].mxu0
    %v739 = vadd.f32 %v626, %v738
    %740 = vdwg.mxu0
    %v741 = vand.u32 %v322, 4294901760
    %742 = vmatprep.subr.mxu0 %v741
    %v743 = vand.u32 %v321, 4294901760
    %744 = vmatpush1.msra.mxu0 %v743
    %v745 = vand.u32 %v330, 4294901760
    %746 = vmatprep.subr.mxu0 %v745
    %v747 = vand.u32 %v329, 4294901760
    %748 = vmatpush1.msra.mxu0 %v747
    %v749 = vand.u32 %v338, 4294901760
    %750 = vmatprep.subr.mxu0 %v749
    %v751 = vand.u32 %v337, 4294901760
    %752 = vmatpush1.msra.mxu0 %v751
    %v753 = vand.u32 %v346, 4294901760
    %754 = vmatprep.subr.mxu0 %v753
    %v755 = vand.u32 %v345, 4294901760
    %756 = vmatpush1.msra.mxu0 %v755
    %757 = vmatprep.subr.mxu0 0.0
    %758 = vmatpush1.msra.mxu0 0.0
    %759 = vmatprep.subr.mxu0 0.0
    %760 = vmatpush1.msra.mxu0 0.0
    %761 = vmatprep.subr.mxu0 0.0
    %762 = vmatpush1.msra.mxu0 0.0
    %763 = vmatprep.subr.mxu0 0.0
    %764 = vmatpush1.msra.mxu0 0.0
    %765 = vmatprep.subr.mxu0 0.0
    %766 = vmatpush1.msra.mxu0 0.0
    %767 = vmatprep.subr.mxu0 0.0
    %768 = vmatpush1.msra.mxu0 0.0
    %769 = vmatprep.subr.mxu0 0.0
    %770 = vmatpush1.msra.mxu0 0.0
    %771 = vmatprep.subr.mxu0 0.0
    %772 = vmatpush1.msra.mxu0 0.0
    %773 = vmatprep.subr.mxu0 0.0
    %774 = vmatpush1.msra.mxu0 0.0
    %775 = vmatprep.subr.mxu0 0.0
    %776 = vmatpush1.msra.mxu0 0.0
    %777 = vmatprep.subr.mxu0 0.0
    %778 = vmatpush1.msra.mxu0 0.0
    %779 = vmatprep.subr.mxu0 0.0
    %780 = vmatpush1.msra.mxu0 0.0
    %781 = vmatprep.subr.mxu0 0.0
    %782 = vmatpush1.msra.mxu0 0.0
    %783 = vmatprep.subr.mxu0 0.0
    %784 = vmatpush1.msra.mxu0 0.0
    %785 = vmatprep.subr.mxu0 0.0
    %786 = vmatpush1.msra.mxu0 0.0
    %787 = vmatprep.subr.mxu0 0.0
    %788 = vmatpush1.msra.mxu0 0.0
    %789 = vmatprep.subr.mxu0 0.0
    %790 = vmatpush1.msra.mxu0 0.0
    %791 = vmatprep.subr.mxu0 0.0
    %792 = vmatpush1.msra.mxu0 0.0
    %793 = vmatprep.subr.mxu0 0.0
    %794 = vmatpush1.msra.mxu0 0.0
    %795 = vmatprep.subr.mxu0 0.0
    %796 = vmatpush1.msra.mxu0 0.0
    %797 = vmatprep.subr.mxu0 0.0
    %798 = vmatpush1.msra.mxu0 0.0
    %799 = vmatprep.subr.mxu0 0.0
    %800 = vmatpush1.msra.mxu0 0.0
    %801 = vmatprep.subr.mxu0 0.0
    %802 = vmatpush1.msra.mxu0 0.0
    %803 = vmatprep.subr.mxu0 0.0
    %804 = vmatpush1.msra.mxu0 0.0
    %805 = vmatprep.subr.mxu0 0.0
    %806 = vmatpush1.msra.mxu0 0.0
    %807 = vmatprep.subr.mxu0 0.0
    %808 = vmatpush1.msra.mxu0 0.0
    %809 = vmatprep.subr.mxu0 0.0
    %810 = vmatpush1.msra.mxu0 0.0
    %811 = vmatprep.subr.mxu0 0.0
    %812 = vmatpush1.msra.mxu0 0.0
    %813 = vmatprep.mubr.f32.mxu0 0.0
    %v814 = vand.u32 %v370, 4294901760
    %v815 = vsub.f32 %v370, %v814
    %v816 = vand.u32 %v815, 4294901760
    %817 = vmatmul.mubr.f32.gmra.mrb[0].mxu0 %v816
    %v818 = vpop.f32.mrb[0].mxu0
    %v819 = vadd.f32 %v713, %v818
    %v820 = vpop.f32.mrb[0].mxu0
    %v821 = vadd.f32 %v715, %v820
    %822 = vmatprep.mubr.f32.mxu0 0.0
    %v823 = vand.u32 %v372, 4294901760
    %v824 = vsub.f32 %v372, %v823
    %v825 = vand.u32 %v824, 4294901760
    %826 = vmatmul.mubr.f32.gmra.mrb[0].mxu0 %v825
    %v827 = vpop.f32.mrb[0].mxu0
    %v828 = vadd.f32 %v721, %v827
    %v829 = vpop.f32.mrb[0].mxu0
    %v830 = vadd.f32 %v723, %v829
    %831 = vmatprep.mubr.f32.mxu0 0.0
    %v832 = vand.u32 %v374, 4294901760
    %v833 = vsub.f32 %v374, %v832
    %v834 = vand.u32 %v833, 4294901760
    %835 = vmatmul.mubr.f32.gmra.mrb[0].mxu0 %v834
    %v836 = vpop.f32.mrb[0].mxu0
    %v837 = vadd.f32 %v729, %v836
    %v838 = vpop.f32.mrb[0].mxu0
    %v839 = vadd.f32 %v731, %v838
    %840 = vmatprep.mubr.f32.mxu0 0.0
    %v841 = vand.u32 %v376, 4294901760
    %v842 = vsub.f32 %v376, %v841
    %v843 = vand.u32 %v842, 4294901760
    %844 = vmatmul.mubr.f32.gmra.mrb[0].mxu0 %v843
    %v845 = vpop.f32.mrb[0].mxu0
    %v846 = vadd.f32 %v737, %v845
    %v847 = vpop.f32.mrb[0].mxu0
    %v848 = vadd.f32 %v739, %v847
    %849 = vdwg.mxu0
    %v850 = vand.u32 %v322, 4294901760
    %v851 = vsub.f32 %v322, %v850
    %v852 = vand.u32 %v851, 4294901760
    %853 = vmatprep.subr.mxu0 %v852
    %v854 = vand.u32 %v321, 4294901760
    %v855 = vsub.f32 %v321, %v854
    %v856 = vand.u32 %v855, 4294901760
    %857 = vmatpush1.msra.mxu0 %v856
    %v858 = vand.u32 %v330, 4294901760
    %v859 = vsub.f32 %v330, %v858
    %v860 = vand.u32 %v859, 4294901760
    %861 = vmatprep.subr.mxu0 %v860
    %v862 = vand.u32 %v329, 4294901760
    %v863 = vsub.f32 %v329, %v862
    %v864 = vand.u32 %v863, 4294901760
    %865 = vmatpush1.msra.mxu0 %v864
    %v866 = vand.u32 %v338, 4294901760
    %v867 = vsub.f32 %v338, %v866
    %v868 = vand.u32 %v867, 4294901760
    %869 = vmatprep.subr.mxu0 %v868
    %v870 = vand.u32 %v337, 4294901760
    %v871 = vsub.f32 %v337, %v870
    %v872 = vand.u32 %v871, 4294901760
    %873 = vmatpush1.msra.mxu0 %v872
    %v874 = vand.u32 %v346, 4294901760
    %v875 = vsub.f32 %v346, %v874
    %v876 = vand.u32 %v875, 4294901760
    %877 = vmatprep.subr.mxu0 %v876
    %v878 = vand.u32 %v345, 4294901760
    %v879 = vsub.f32 %v345, %v878
    %v880 = vand.u32 %v879, 4294901760
    %881 = vmatpush1.msra.mxu0 %v880
    %882 = vmatprep.subr.mxu0 0.0
    %883 = vmatpush1.msra.mxu0 0.0
    %884 = vmatprep.subr.mxu0 0.0
    %885 = vmatpush1.msra.mxu0 0.0
    %886 = vmatprep.subr.mxu0 0.0
    %887 = vmatpush1.msra.mxu0 0.0
    %888 = vmatprep.subr.mxu0 0.0
    %889 = vmatpush1.msra.mxu0 0.0
    %890 = vmatprep.subr.mxu0 0.0
    %891 = vmatpush1.msra.mxu0 0.0
    %892 = vmatprep.subr.mxu0 0.0
    %893 = vmatpush1.msra.mxu0 0.0
    %894 = vmatprep.subr.mxu0 0.0
    %895 = vmatpush1.msra.mxu0 0.0
    %896 = vmatprep.subr.mxu0 0.0
    %897 = vmatpush1.msra.mxu0 0.0
    %898 = vmatprep.subr.mxu0 0.0
    %899 = vmatpush1.msra.mxu0 0.0
    %900 = vmatprep.subr.mxu0 0.0
    %901 = vmatpush1.msra.mxu0 0.0
    %902 = vmatprep.subr.mxu0 0.0
    %903 = vmatpush1.msra.mxu0 0.0
    %904 = vmatprep.subr.mxu0 0.0
    %905 = vmatpush1.msra.mxu0 0.0
    %906 = vmatprep.subr.mxu0 0.0
    %907 = vmatpush1.msra.mxu0 0.0
    %908 = vmatprep.subr.mxu0 0.0
    %909 = vmatpush1.msra.mxu0 0.0
    %910 = vmatprep.subr.mxu0 0.0
    %911 = vmatpush1.msra.mxu0 0.0
    %912 = vmatprep.subr.mxu0 0.0
    %913 = vmatpush1.msra.mxu0 0.0
    %914 = vmatprep.subr.mxu0 0.0
    %915 = vmatpush1.msra.mxu0 0.0
    %916 = vmatprep.subr.mxu0 0.0
    %917 = vmatpush1.msra.mxu0 0.0
    %918 = vmatprep.subr.mxu0 0.0
    %919 = vmatpush1.msra.mxu0 0.0
    %920 = vmatprep.subr.mxu0 0.0
    %921 = vmatpush1.msra.mxu0 0.0
    %922 = vmatprep.subr.mxu0 0.0
    %923 = vmatpush1.msra.mxu0 0.0
    %924 = vmatprep.subr.mxu0 0.0
    %925 = vmatpush1.msra.mxu0 0.0
    %926 = vmatprep.subr.mxu0 0.0
    %927 = vmatpush1.msra.mxu0 0.0
    %928 = vmatprep.subr.mxu0 0.0
    %929 = vmatpush1.msra.mxu0 0.0
    %930 = vmatprep.subr.mxu0 0.0
    %931 = vmatpush1.msra.mxu0 0.0
    %932 = vmatprep.subr.mxu0 0.0
    %933 = vmatpush1.msra.mxu0 0.0
    %934 = vmatprep.subr.mxu0 0.0
    %935 = vmatpush1.msra.mxu0 0.0
    %936 = vmatprep.subr.mxu0 0.0
    %937 = vmatpush1.msra.mxu0 0.0
    %938 = vmatprep.mubr.f32.mxu0 0.0
    %v939 = vand.u32 %v370, 4294901760
    %940 = vmatmul.mubr.f32.gmra.mrb[0].mxu0 %v939
    %v941 = vpop.f32.mrb[0].mxu0
    %v942 = vadd.f32 %v819, %v941
    %v943 = vpop.f32.mrb[0].mxu0
    %v944 = vadd.f32 %v821, %v943
    %945 = vmatprep.mubr.f32.mxu0 0.0
    %v946 = vand.u32 %v372, 4294901760
    %947 = vmatmul.mubr.f32.gmra.mrb[0].mxu0 %v946
    %v948 = vpop.f32.mrb[0].mxu0
    %v949 = vadd.f32 %v828, %v948
    %v950 = vpop.f32.mrb[0].mxu0
    %v951 = vadd.f32 %v830, %v950
    %952 = vmatprep.mubr.f32.mxu0 0.0
    %v953 = vand.u32 %v374, 4294901760
    %954 = vmatmul.mubr.f32.gmra.mrb[0].mxu0 %v953
    %v955 = vpop.f32.mrb[0].mxu0
    %v956 = vadd.f32 %v837, %v955
    %v957 = vpop.f32.mrb[0].mxu0
    %v958 = vadd.f32 %v839, %v957
    %959 = vmatprep.mubr.f32.mxu0 0.0
    %v960 = vand.u32 %v376, 4294901760
    %961 = vmatmul.mubr.f32.gmra.mrb[0].mxu0 %v960
    %v962 = vpop.f32.mrb[0].mxu0
    %v963 = vadd.f32 %v846, %v962
    %v964 = vpop.f32.mrb[0].mxu0
    %v965 = vadd.f32 %v848, %v964
    %966 = vdwg.mxu0
    %v967 = vand.u32 %v322, 4294901760
    %968 = vmatprep.subr.mxu0 %v967
    %v969 = vand.u32 %v321, 4294901760
    %970 = vmatpush1.msra.mxu0 %v969
    %v971 = vand.u32 %v330, 4294901760
    %972 = vmatprep.subr.mxu0 %v971
    %v973 = vand.u32 %v329, 4294901760
    %974 = vmatpush1.msra.mxu0 %v973
    %v975 = vand.u32 %v338, 4294901760
    %976 = vmatprep.subr.mxu0 %v975
    %v977 = vand.u32 %v337, 4294901760
    %978 = vmatpush1.msra.mxu0 %v977
    %v979 = vand.u32 %v346, 4294901760
    %980 = vmatprep.subr.mxu0 %v979
    %v981 = vand.u32 %v345, 4294901760
    %982 = vmatpush1.msra.mxu0 %v981
    %983 = vmatprep.subr.mxu0 0.0
    %984 = vmatpush1.msra.mxu0 0.0
    %985 = vmatprep.subr.mxu0 0.0
    %986 = vmatpush1.msra.mxu0 0.0
    %987 = vmatprep.subr.mxu0 0.0
    %988 = vmatpush1.msra.mxu0 0.0
    %989 = vmatprep.subr.mxu0 0.0
    %990 = vmatpush1.msra.mxu0 0.0
    %991 = vmatprep.subr.mxu0 0.0
    %992 = vmatpush1.msra.mxu0 0.0
    %993 = vmatprep.subr.mxu0 0.0
    %994 = vmatpush1.msra.mxu0 0.0
    %995 = vmatprep.subr.mxu0 0.0
    %996 = vmatpush1.msra.mxu0 0.0
    %997 = vmatprep.subr.mxu0 0.0
    %998 = vmatpush1.msra.mxu0 0.0
    %999 = vmatprep.subr.mxu0 0.0
    %1000 = vmatpush1.msra.mxu0 0.0
    %1001 = vmatprep.subr.mxu0 0.0
    %1002 = vmatpush1.msra.mxu0 0.0
    %1003 = vmatprep.subr.mxu0 0.0
    %1004 = vmatpush1.msra.mxu0 0.0
    %1005 = vmatprep.subr.mxu0 0.0
    %1006 = vmatpush1.msra.mxu0 0.0
    %1007 = vmatprep.subr.mxu0 0.0
    %1008 = vmatpush1.msra.mxu0 0.0
    %1009 = vmatprep.subr.mxu0 0.0
    %1010 = vmatpush1.msra.mxu0 0.0
    %1011 = vmatprep.subr.mxu0 0.0
    %1012 = vmatpush1.msra.mxu0 0.0
    %1013 = vmatprep.subr.mxu0 0.0
    %1014 = vmatpush1.msra.mxu0 0.0
    %1015 = vmatprep.subr.mxu0 0.0
    %1016 = vmatpush1.msra.mxu0 0.0
    %1017 = vmatprep.subr.mxu0 0.0
    %1018 = vmatpush1.msra.mxu0 0.0
    %1019 = vmatprep.subr.mxu0 0.0
    %1020 = vmatpush1.msra.mxu0 0.0
    %1021 = vmatprep.subr.mxu0 0.0
    %1022 = vmatpush1.msra.mxu0 0.0
    %1023 = vmatprep.subr.mxu0 0.0
    %1024 = vmatpush1.msra.mxu0 0.0
    %1025 = vmatprep.subr.mxu0 0.0
    %1026 = vmatpush1.msra.mxu0 0.0
    %1027 = vmatprep.subr.mxu0 0.0
    %1028 = vmatpush1.msra.mxu0 0.0
    %1029 = vmatprep.subr.mxu0 0.0
    %1030 = vmatpush1.msra.mxu0 0.0
    %1031 = vmatprep.subr.mxu0 0.0
    %1032 = vmatpush1.msra.mxu0 0.0
    %1033 = vmatprep.subr.mxu0 0.0
    %1034 = vmatpush1.msra.mxu0 0.0
    %1035 = vmatprep.subr.mxu0 0.0
    %1036 = vmatpush1.msra.mxu0 0.0
    %1037 = vmatprep.subr.mxu0 0.0
    %1038 = vmatpush1.msra.mxu0 0.0
    %1039 = vmatprep.mubr.f32.mxu0 0.0
    %v1040 = vand.u32 %v370, 4294901760
    %1041 = vmatmul.mubr.f32.gmra.mrb[0].mxu0 %v1040
    %v1042 = vpop.f32.mrb[0].mxu0
    %v1043 = vadd.f32 %v942, %v1042
    %v1044 = vpop.f32.mrb[0].mxu0
    %v1045 = vadd.f32 %v944, %v1044
    %1046 = vmatprep.mubr.f32.mxu0 0.0
    %v1047 = vand.u32 %v372, 4294901760
    %1048 = vmatmul.mubr.f32.gmra.mrb[0].mxu0 %v1047
    %v1049 = vpop.f32.mrb[0].mxu0
    %v1050 = vadd.f32 %v949, %v1049
    %v1051 = vpop.f32.mrb[0].mxu0
    %v1052 = vadd.f32 %v951, %v1051
    %1053 = vmatprep.mubr.f32.mxu0 0.0
    %v1054 = vand.u32 %v374, 4294901760
    %1055 = vmatmul.mubr.f32.gmra.mrb[0].mxu0 %v1054
    %v1056 = vpop.f32.mrb[0].mxu0
    %v1057 = vadd.f32 %v956, %v1056
    %v1058 = vpop.f32.mrb[0].mxu0
    %v1059 = vadd.f32 %v958, %v1058
    %1060 = vmatprep.mubr.f32.mxu0 0.0
    %v1061 = vand.u32 %v376, 4294901760
    %1062 = vmatmul.mubr.f32.gmra.mrb[0].mxu0 %v1061
    %v1063 = vpop.f32.mrb[0].mxu0
    %v1064 = vadd.f32 %v963, %v1063
    %v1065 = vpop.f32.mrb[0].mxu0
    %v1066 = vadd.f32 %v965, %v1065
    %1067 = vdwg.mxu0
    %v1068 = vand.u32 %v324, 4294901760
    %1069 = vmatprep.subr.mxu0 %v1068
    %v1070 = vand.u32 %v323, 4294901760
    %1071 = vmatpush1.msra.mxu0 %v1070
    %v1072 = vand.u32 %v332, 4294901760
    %1073 = vmatprep.subr.mxu0 %v1072
    %v1074 = vand.u32 %v331, 4294901760
    %1075 = vmatpush1.msra.mxu0 %v1074
    %v1076 = vand.u32 %v340, 4294901760
    %1077 = vmatprep.subr.mxu0 %v1076
    %v1078 = vand.u32 %v339, 4294901760
    %1079 = vmatpush1.msra.mxu0 %v1078
    %v1080 = vand.u32 %v348, 4294901760
    %1081 = vmatprep.subr.mxu0 %v1080
    %v1082 = vand.u32 %v347, 4294901760
    %1083 = vmatpush1.msra.mxu0 %v1082
    %1084 = vmatprep.subr.mxu0 0.0
    %1085 = vmatpush1.msra.mxu0 0.0
    %1086 = vmatprep.subr.mxu0 0.0
    %1087 = vmatpush1.msra.mxu0 0.0
    %1088 = vmatprep.subr.mxu0 0.0
    %1089 = vmatpush1.msra.mxu0 0.0
    %1090 = vmatprep.subr.mxu0 0.0
    %1091 = vmatpush1.msra.mxu0 0.0
    %1092 = vmatprep.subr.mxu0 0.0
    %1093 = vmatpush1.msra.mxu0 0.0
    %1094 = vmatprep.subr.mxu0 0.0
    %1095 = vmatpush1.msra.mxu0 0.0
    %1096 = vmatprep.subr.mxu0 0.0
    %1097 = vmatpush1.msra.mxu0 0.0
    %1098 = vmatprep.subr.mxu0 0.0
    %1099 = vmatpush1.msra.mxu0 0.0
    %1100 = vmatprep.subr.mxu0 0.0
    %1101 = vmatpush1.msra.mxu0 0.0
    %1102 = vmatprep.subr.mxu0 0.0
    %1103 = vmatpush1.msra.mxu0 0.0
    %1104 = vmatprep.subr.mxu0 0.0
    %1105 = vmatpush1.msra.mxu0 0.0
    %1106 = vmatprep.subr.mxu0 0.0
    %1107 = vmatpush1.msra.mxu0 0.0
    %1108 = vmatprep.subr.mxu0 0.0
    %1109 = vmatpush1.msra.mxu0 0.0
    %1110 = vmatprep.subr.mxu0 0.0
    %1111 = vmatpush1.msra.mxu0 0.0
    %1112 = vmatprep.subr.mxu0 0.0
    %1113 = vmatpush1.msra.mxu0 0.0
    %1114 = vmatprep.subr.mxu0 0.0
    %1115 = vmatpush1.msra.mxu0 0.0
    %1116 = vmatprep.subr.mxu0 0.0
    %1117 = vmatpush1.msra.mxu0 0.0
    %1118 = vmatprep.subr.mxu0 0.0
    %1119 = vmatpush1.msra.mxu0 0.0
    %1120 = vmatprep.subr.mxu0 0.0
    %1121 = vmatpush1.msra.mxu0 0.0
    %1122 = vmatprep.subr.mxu0 0.0
    %1123 = vmatpush1.msra.mxu0 0.0
    %1124 = vmatprep.subr.mxu0 0.0
    %1125 = vmatpush1.msra.mxu0 0.0
    %1126 = vmatprep.subr.mxu0 0.0
    %1127 = vmatpush1.msra.mxu0 0.0
    %1128 = vmatprep.subr.mxu0 0.0
    %1129 = vmatpush1.msra.mxu0 0.0
    %1130 = vmatprep.subr.mxu0 0.0
    %1131 = vmatpush1.msra.mxu0 0.0
    %1132 = vmatprep.subr.mxu0 0.0
    %1133 = vmatpush1.msra.mxu0 0.0
    %1134 = vmatprep.subr.mxu0 0.0
    %1135 = vmatpush1.msra.mxu0 0.0
    %1136 = vmatprep.subr.mxu0 0.0
    %1137 = vmatpush1.msra.mxu0 0.0
    %1138 = vmatprep.subr.mxu0 0.0
    %1139 = vmatpush1.msra.mxu0 0.0
    %1140 = vmatprep.mubr.f32.mxu0 0.0
    %v1141 = vand.u32 %v370, 4294901760
    %v1142 = vsub.f32 %v370, %v1141
    %v1143 = vand.u32 %v1142, 4294901760
    %v1144 = vsub.f32 %v1142, %v1143
    %v1145 = vand.u32 %v1144, 4294901760
    %1146 = vmatmul.mubr.f32.gmra.mrb[0].mxu0 %v1145
    %v1147 = vpop.f32.mrb[0].mxu0
    %v1148 = vadd.f32 %v355, %v1147
    %v1149 = vpop.f32.mrb[0].mxu0
    %v1150 = vadd.f32 %v355, %v1149
    %1151 = vmatprep.mubr.f32.mxu0 0.0
    %v1152 = vand.u32 %v372, 4294901760
    %v1153 = vsub.f32 %v372, %v1152
    %v1154 = vand.u32 %v1153, 4294901760
    %v1155 = vsub.f32 %v1153, %v1154
    %v1156 = vand.u32 %v1155, 4294901760
    %1157 = vmatmul.mubr.f32.gmra.mrb[0].mxu0 %v1156
    %v1158 = vpop.f32.mrb[0].mxu0
    %v1159 = vadd.f32 %v359, %v1158
    %v1160 = vpop.f32.mrb[0].mxu0
    %v1161 = vadd.f32 %v359, %v1160
    %1162 = vmatprep.mubr.f32.mxu0 0.0
    %v1163 = vand.u32 %v374, 4294901760
    %v1164 = vsub.f32 %v374, %v1163
    %v1165 = vand.u32 %v1164, 4294901760
    %v1166 = vsub.f32 %v1164, %v1165
    %v1167 = vand.u32 %v1166, 4294901760
    %1168 = vmatmul.mubr.f32.gmra.mrb[0].mxu0 %v1167
    %v1169 = vpop.f32.mrb[0].mxu0
    %v1170 = vadd.f32 %v363, %v1169
    %v1171 = vpop.f32.mrb[0].mxu0
    %v1172 = vadd.f32 %v363, %v1171
    %1173 = vmatprep.mubr.f32.mxu0 0.0
    %v1174 = vand.u32 %v376, 4294901760
    %v1175 = vsub.f32 %v376, %v1174
    %v1176 = vand.u32 %v1175, 4294901760
    %v1177 = vsub.f32 %v1175, %v1176
    %v1178 = vand.u32 %v1177, 4294901760
    %1179 = vmatmul.mubr.f32.gmra.mrb[0].mxu0 %v1178
    %v1180 = vpop.f32.mrb[0].mxu0
    %v1181 = vadd.f32 %v367, %v1180
    %v1182 = vpop.f32.mrb[0].mxu0
    %v1183 = vadd.f32 %v367, %v1182
    %1184 = vdwg.mxu0
    %v1185 = vand.u32 %v324, 4294901760
    %v1186 = vsub.f32 %v324, %v1185
    %v1187 = vand.u32 %v1186, 4294901760
    %v1188 = vsub.f32 %v1186, %v1187
    %v1189 = vand.u32 %v1188, 4294901760
    %1190 = vmatprep.subr.mxu0 %v1189
    %v1191 = vand.u32 %v323, 4294901760
    %v1192 = vsub.f32 %v323, %v1191
    %v1193 = vand.u32 %v1192, 4294901760
    %v1194 = vsub.f32 %v1192, %v1193
    %v1195 = vand.u32 %v1194, 4294901760
    %1196 = vmatpush1.msra.mxu0 %v1195
    %v1197 = vand.u32 %v332, 4294901760
    %v1198 = vsub.f32 %v332, %v1197
    %v1199 = vand.u32 %v1198, 4294901760
    %v1200 = vsub.f32 %v1198, %v1199
    %v1201 = vand.u32 %v1200, 4294901760
    %1202 = vmatprep.subr.mxu0 %v1201
    %v1203 = vand.u32 %v331, 4294901760
    %v1204 = vsub.f32 %v331, %v1203
    %v1205 = vand.u32 %v1204, 4294901760
    %v1206 = vsub.f32 %v1204, %v1205
    %v1207 = vand.u32 %v1206, 4294901760
    %1208 = vmatpush1.msra.mxu0 %v1207
    %v1209 = vand.u32 %v340, 4294901760
    %v1210 = vsub.f32 %v340, %v1209
    %v1211 = vand.u32 %v1210, 4294901760
    %v1212 = vsub.f32 %v1210, %v1211
    %v1213 = vand.u32 %v1212, 4294901760
    %1214 = vmatprep.subr.mxu0 %v1213
    %v1215 = vand.u32 %v339, 4294901760
    %v1216 = vsub.f32 %v339, %v1215
    %v1217 = vand.u32 %v1216, 4294901760
    %v1218 = vsub.f32 %v1216, %v1217
    %v1219 = vand.u32 %v1218, 4294901760
    %1220 = vmatpush1.msra.mxu0 %v1219
    %v1221 = vand.u32 %v348, 4294901760
    %v1222 = vsub.f32 %v348, %v1221
    %v1223 = vand.u32 %v1222, 4294901760
    %v1224 = vsub.f32 %v1222, %v1223
    %v1225 = vand.u32 %v1224, 4294901760
    %1226 = vmatprep.subr.mxu0 %v1225
    %v1227 = vand.u32 %v347, 4294901760
    %v1228 = vsub.f32 %v347, %v1227
    %v1229 = vand.u32 %v1228, 4294901760
    %v1230 = vsub.f32 %v1228, %v1229
    %v1231 = vand.u32 %v1230, 4294901760
    %1232 = vmatpush1.msra.mxu0 %v1231
    %1233 = vmatprep.subr.mxu0 0.0
    %1234 = vmatpush1.msra.mxu0 0.0
    %1235 = vmatprep.subr.mxu0 0.0
    %1236 = vmatpush1.msra.mxu0 0.0
    %1237 = vmatprep.subr.mxu0 0.0
    %1238 = vmatpush1.msra.mxu0 0.0
    %1239 = vmatprep.subr.mxu0 0.0
    %1240 = vmatpush1.msra.mxu0 0.0
    %1241 = vmatprep.subr.mxu0 0.0
    %1242 = vmatpush1.msra.mxu0 0.0
    %1243 = vmatprep.subr.mxu0 0.0
    %1244 = vmatpush1.msra.mxu0 0.0
    %1245 = vmatprep.subr.mxu0 0.0
    %1246 = vmatpush1.msra.mxu0 0.0
    %1247 = vmatprep.subr.mxu0 0.0
    %1248 = vmatpush1.msra.mxu0 0.0
    %1249 = vmatprep.subr.mxu0 0.0
    %1250 = vmatpush1.msra.mxu0 0.0
    %1251 = vmatprep.subr.mxu0 0.0
    %1252 = vmatpush1.msra.mxu0 0.0
    %1253 = vmatprep.subr.mxu0 0.0
    %1254 = vmatpush1.msra.mxu0 0.0
    %1255 = vmatprep.subr.mxu0 0.0
    %1256 = vmatpush1.msra.mxu0 0.0
    %1257 = vmatprep.subr.mxu0 0.0
    %1258 = vmatpush1.msra.mxu0 0.0
    %1259 = vmatprep.subr.mxu0 0.0
    %1260 = vmatpush1.msra.mxu0 0.0
    %1261 = vmatprep.subr.mxu0 0.0
    %1262 = vmatpush1.msra.mxu0 0.0
    %1263 = vmatprep.subr.mxu0 0.0
    %1264 = vmatpush1.msra.mxu0 0.0
    %1265 = vmatprep.subr.mxu0 0.0
    %1266 = vmatpush1.msra.mxu0 0.0
    %1267 = vmatprep.subr.mxu0 0.0
    %1268 = vmatpush1.msra.mxu0 0.0
    %1269 = vmatprep.subr.mxu0 0.0
    %1270 = vmatpush1.msra.mxu0 0.0
    %1271 = vmatprep.subr.mxu0 0.0
    %1272 = vmatpush1.msra.mxu0 0.0
    %1273 = vmatprep.subr.mxu0 0.0
    %1274 = vmatpush1.msra.mxu0 0.0
    %1275 = vmatprep.subr.mxu0 0.0
    %1276 = vmatpush1.msra.mxu0 0.0
    %1277 = vmatprep.subr.mxu0 0.0
    %1278 = vmatpush1.msra.mxu0 0.0
    %1279 = vmatprep.subr.mxu0 0.0
    %1280 = vmatpush1.msra.mxu0 0.0
    %1281 = vmatprep.subr.mxu0 0.0
    %1282 = vmatpush1.msra.mxu0 0.0
    %1283 = vmatprep.subr.mxu0 0.0
    %1284 = vmatpush1.msra.mxu0 0.0
    %1285 = vmatprep.subr.mxu0 0.0
    %1286 = vmatpush1.msra.mxu0 0.0
    %1287 = vmatprep.subr.mxu0 0.0
    %1288 = vmatpush1.msra.mxu0 0.0
    %1289 = vmatprep.mubr.f32.mxu0 0.0
    %v1290 = vand.u32 %v370, 4294901760
    %1291 = vmatmul.mubr.f32.gmra.mrb[0].mxu0 %v1290
    %v1292 = vpop.f32.mrb[0].mxu0
    %v1293 = vadd.f32 %v1148, %v1292
    %v1294 = vpop.f32.mrb[0].mxu0
    %v1295 = vadd.f32 %v1150, %v1294
    %1296 = vmatprep.mubr.f32.mxu0 0.0
    %v1297 = vand.u32 %v372, 4294901760
    %1298 = vmatmul.mubr.f32.gmra.mrb[0].mxu0 %v1297
    %v1299 = vpop.f32.mrb[0].mxu0
    %v1300 = vadd.f32 %v1159, %v1299
    %v1301 = vpop.f32.mrb[0].mxu0
    %v1302 = vadd.f32 %v1161, %v1301
    %1303 = vmatprep.mubr.f32.mxu0 0.0
    %v1304 = vand.u32 %v374, 4294901760
    %1305 = vmatmul.mubr.f32.gmra.mrb[0].mxu0 %v1304
    %v1306 = vpop.f32.mrb[0].mxu0
    %v1307 = vadd.f32 %v1170, %v1306
    %v1308 = vpop.f32.mrb[0].mxu0
    %v1309 = vadd.f32 %v1172, %v1308
    %1310 = vmatprep.mubr.f32.mxu0 0.0
    %v1311 = vand.u32 %v376, 4294901760
    %1312 = vmatmul.mubr.f32.gmra.mrb[0].mxu0 %v1311
    %v1313 = vpop.f32.mrb[0].mxu0
    %v1314 = vadd.f32 %v1181, %v1313
    %v1315 = vpop.f32.mrb[0].mxu0
    %v1316 = vadd.f32 %v1183, %v1315
    %1317 = vdwg.mxu0
    %v1318 = vand.u32 %v324, 4294901760
    %v1319 = vsub.f32 %v324, %v1318
    %1320 = vmatprep.subr.mxu0 %v1319
    %v1321 = vand.u32 %v323, 4294901760
    %v1322 = vsub.f32 %v323, %v1321
    %1323 = vmatpush1.msra.mxu0 %v1322
    %v1324 = vand.u32 %v332, 4294901760
    %v1325 = vsub.f32 %v332, %v1324
    %1326 = vmatprep.subr.mxu0 %v1325
    %v1327 = vand.u32 %v331, 4294901760
    %v1328 = vsub.f32 %v331, %v1327
    %1329 = vmatpush1.msra.mxu0 %v1328
    %v1330 = vand.u32 %v340, 4294901760
    %v1331 = vsub.f32 %v340, %v1330
    %1332 = vmatprep.subr.mxu0 %v1331
    %v1333 = vand.u32 %v339, 4294901760
    %v1334 = vsub.f32 %v339, %v1333
    %1335 = vmatpush1.msra.mxu0 %v1334
    %v1336 = vand.u32 %v348, 4294901760
    %v1337 = vsub.f32 %v348, %v1336
    %1338 = vmatprep.subr.mxu0 %v1337
    %v1339 = vand.u32 %v347, 4294901760
    %v1340 = vsub.f32 %v347, %v1339
    %1341 = vmatpush1.msra.mxu0 %v1340
    %1342 = vmatprep.subr.mxu0 0.0
    %1343 = vmatpush1.msra.mxu0 0.0
    %1344 = vmatprep.subr.mxu0 0.0
    %1345 = vmatpush1.msra.mxu0 0.0
    %1346 = vmatprep.subr.mxu0 0.0
    %1347 = vmatpush1.msra.mxu0 0.0
    %1348 = vmatprep.subr.mxu0 0.0
    %1349 = vmatpush1.msra.mxu0 0.0
    %1350 = vmatprep.subr.mxu0 0.0
    %1351 = vmatpush1.msra.mxu0 0.0
    %1352 = vmatprep.subr.mxu0 0.0
    %1353 = vmatpush1.msra.mxu0 0.0
    %1354 = vmatprep.subr.mxu0 0.0
    %1355 = vmatpush1.msra.mxu0 0.0
    %1356 = vmatprep.subr.mxu0 0.0
    %1357 = vmatpush1.msra.mxu0 0.0
    %1358 = vmatprep.subr.mxu0 0.0
    %1359 = vmatpush1.msra.mxu0 0.0
    %1360 = vmatprep.subr.mxu0 0.0
    %1361 = vmatpush1.msra.mxu0 0.0
    %1362 = vmatprep.subr.mxu0 0.0
    %1363 = vmatpush1.msra.mxu0 0.0
    %1364 = vmatprep.subr.mxu0 0.0
    %1365 = vmatpush1.msra.mxu0 0.0
    %1366 = vmatprep.subr.mxu0 0.0
    %1367 = vmatpush1.msra.mxu0 0.0
    %1368 = vmatprep.subr.mxu0 0.0
    %1369 = vmatpush1.msra.mxu0 0.0
    %1370 = vmatprep.subr.mxu0 0.0
    %1371 = vmatpush1.msra.mxu0 0.0
    %1372 = vmatprep.subr.mxu0 0.0
    %1373 = vmatpush1.msra.mxu0 0.0
    %1374 = vmatprep.subr.mxu0 0.0
    %1375 = vmatpush1.msra.mxu0 0.0
    %1376 = vmatprep.subr.mxu0 0.0
    %1377 = vmatpush1.msra.mxu0 0.0
    %1378 = vmatprep.subr.mxu0 0.0
    %1379 = vmatpush1.msra.mxu0 0.0
    %1380 = vmatprep.subr.mxu0 0.0
    %1381 = vmatpush1.msra.mxu0 0.0
    %1382 = vmatprep.subr.mxu0 0.0
    %1383 = vmatpush1.msra.mxu0 0.0
    %1384 = vmatprep.subr.mxu0 0.0
    %1385 = vmatpush1.msra.mxu0 0.0
    %1386 = vmatprep.subr.mxu0 0.0
    %1387 = vmatpush1.msra.mxu0 0.0
    %1388 = vmatprep.subr.mxu0 0.0
    %1389 = vmatpush1.msra.mxu0 0.0
    %1390 = vmatprep.subr.mxu0 0.0
    %1391 = vmatpush1.msra.mxu0 0.0
    %1392 = vmatprep.subr.mxu0 0.0
    %1393 = vmatpush1.msra.mxu0 0.0
    %1394 = vmatprep.subr.mxu0 0.0
    %1395 = vmatpush1.msra.mxu0 0.0
    %1396 = vmatprep.subr.mxu0 0.0
    %1397 = vmatpush1.msra.mxu0 0.0
    %1398 = vmatprep.mubr.f32.mxu0 0.0
    %v1399 = vand.u32 %v370, 4294901760
    %v1400 = vsub.f32 %v370, %v1399
    %1401 = vmatmul.mubr.f32.gmra.mrb[0].mxu0 %v1400
    %v1402 = vpop.f32.mrb[0].mxu0
    %v1403 = vadd.f32 %v1293, %v1402
    %v1404 = vpop.f32.mrb[0].mxu0
    %v1405 = vadd.f32 %v1295, %v1404
    %1406 = vmatprep.mubr.f32.mxu0 0.0
    %v1407 = vand.u32 %v372, 4294901760
    %v1408 = vsub.f32 %v372, %v1407
    %1409 = vmatmul.mubr.f32.gmra.mrb[0].mxu0 %v1408
    %v1410 = vpop.f32.mrb[0].mxu0
    %v1411 = vadd.f32 %v1300, %v1410
    %v1412 = vpop.f32.mrb[0].mxu0
    %v1413 = vadd.f32 %v1302, %v1412
    %1414 = vmatprep.mubr.f32.mxu0 0.0
    %v1415 = vand.u32 %v374, 4294901760
    %v1416 = vsub.f32 %v374, %v1415
    %1417 = vmatmul.mubr.f32.gmra.mrb[0].mxu0 %v1416
    %v1418 = vpop.f32.mrb[0].mxu0
    %v1419 = vadd.f32 %v1307, %v1418
    %v1420 = vpop.f32.mrb[0].mxu0
    %v1421 = vadd.f32 %v1309, %v1420
    %1422 = vmatprep.mubr.f32.mxu0 0.0
    %v1423 = vand.u32 %v376, 4294901760
    %v1424 = vsub.f32 %v376, %v1423
    %1425 = vmatmul.mubr.f32.gmra.mrb[0].mxu0 %v1424
    %v1426 = vpop.f32.mrb[0].mxu0
    %v1427 = vadd.f32 %v1314, %v1426
    %v1428 = vpop.f32.mrb[0].mxu0
    %v1429 = vadd.f32 %v1316, %v1428
    %1430 = vdwg.mxu0
    %v1431 = vand.u32 %v324, 4294901760
    %1432 = vmatprep.subr.mxu0 %v1431
    %v1433 = vand.u32 %v323, 4294901760
    %1434 = vmatpush1.msra.mxu0 %v1433
    %v1435 = vand.u32 %v332, 4294901760
    %1436 = vmatprep.subr.mxu0 %v1435
    %v1437 = vand.u32 %v331, 4294901760
    %1438 = vmatpush1.msra.mxu0 %v1437
    %v1439 = vand.u32 %v340, 4294901760
    %1440 = vmatprep.subr.mxu0 %v1439
    %v1441 = vand.u32 %v339, 4294901760
    %1442 = vmatpush1.msra.mxu0 %v1441
    %v1443 = vand.u32 %v348, 4294901760
    %1444 = vmatprep.subr.mxu0 %v1443
    %v1445 = vand.u32 %v347, 4294901760
    %1446 = vmatpush1.msra.mxu0 %v1445
    %1447 = vmatprep.subr.mxu0 0.0
    %1448 = vmatpush1.msra.mxu0 0.0
    %1449 = vmatprep.subr.mxu0 0.0
    %1450 = vmatpush1.msra.mxu0 0.0
    %1451 = vmatprep.subr.mxu0 0.0
    %1452 = vmatpush1.msra.mxu0 0.0
    %1453 = vmatprep.subr.mxu0 0.0
    %1454 = vmatpush1.msra.mxu0 0.0
    %1455 = vmatprep.subr.mxu0 0.0
    %1456 = vmatpush1.msra.mxu0 0.0
    %1457 = vmatprep.subr.mxu0 0.0
    %1458 = vmatpush1.msra.mxu0 0.0
    %1459 = vmatprep.subr.mxu0 0.0
    %1460 = vmatpush1.msra.mxu0 0.0
    %1461 = vmatprep.subr.mxu0 0.0
    %1462 = vmatpush1.msra.mxu0 0.0
    %1463 = vmatprep.subr.mxu0 0.0
    %1464 = vmatpush1.msra.mxu0 0.0
    %1465 = vmatprep.subr.mxu0 0.0
    %1466 = vmatpush1.msra.mxu0 0.0
    %1467 = vmatprep.subr.mxu0 0.0
    %1468 = vmatpush1.msra.mxu0 0.0
    %1469 = vmatprep.subr.mxu0 0.0
    %1470 = vmatpush1.msra.mxu0 0.0
    %1471 = vmatprep.subr.mxu0 0.0
    %1472 = vmatpush1.msra.mxu0 0.0
    %1473 = vmatprep.subr.mxu0 0.0
    %1474 = vmatpush1.msra.mxu0 0.0
    %1475 = vmatprep.subr.mxu0 0.0
    %1476 = vmatpush1.msra.mxu0 0.0
    %1477 = vmatprep.subr.mxu0 0.0
    %1478 = vmatpush1.msra.mxu0 0.0
    %1479 = vmatprep.subr.mxu0 0.0
    %1480 = vmatpush1.msra.mxu0 0.0
    %1481 = vmatprep.subr.mxu0 0.0
    %1482 = vmatpush1.msra.mxu0 0.0
    %1483 = vmatprep.subr.mxu0 0.0
    %1484 = vmatpush1.msra.mxu0 0.0
    %1485 = vmatprep.subr.mxu0 0.0
    %1486 = vmatpush1.msra.mxu0 0.0
    %1487 = vmatprep.subr.mxu0 0.0
    %1488 = vmatpush1.msra.mxu0 0.0
    %1489 = vmatprep.subr.mxu0 0.0
    %1490 = vmatpush1.msra.mxu0 0.0
    %1491 = vmatprep.subr.mxu0 0.0
    %1492 = vmatpush1.msra.mxu0 0.0
    %1493 = vmatprep.subr.mxu0 0.0
    %1494 = vmatpush1.msra.mxu0 0.0
    %1495 = vmatprep.subr.mxu0 0.0
    %1496 = vmatpush1.msra.mxu0 0.0
    %1497 = vmatprep.subr.mxu0 0.0
    %1498 = vmatpush1.msra.mxu0 0.0
    %1499 = vmatprep.subr.mxu0 0.0
    %1500 = vmatpush1.msra.mxu0 0.0
    %1501 = vmatprep.subr.mxu0 0.0
    %1502 = vmatpush1.msra.mxu0 0.0
    %1503 = vmatprep.mubr.f32.mxu0 0.0
    %v1504 = vand.u32 %v370, 4294901760
    %v1505 = vsub.f32 %v370, %v1504
    %v1506 = vand.u32 %v1505, 4294901760
    %1507 = vmatmul.mubr.f32.gmra.mrb[0].mxu0 %v1506
    %v1508 = vpop.f32.mrb[0].mxu0
    %v1509 = vadd.f32 %v1403, %v1508
    %v1510 = vpop.f32.mrb[0].mxu0
    %v1511 = vadd.f32 %v1405, %v1510
    %1512 = vmatprep.mubr.f32.mxu0 0.0
    %v1513 = vand.u32 %v372, 4294901760
    %v1514 = vsub.f32 %v372, %v1513
    %v1515 = vand.u32 %v1514, 4294901760
    %1516 = vmatmul.mubr.f32.gmra.mrb[0].mxu0 %v1515
    %v1517 = vpop.f32.mrb[0].mxu0
    %v1518 = vadd.f32 %v1411, %v1517
    %v1519 = vpop.f32.mrb[0].mxu0
    %v1520 = vadd.f32 %v1413, %v1519
    %1521 = vmatprep.mubr.f32.mxu0 0.0
    %v1522 = vand.u32 %v374, 4294901760
    %v1523 = vsub.f32 %v374, %v1522
    %v1524 = vand.u32 %v1523, 4294901760
    %1525 = vmatmul.mubr.f32.gmra.mrb[0].mxu0 %v1524
    %v1526 = vpop.f32.mrb[0].mxu0
    %v1527 = vadd.f32 %v1419, %v1526
    %v1528 = vpop.f32.mrb[0].mxu0
    %v1529 = vadd.f32 %v1421, %v1528
    %1530 = vmatprep.mubr.f32.mxu0 0.0
    %v1531 = vand.u32 %v376, 4294901760
    %v1532 = vsub.f32 %v376, %v1531
    %v1533 = vand.u32 %v1532, 4294901760
    %1534 = vmatmul.mubr.f32.gmra.mrb[0].mxu0 %v1533
    %v1535 = vpop.f32.mrb[0].mxu0
    %v1536 = vadd.f32 %v1427, %v1535
    %v1537 = vpop.f32.mrb[0].mxu0
    %v1538 = vadd.f32 %v1429, %v1537
    %1539 = vdwg.mxu0
    %v1540 = vand.u32 %v324, 4294901760
    %v1541 = vsub.f32 %v324, %v1540
    %v1542 = vand.u32 %v1541, 4294901760
    %1543 = vmatprep.subr.mxu0 %v1542
    %v1544 = vand.u32 %v323, 4294901760
    %v1545 = vsub.f32 %v323, %v1544
    %v1546 = vand.u32 %v1545, 4294901760
    %1547 = vmatpush1.msra.mxu0 %v1546
    %v1548 = vand.u32 %v332, 4294901760
    %v1549 = vsub.f32 %v332, %v1548
    %v1550 = vand.u32 %v1549, 4294901760
    %1551 = vmatprep.subr.mxu0 %v1550
    %v1552 = vand.u32 %v331, 4294901760
    %v1553 = vsub.f32 %v331, %v1552
    %v1554 = vand.u32 %v1553, 4294901760
    %1555 = vmatpush1.msra.mxu0 %v1554
    %v1556 = vand.u32 %v340, 4294901760
    %v1557 = vsub.f32 %v340, %v1556
    %v1558 = vand.u32 %v1557, 4294901760
    %1559 = vmatprep.subr.mxu0 %v1558
    %v1560 = vand.u32 %v339, 4294901760
    %v1561 = vsub.f32 %v339, %v1560
    %v1562 = vand.u32 %v1561, 4294901760
    %1563 = vmatpush1.msra.mxu0 %v1562
    %v1564 = vand.u32 %v348, 4294901760
    %v1565 = vsub.f32 %v348, %v1564
    %v1566 = vand.u32 %v1565, 4294901760
    %1567 = vmatprep.subr.mxu0 %v1566
    %v1568 = vand.u32 %v347, 4294901760
    %v1569 = vsub.f32 %v347, %v1568
    %v1570 = vand.u32 %v1569, 4294901760
    %1571 = vmatpush1.msra.mxu0 %v1570
    %1572 = vmatprep.subr.mxu0 0.0
    %1573 = vmatpush1.msra.mxu0 0.0
    %1574 = vmatprep.subr.mxu0 0.0
    %1575 = vmatpush1.msra.mxu0 0.0
    %1576 = vmatprep.subr.mxu0 0.0
    %1577 = vmatpush1.msra.mxu0 0.0
    %1578 = vmatprep.subr.mxu0 0.0
    %1579 = vmatpush1.msra.mxu0 0.0
    %1580 = vmatprep.subr.mxu0 0.0
    %1581 = vmatpush1.msra.mxu0 0.0
    %1582 = vmatprep.subr.mxu0 0.0
    %1583 = vmatpush1.msra.mxu0 0.0
    %1584 = vmatprep.subr.mxu0 0.0
    %1585 = vmatpush1.msra.mxu0 0.0
    %1586 = vmatprep.subr.mxu0 0.0
    %1587 = vmatpush1.msra.mxu0 0.0
    %1588 = vmatprep.subr.mxu0 0.0
    %1589 = vmatpush1.msra.mxu0 0.0
    %1590 = vmatprep.subr.mxu0 0.0
    %1591 = vmatpush1.msra.mxu0 0.0
    %1592 = vmatprep.subr.mxu0 0.0
    %1593 = vmatpush1.msra.mxu0 0.0
    %1594 = vmatprep.subr.mxu0 0.0
    %1595 = vmatpush1.msra.mxu0 0.0
    %1596 = vmatprep.subr.mxu0 0.0
    %1597 = vmatpush1.msra.mxu0 0.0
    %1598 = vmatprep.subr.mxu0 0.0
    %1599 = vmatpush1.msra.mxu0 0.0
    %1600 = vmatprep.subr.mxu0 0.0
    %1601 = vmatpush1.msra.mxu0 0.0
    %1602 = vmatprep.subr.mxu0 0.0
    %1603 = vmatpush1.msra.mxu0 0.0
    %1604 = vmatprep.subr.mxu0 0.0
    %1605 = vmatpush1.msra.mxu0 0.0
    %1606 = vmatprep.subr.mxu0 0.0
    %1607 = vmatpush1.msra.mxu0 0.0
    %1608 = vmatprep.subr.mxu0 0.0
    %1609 = vmatpush1.msra.mxu0 0.0
    %1610 = vmatprep.subr.mxu0 0.0
    %1611 = vmatpush1.msra.mxu0 0.0
    %1612 = vmatprep.subr.mxu0 0.0
    %1613 = vmatpush1.msra.mxu0 0.0
    %1614 = vmatprep.subr.mxu0 0.0
    %1615 = vmatpush1.msra.mxu0 0.0
    %1616 = vmatprep.subr.mxu0 0.0
    %1617 = vmatpush1.msra.mxu0 0.0
    %1618 = vmatprep.subr.mxu0 0.0
    %1619 = vmatpush1.msra.mxu0 0.0
    %1620 = vmatprep.subr.mxu0 0.0
    %1621 = vmatpush1.msra.mxu0 0.0
    %1622 = vmatprep.subr.mxu0 0.0
    %1623 = vmatpush1.msra.mxu0 0.0
    %1624 = vmatprep.subr.mxu0 0.0
    %1625 = vmatpush1.msra.mxu0 0.0
    %1626 = vmatprep.subr.mxu0 0.0
    %1627 = vmatpush1.msra.mxu0 0.0
    %1628 = vmatprep.mubr.f32.mxu0 0.0
    %v1629 = vand.u32 %v370, 4294901760
    %1630 = vmatmul.mubr.f32.gmra.mrb[0].mxu0 %v1629
    %v1631 = vpop.f32.mrb[0].mxu0
    %v1632 = vadd.f32 %v1509, %v1631
    %v1633 = vpop.f32.mrb[0].mxu0
    %v1634 = vadd.f32 %v1511, %v1633
    %1635 = vmatprep.mubr.f32.mxu0 0.0
    %v1636 = vand.u32 %v372, 4294901760
    %1637 = vmatmul.mubr.f32.gmra.mrb[0].mxu0 %v1636
    %v1638 = vpop.f32.mrb[0].mxu0
    %v1639 = vadd.f32 %v1518, %v1638
    %v1640 = vpop.f32.mrb[0].mxu0
    %v1641 = vadd.f32 %v1520, %v1640
    %1642 = vmatprep.mubr.f32.mxu0 0.0
    %v1643 = vand.u32 %v374, 4294901760
    %1644 = vmatmul.mubr.f32.gmra.mrb[0].mxu0 %v1643
    %v1645 = vpop.f32.mrb[0].mxu0
    %v1646 = vadd.f32 %v1527, %v1645
    %v1647 = vpop.f32.mrb[0].mxu0
    %v1648 = vadd.f32 %v1529, %v1647
    %1649 = vmatprep.mubr.f32.mxu0 0.0
    %v1650 = vand.u32 %v376, 4294901760
    %1651 = vmatmul.mubr.f32.gmra.mrb[0].mxu0 %v1650
    %v1652 = vpop.f32.mrb[0].mxu0
    %v1653 = vadd.f32 %v1536, %v1652
    %v1654 = vpop.f32.mrb[0].mxu0
    %v1655 = vadd.f32 %v1538, %v1654
    %1656 = vdwg.mxu0
    %v1657 = vand.u32 %v324, 4294901760
    %1658 = vmatprep.subr.mxu0 %v1657
    %v1659 = vand.u32 %v323, 4294901760
    %1660 = vmatpush1.msra.mxu0 %v1659
    %v1661 = vand.u32 %v332, 4294901760
    %1662 = vmatprep.subr.mxu0 %v1661
    %v1663 = vand.u32 %v331, 4294901760
    %1664 = vmatpush1.msra.mxu0 %v1663
    %v1665 = vand.u32 %v340, 4294901760
    %1666 = vmatprep.subr.mxu0 %v1665
    %v1667 = vand.u32 %v339, 4294901760
    %1668 = vmatpush1.msra.mxu0 %v1667
    %v1669 = vand.u32 %v348, 4294901760
    %1670 = vmatprep.subr.mxu0 %v1669
    %v1671 = vand.u32 %v347, 4294901760
    %1672 = vmatpush1.msra.mxu0 %v1671
    %1673 = vmatprep.subr.mxu0 0.0
    %1674 = vmatpush1.msra.mxu0 0.0
    %1675 = vmatprep.subr.mxu0 0.0
    %1676 = vmatpush1.msra.mxu0 0.0
    %1677 = vmatprep.subr.mxu0 0.0
    %1678 = vmatpush1.msra.mxu0 0.0
    %1679 = vmatprep.subr.mxu0 0.0
    %1680 = vmatpush1.msra.mxu0 0.0
    %1681 = vmatprep.subr.mxu0 0.0
    %1682 = vmatpush1.msra.mxu0 0.0
    %1683 = vmatprep.subr.mxu0 0.0
    %1684 = vmatpush1.msra.mxu0 0.0
    %1685 = vmatprep.subr.mxu0 0.0
    %1686 = vmatpush1.msra.mxu0 0.0
    %1687 = vmatprep.subr.mxu0 0.0
    %1688 = vmatpush1.msra.mxu0 0.0
    %1689 = vmatprep.subr.mxu0 0.0
    %1690 = vmatpush1.msra.mxu0 0.0
    %1691 = vmatprep.subr.mxu0 0.0
    %1692 = vmatpush1.msra.mxu0 0.0
    %1693 = vmatprep.subr.mxu0 0.0
    %1694 = vmatpush1.msra.mxu0 0.0
    %1695 = vmatprep.subr.mxu0 0.0
    %1696 = vmatpush1.msra.mxu0 0.0
    %1697 = vmatprep.subr.mxu0 0.0
    %1698 = vmatpush1.msra.mxu0 0.0
    %1699 = vmatprep.subr.mxu0 0.0
    %1700 = vmatpush1.msra.mxu0 0.0
    %1701 = vmatprep.subr.mxu0 0.0
    %1702 = vmatpush1.msra.mxu0 0.0
    %1703 = vmatprep.subr.mxu0 0.0
    %1704 = vmatpush1.msra.mxu0 0.0
    %1705 = vmatprep.subr.mxu0 0.0
    %1706 = vmatpush1.msra.mxu0 0.0
    %1707 = vmatprep.subr.mxu0 0.0
    %1708 = vmatpush1.msra.mxu0 0.0
    %1709 = vmatprep.subr.mxu0 0.0
    %1710 = vmatpush1.msra.mxu0 0.0
    %1711 = vmatprep.subr.mxu0 0.0
    %1712 = vmatpush1.msra.mxu0 0.0
    %1713 = vmatprep.subr.mxu0 0.0
    %1714 = vmatpush1.msra.mxu0 0.0
    %1715 = vmatprep.subr.mxu0 0.0
    %1716 = vmatpush1.msra.mxu0 0.0
    %1717 = vmatprep.subr.mxu0 0.0
    %1718 = vmatpush1.msra.mxu0 0.0
    %1719 = vmatprep.subr.mxu0 0.0
    %1720 = vmatpush1.msra.mxu0 0.0
    %1721 = vmatprep.subr.mxu0 0.0
    %1722 = vmatpush1.msra.mxu0 0.0
    %1723 = vmatprep.subr.mxu0 0.0
    %1724 = vmatpush1.msra.mxu0 0.0
    %1725 = vmatprep.subr.mxu0 0.0
    %1726 = vmatpush1.msra.mxu0 0.0
    %1727 = vmatprep.subr.mxu0 0.0
    %1728 = vmatpush1.msra.mxu0 0.0
    %1729 = vmatprep.mubr.f32.mxu0 0.0
    %v1730 = vand.u32 %v370, 4294901760
    %1731 = vmatmul.mubr.f32.gmra.mrb[0].mxu0 %v1730
    %v1732 = vpop.f32.mrb[0].mxu0
    %v1733 = vadd.f32 %v1632, %v1732
    %v1734 = vpop.f32.mrb[0].mxu0
    %v1735 = vadd.f32 %v1634, %v1734
    %1736 = vmatprep.mubr.f32.mxu0 0.0
    %v1737 = vand.u32 %v372, 4294901760
    %1738 = vmatmul.mubr.f32.gmra.mrb[0].mxu0 %v1737
    %v1739 = vpop.f32.mrb[0].mxu0
    %v1740 = vadd.f32 %v1639, %v1739
    %v1741 = vpop.f32.mrb[0].mxu0
    %v1742 = vadd.f32 %v1641, %v1741
    %1743 = vmatprep.mubr.f32.mxu0 0.0
    %v1744 = vand.u32 %v374, 4294901760
    %1745 = vmatmul.mubr.f32.gmra.mrb[0].mxu0 %v1744
    %v1746 = vpop.f32.mrb[0].mxu0
    %v1747 = vadd.f32 %v1646, %v1746
    %v1748 = vpop.f32.mrb[0].mxu0
    %v1749 = vadd.f32 %v1648, %v1748
    %1750 = vmatprep.mubr.f32.mxu0 0.0
    %v1751 = vand.u32 %v376, 4294901760
    %1752 = vmatmul.mubr.f32.gmra.mrb[0].mxu0 %v1751
    %v1753 = vpop.f32.mrb[0].mxu0
    %v1754 = vadd.f32 %v1653, %v1753
    %v1755 = vpop.f32.mrb[0].mxu0
    %v1756 = vadd.f32 %v1655, %v1755
    %1757 = vdwg.mxu0
    %v1758 = vand.u32 %v326, 4294901760
    %1759 = vmatprep.subr.mxu0 %v1758
    %v1760 = vand.u32 %v325, 4294901760
    %1761 = vmatpush1.msra.mxu0 %v1760
    %v1762 = vand.u32 %v334, 4294901760
    %1763 = vmatprep.subr.mxu0 %v1762
    %v1764 = vand.u32 %v333, 4294901760
    %1765 = vmatpush1.msra.mxu0 %v1764
    %v1766 = vand.u32 %v342, 4294901760
    %1767 = vmatprep.subr.mxu0 %v1766
    %v1768 = vand.u32 %v341, 4294901760
    %1769 = vmatpush1.msra.mxu0 %v1768
    %v1770 = vand.u32 %v350, 4294901760
    %1771 = vmatprep.subr.mxu0 %v1770
    %v1772 = vand.u32 %v349, 4294901760
    %1773 = vmatpush1.msra.mxu0 %v1772
    %1774 = vmatprep.subr.mxu0 0.0
    %1775 = vmatpush1.msra.mxu0 0.0
    %1776 = vmatprep.subr.mxu0 0.0
    %1777 = vmatpush1.msra.mxu0 0.0
    %1778 = vmatprep.subr.mxu0 0.0
    %1779 = vmatpush1.msra.mxu0 0.0
    %1780 = vmatprep.subr.mxu0 0.0
    %1781 = vmatpush1.msra.mxu0 0.0
    %1782 = vmatprep.subr.mxu0 0.0
    %1783 = vmatpush1.msra.mxu0 0.0
    %1784 = vmatprep.subr.mxu0 0.0
    %1785 = vmatpush1.msra.mxu0 0.0
    %1786 = vmatprep.subr.mxu0 0.0
    %1787 = vmatpush1.msra.mxu0 0.0
    %1788 = vmatprep.subr.mxu0 0.0
    %1789 = vmatpush1.msra.mxu0 0.0
    %1790 = vmatprep.subr.mxu0 0.0
    %1791 = vmatpush1.msra.mxu0 0.0
    %1792 = vmatprep.subr.mxu0 0.0
    %1793 = vmatpush1.msra.mxu0 0.0
    %1794 = vmatprep.subr.mxu0 0.0
    %1795 = vmatpush1.msra.mxu0 0.0
    %1796 = vmatprep.subr.mxu0 0.0
    %1797 = vmatpush1.msra.mxu0 0.0
    %1798 = vmatprep.subr.mxu0 0.0
    %1799 = vmatpush1.msra.mxu0 0.0
    %1800 = vmatprep.subr.mxu0 0.0
    %1801 = vmatpush1.msra.mxu0 0.0
    %1802 = vmatprep.subr.mxu0 0.0
    %1803 = vmatpush1.msra.mxu0 0.0
    %1804 = vmatprep.subr.mxu0 0.0
    %1805 = vmatpush1.msra.mxu0 0.0
    %1806 = vmatprep.subr.mxu0 0.0
    %1807 = vmatpush1.msra.mxu0 0.0
    %1808 = vmatprep.subr.mxu0 0.0
    %1809 = vmatpush1.msra.mxu0 0.0
    %1810 = vmatprep.subr.mxu0 0.0
    %1811 = vmatpush1.msra.mxu0 0.0
    %1812 = vmatprep.subr.mxu0 0.0
    %1813 = vmatpush1.msra.mxu0 0.0
    %1814 = vmatprep.subr.mxu0 0.0
    %1815 = vmatpush1.msra.mxu0 0.0
    %1816 = vmatprep.subr.mxu0 0.0
    %1817 = vmatpush1.msra.mxu0 0.0
    %1818 = vmatprep.subr.mxu0 0.0
    %1819 = vmatpush1.msra.mxu0 0.0
    %1820 = vmatprep.subr.mxu0 0.0
    %1821 = vmatpush1.msra.mxu0 0.0
    %1822 = vmatprep.subr.mxu0 0.0
    %1823 = vmatpush1.msra.mxu0 0.0
    %1824 = vmatprep.subr.mxu0 0.0
    %1825 = vmatpush1.msra.mxu0 0.0
    %1826 = vmatprep.subr.mxu0 0.0
    %1827 = vmatpush1.msra.mxu0 0.0
    %1828 = vmatprep.subr.mxu0 0.0
    %1829 = vmatpush1.msra.mxu0 0.0
    %1830 = vmatprep.mubr.f32.mxu0 0.0
    %v1831 = vand.u32 %v370, 4294901760
    %v1832 = vsub.f32 %v370, %v1831
    %v1833 = vand.u32 %v1832, 4294901760
    %v1834 = vsub.f32 %v1832, %v1833
    %v1835 = vand.u32 %v1834, 4294901760
    %1836 = vmatmul.mubr.f32.gmra.mrb[0].mxu0 %v1835
    %v1837 = vpop.f32.mrb[0].mxu0
    %v1838 = vadd.f32 %v355, %v1837
    %v1839 = vpop.f32.mrb[0].mxu0
    %v1840 = vadd.f32 %v355, %v1839
    %1841 = vmatprep.mubr.f32.mxu0 0.0
    %v1842 = vand.u32 %v372, 4294901760
    %v1843 = vsub.f32 %v372, %v1842
    %v1844 = vand.u32 %v1843, 4294901760
    %v1845 = vsub.f32 %v1843, %v1844
    %v1846 = vand.u32 %v1845, 4294901760
    %1847 = vmatmul.mubr.f32.gmra.mrb[0].mxu0 %v1846
    %v1848 = vpop.f32.mrb[0].mxu0
    %v1849 = vadd.f32 %v359, %v1848
    %v1850 = vpop.f32.mrb[0].mxu0
    %v1851 = vadd.f32 %v359, %v1850
    %1852 = vmatprep.mubr.f32.mxu0 0.0
    %v1853 = vand.u32 %v374, 4294901760
    %v1854 = vsub.f32 %v374, %v1853
    %v1855 = vand.u32 %v1854, 4294901760
    %v1856 = vsub.f32 %v1854, %v1855
    %v1857 = vand.u32 %v1856, 4294901760
    %1858 = vmatmul.mubr.f32.gmra.mrb[0].mxu0 %v1857
    %v1859 = vpop.f32.mrb[0].mxu0
    %v1860 = vadd.f32 %v363, %v1859
    %v1861 = vpop.f32.mrb[0].mxu0
    %v1862 = vadd.f32 %v363, %v1861
    %1863 = vmatprep.mubr.f32.mxu0 0.0
    %v1864 = vand.u32 %v376, 4294901760
    %v1865 = vsub.f32 %v376, %v1864
    %v1866 = vand.u32 %v1865, 4294901760
    %v1867 = vsub.f32 %v1865, %v1866
    %v1868 = vand.u32 %v1867, 4294901760
    %1869 = vmatmul.mubr.f32.gmra.mrb[0].mxu0 %v1868
    %v1870 = vpop.f32.mrb[0].mxu0
    %v1871 = vadd.f32 %v367, %v1870
    %v1872 = vpop.f32.mrb[0].mxu0
    %v1873 = vadd.f32 %v367, %v1872
    %1874 = vdwg.mxu0
    %v1875 = vand.u32 %v326, 4294901760
    %v1876 = vsub.f32 %v326, %v1875
    %v1877 = vand.u32 %v1876, 4294901760
    %v1878 = vsub.f32 %v1876, %v1877
    %v1879 = vand.u32 %v1878, 4294901760
    %1880 = vmatprep.subr.mxu0 %v1879
    %v1881 = vand.u32 %v325, 4294901760
    %v1882 = vsub.f32 %v325, %v1881
    %v1883 = vand.u32 %v1882, 4294901760
    %v1884 = vsub.f32 %v1882, %v1883
    %v1885 = vand.u32 %v1884, 4294901760
    %1886 = vmatpush1.msra.mxu0 %v1885
    %v1887 = vand.u32 %v334, 4294901760
    %v1888 = vsub.f32 %v334, %v1887
    %v1889 = vand.u32 %v1888, 4294901760
    %v1890 = vsub.f32 %v1888, %v1889
    %v1891 = vand.u32 %v1890, 4294901760
    %1892 = vmatprep.subr.mxu0 %v1891
    %v1893 = vand.u32 %v333, 4294901760
    %v1894 = vsub.f32 %v333, %v1893
    %v1895 = vand.u32 %v1894, 4294901760
    %v1896 = vsub.f32 %v1894, %v1895
    %v1897 = vand.u32 %v1896, 4294901760
    %1898 = vmatpush1.msra.mxu0 %v1897
    %v1899 = vand.u32 %v342, 4294901760
    %v1900 = vsub.f32 %v342, %v1899
    %v1901 = vand.u32 %v1900, 4294901760
    %v1902 = vsub.f32 %v1900, %v1901
    %v1903 = vand.u32 %v1902, 4294901760
    %1904 = vmatprep.subr.mxu0 %v1903
    %v1905 = vand.u32 %v341, 4294901760
    %v1906 = vsub.f32 %v341, %v1905
    %v1907 = vand.u32 %v1906, 4294901760
    %v1908 = vsub.f32 %v1906, %v1907
    %v1909 = vand.u32 %v1908, 4294901760
    %1910 = vmatpush1.msra.mxu0 %v1909
    %v1911 = vand.u32 %v350, 4294901760
    %v1912 = vsub.f32 %v350, %v1911
    %v1913 = vand.u32 %v1912, 4294901760
    %v1914 = vsub.f32 %v1912, %v1913
    %v1915 = vand.u32 %v1914, 4294901760
    %1916 = vmatprep.subr.mxu0 %v1915
    %v1917 = vand.u32 %v349, 4294901760
    %v1918 = vsub.f32 %v349, %v1917
    %v1919 = vand.u32 %v1918, 4294901760
    %v1920 = vsub.f32 %v1918, %v1919
    %v1921 = vand.u32 %v1920, 4294901760
    %1922 = vmatpush1.msra.mxu0 %v1921
    %1923 = vmatprep.subr.mxu0 0.0
    %1924 = vmatpush1.msra.mxu0 0.0
    %1925 = vmatprep.subr.mxu0 0.0
    %1926 = vmatpush1.msra.mxu0 0.0
    %1927 = vmatprep.subr.mxu0 0.0
    %1928 = vmatpush1.msra.mxu0 0.0
    %1929 = vmatprep.subr.mxu0 0.0
    %1930 = vmatpush1.msra.mxu0 0.0
    %1931 = vmatprep.subr.mxu0 0.0
    %1932 = vmatpush1.msra.mxu0 0.0
    %1933 = vmatprep.subr.mxu0 0.0
    %1934 = vmatpush1.msra.mxu0 0.0
    %1935 = vmatprep.subr.mxu0 0.0
    %1936 = vmatpush1.msra.mxu0 0.0
    %1937 = vmatprep.subr.mxu0 0.0
    %1938 = vmatpush1.msra.mxu0 0.0
    %1939 = vmatprep.subr.mxu0 0.0
    %1940 = vmatpush1.msra.mxu0 0.0
    %1941 = vmatprep.subr.mxu0 0.0
    %1942 = vmatpush1.msra.mxu0 0.0
    %1943 = vmatprep.subr.mxu0 0.0
    %1944 = vmatpush1.msra.mxu0 0.0
    %1945 = vmatprep.subr.mxu0 0.0
    %1946 = vmatpush1.msra.mxu0 0.0
    %1947 = vmatprep.subr.mxu0 0.0
    %1948 = vmatpush1.msra.mxu0 0.0
    %1949 = vmatprep.subr.mxu0 0.0
    %1950 = vmatpush1.msra.mxu0 0.0
    %1951 = vmatprep.subr.mxu0 0.0
    %1952 = vmatpush1.msra.mxu0 0.0
    %1953 = vmatprep.subr.mxu0 0.0
    %1954 = vmatpush1.msra.mxu0 0.0
    %1955 = vmatprep.subr.mxu0 0.0
    %1956 = vmatpush1.msra.mxu0 0.0
    %1957 = vmatprep.subr.mxu0 0.0
    %1958 = vmatpush1.msra.mxu0 0.0
    %1959 = vmatprep.subr.mxu0 0.0
    %1960 = vmatpush1.msra.mxu0 0.0
    %1961 = vmatprep.subr.mxu0 0.0
    %1962 = vmatpush1.msra.mxu0 0.0
    %1963 = vmatprep.subr.mxu0 0.0
    %1964 = vmatpush1.msra.mxu0 0.0
    %1965 = vmatprep.subr.mxu0 0.0
    %1966 = vmatpush1.msra.mxu0 0.0
    %1967 = vmatprep.subr.mxu0 0.0
    %1968 = vmatpush1.msra.mxu0 0.0
    %1969 = vmatprep.subr.mxu0 0.0
    %1970 = vmatpush1.msra.mxu0 0.0
    %1971 = vmatprep.subr.mxu0 0.0
    %1972 = vmatpush1.msra.mxu0 0.0
    %1973 = vmatprep.subr.mxu0 0.0
    %1974 = vmatpush1.msra.mxu0 0.0
    %1975 = vmatprep.subr.mxu0 0.0
    %1976 = vmatpush1.msra.mxu0 0.0
    %1977 = vmatprep.subr.mxu0 0.0
    %1978 = vmatpush1.msra.mxu0 0.0
    %1979 = vmatprep.mubr.f32.mxu0 0.0
    %v1980 = vand.u32 %v370, 4294901760
    %1981 = vmatmul.mubr.f32.gmra.mrb[0].mxu0 %v1980
    %v1982 = vpop.f32.mrb[0].mxu0
    %v1983 = vadd.f32 %v1838, %v1982
    %v1984 = vpop.f32.mrb[0].mxu0
    %v1985 = vadd.f32 %v1840, %v1984
    %1986 = vmatprep.mubr.f32.mxu0 0.0
    %v1987 = vand.u32 %v372, 4294901760
    %1988 = vmatmul.mubr.f32.gmra.mrb[0].mxu0 %v1987
    %v1989 = vpop.f32.mrb[0].mxu0
    %v1990 = vadd.f32 %v1849, %v1989
    %v1991 = vpop.f32.mrb[0].mxu0
    %v1992 = vadd.f32 %v1851, %v1991
    %1993 = vmatprep.mubr.f32.mxu0 0.0
    %v1994 = vand.u32 %v374, 4294901760
    %1995 = vmatmul.mubr.f32.gmra.mrb[0].mxu0 %v1994
    %v1996 = vpop.f32.mrb[0].mxu0
    %v1997 = vadd.f32 %v1860, %v1996
    %v1998 = vpop.f32.mrb[0].mxu0
    %v1999 = vadd.f32 %v1862, %v1998
    %2000 = vmatprep.mubr.f32.mxu0 0.0
    %v2001 = vand.u32 %v376, 4294901760
    %2002 = vmatmul.mubr.f32.gmra.mrb[0].mxu0 %v2001
    %v2003 = vpop.f32.mrb[0].mxu0
    %v2004 = vadd.f32 %v1871, %v2003
    %v2005 = vpop.f32.mrb[0].mxu0
    %v2006 = vadd.f32 %v1873, %v2005
    %2007 = vdwg.mxu0
    %v2008 = vand.u32 %v326, 4294901760
    %v2009 = vsub.f32 %v326, %v2008
    %2010 = vmatprep.subr.mxu0 %v2009
    %v2011 = vand.u32 %v325, 4294901760
    %v2012 = vsub.f32 %v325, %v2011
    %2013 = vmatpush1.msra.mxu0 %v2012
    %v2014 = vand.u32 %v334, 4294901760
    %v2015 = vsub.f32 %v334, %v2014
    %2016 = vmatprep.subr.mxu0 %v2015
    %v2017 = vand.u32 %v333, 4294901760
    %v2018 = vsub.f32 %v333, %v2017
    %2019 = vmatpush1.msra.mxu0 %v2018
    %v2020 = vand.u32 %v342, 4294901760
    %v2021 = vsub.f32 %v342, %v2020
    %2022 = vmatprep.subr.mxu0 %v2021
    %v2023 = vand.u32 %v341, 4294901760
    %v2024 = vsub.f32 %v341, %v2023
    %2025 = vmatpush1.msra.mxu0 %v2024
    %v2026 = vand.u32 %v350, 4294901760
    %v2027 = vsub.f32 %v350, %v2026
    %2028 = vmatprep.subr.mxu0 %v2027
    %v2029 = vand.u32 %v349, 4294901760
    %v2030 = vsub.f32 %v349, %v2029
    %2031 = vmatpush1.msra.mxu0 %v2030
    %2032 = vmatprep.subr.mxu0 0.0
    %2033 = vmatpush1.msra.mxu0 0.0
    %2034 = vmatprep.subr.mxu0 0.0
    %2035 = vmatpush1.msra.mxu0 0.0
    %2036 = vmatprep.subr.mxu0 0.0
    %2037 = vmatpush1.msra.mxu0 0.0
    %2038 = vmatprep.subr.mxu0 0.0
    %2039 = vmatpush1.msra.mxu0 0.0
    %2040 = vmatprep.subr.mxu0 0.0
    %2041 = vmatpush1.msra.mxu0 0.0
    %2042 = vmatprep.subr.mxu0 0.0
    %2043 = vmatpush1.msra.mxu0 0.0
    %2044 = vmatprep.subr.mxu0 0.0
    %2045 = vmatpush1.msra.mxu0 0.0
    %2046 = vmatprep.subr.mxu0 0.0
    %2047 = vmatpush1.msra.mxu0 0.0
    %2048 = vmatprep.subr.mxu0 0.0
    %2049 = vmatpush1.msra.mxu0 0.0
    %2050 = vmatprep.subr.mxu0 0.0
    %2051 = vmatpush1.msra.mxu0 0.0
    %2052 = vmatprep.subr.mxu0 0.0
    %2053 = vmatpush1.msra.mxu0 0.0
    %2054 = vmatprep.subr.mxu0 0.0
    %2055 = vmatpush1.msra.mxu0 0.0
    %2056 = vmatprep.subr.mxu0 0.0
    %2057 = vmatpush1.msra.mxu0 0.0
    %2058 = vmatprep.subr.mxu0 0.0
    %2059 = vmatpush1.msra.mxu0 0.0
    %2060 = vmatprep.subr.mxu0 0.0
    %2061 = vmatpush1.msra.mxu0 0.0
    %2062 = vmatprep.subr.mxu0 0.0
    %2063 = vmatpush1.msra.mxu0 0.0
    %2064 = vmatprep.subr.mxu0 0.0
    %2065 = vmatpush1.msra.mxu0 0.0
    %2066 = vmatprep.subr.mxu0 0.0
    %2067 = vmatpush1.msra.mxu0 0.0
    %2068 = vmatprep.subr.mxu0 0.0
    %2069 = vmatpush1.msra.mxu0 0.0
    %2070 = vmatprep.subr.mxu0 0.0
    %2071 = vmatpush1.msra.mxu0 0.0
    %2072 = vmatprep.subr.mxu0 0.0
    %2073 = vmatpush1.msra.mxu0 0.0
    %2074 = vmatprep.subr.mxu0 0.0
    %2075 = vmatpush1.msra.mxu0 0.0
    %2076 = vmatprep.subr.mxu0 0.0
    %2077 = vmatpush1.msra.mxu0 0.0
    %2078 = vmatprep.subr.mxu0 0.0
    %2079 = vmatpush1.msra.mxu0 0.0
    %2080 = vmatprep.subr.mxu0 0.0
    %2081 = vmatpush1.msra.mxu0 0.0
    %2082 = vmatprep.subr.mxu0 0.0
    %2083 = vmatpush1.msra.mxu0 0.0
    %2084 = vmatprep.subr.mxu0 0.0
    %2085 = vmatpush1.msra.mxu0 0.0
    %2086 = vmatprep.subr.mxu0 0.0
    %2087 = vmatpush1.msra.mxu0 0.0
    %2088 = vmatprep.mubr.f32.mxu0 0.0
    %v2089 = vand.u32 %v370, 4294901760
    %v2090 = vsub.f32 %v370, %v2089
    %2091 = vmatmul.mubr.f32.gmra.mrb[0].mxu0 %v2090
    %v2092 = vpop.f32.mrb[0].mxu0
    %v2093 = vadd.f32 %v1983, %v2092
    %v2094 = vpop.f32.mrb[0].mxu0
    %v2095 = vadd.f32 %v1985, %v2094
    %2096 = vmatprep.mubr.f32.mxu0 0.0
    %v2097 = vand.u32 %v372, 4294901760
    %v2098 = vsub.f32 %v372, %v2097
    %2099 = vmatmul.mubr.f32.gmra.mrb[0].mxu0 %v2098
    %v2100 = vpop.f32.mrb[0].mxu0
    %v2101 = vadd.f32 %v1990, %v2100
    %v2102 = vpop.f32.mrb[0].mxu0
    %v2103 = vadd.f32 %v1992, %v2102
    %2104 = vmatprep.mubr.f32.mxu0 0.0
    %v2105 = vand.u32 %v374, 4294901760
    %v2106 = vsub.f32 %v374, %v2105
    %2107 = vmatmul.mubr.f32.gmra.mrb[0].mxu0 %v2106
    %v2108 = vpop.f32.mrb[0].mxu0
    %v2109 = vadd.f32 %v1997, %v2108
    %v2110 = vpop.f32.mrb[0].mxu0
    %v2111 = vadd.f32 %v1999, %v2110
    %2112 = vmatprep.mubr.f32.mxu0 0.0
    %v2113 = vand.u32 %v376, 4294901760
    %v2114 = vsub.f32 %v376, %v2113
    %2115 = vmatmul.mubr.f32.gmra.mrb[0].mxu0 %v2114
    %v2116 = vpop.f32.mrb[0].mxu0
    %v2117 = vadd.f32 %v2004, %v2116
    %v2118 = vpop.f32.mrb[0].mxu0
    %v2119 = vadd.f32 %v2006, %v2118
    %2120 = vdwg.mxu0
    %v2121 = vand.u32 %v326, 4294901760
    %2122 = vmatprep.subr.mxu0 %v2121
    %v2123 = vand.u32 %v325, 4294901760
    %2124 = vmatpush1.msra.mxu0 %v2123
    %v2125 = vand.u32 %v334, 4294901760
    %2126 = vmatprep.subr.mxu0 %v2125
    %v2127 = vand.u32 %v333, 4294901760
    %2128 = vmatpush1.msra.mxu0 %v2127
    %v2129 = vand.u32 %v342, 4294901760
    %2130 = vmatprep.subr.mxu0 %v2129
    %v2131 = vand.u32 %v341, 4294901760
    %2132 = vmatpush1.msra.mxu0 %v2131
    %v2133 = vand.u32 %v350, 4294901760
    %2134 = vmatprep.subr.mxu0 %v2133
    %v2135 = vand.u32 %v349, 4294901760
    %2136 = vmatpush1.msra.mxu0 %v2135
    %2137 = vmatprep.subr.mxu0 0.0
    %2138 = vmatpush1.msra.mxu0 0.0
    %2139 = vmatprep.subr.mxu0 0.0
    %2140 = vmatpush1.msra.mxu0 0.0
    %2141 = vmatprep.subr.mxu0 0.0
    %2142 = vmatpush1.msra.mxu0 0.0
    %2143 = vmatprep.subr.mxu0 0.0
    %2144 = vmatpush1.msra.mxu0 0.0
    %2145 = vmatprep.subr.mxu0 0.0
    %2146 = vmatpush1.msra.mxu0 0.0
    %2147 = vmatprep.subr.mxu0 0.0
    %2148 = vmatpush1.msra.mxu0 0.0
    %2149 = vmatprep.subr.mxu0 0.0
    %2150 = vmatpush1.msra.mxu0 0.0
    %2151 = vmatprep.subr.mxu0 0.0
    %2152 = vmatpush1.msra.mxu0 0.0
    %2153 = vmatprep.subr.mxu0 0.0
    %2154 = vmatpush1.msra.mxu0 0.0
    %2155 = vmatprep.subr.mxu0 0.0
    %2156 = vmatpush1.msra.mxu0 0.0
    %2157 = vmatprep.subr.mxu0 0.0
    %2158 = vmatpush1.msra.mxu0 0.0
    %2159 = vmatprep.subr.mxu0 0.0
    %2160 = vmatpush1.msra.mxu0 0.0
    %2161 = vmatprep.subr.mxu0 0.0
    %2162 = vmatpush1.msra.mxu0 0.0
    %2163 = vmatprep.subr.mxu0 0.0
    %2164 = vmatpush1.msra.mxu0 0.0
    %2165 = vmatprep.subr.mxu0 0.0
    %2166 = vmatpush1.msra.mxu0 0.0
    %2167 = vmatprep.subr.mxu0 0.0
    %2168 = vmatpush1.msra.mxu0 0.0
    %2169 = vmatprep.subr.mxu0 0.0
    %2170 = vmatpush1.msra.mxu0 0.0
    %2171 = vmatprep.subr.mxu0 0.0
    %2172 = vmatpush1.msra.mxu0 0.0
    %2173 = vmatprep.subr.mxu0 0.0
    %2174 = vmatpush1.msra.mxu0 0.0
    %2175 = vmatprep.subr.mxu0 0.0
    %2176 = vmatpush1.msra.mxu0 0.0
    %2177 = vmatprep.subr.mxu0 0.0
    %2178 = vmatpush1.msra.mxu0 0.0
    %2179 = vmatprep.subr.mxu0 0.0
    %2180 = vmatpush1.msra.mxu0 0.0
    %2181 = vmatprep.subr.mxu0 0.0
    %2182 = vmatpush1.msra.mxu0 0.0
    %2183 = vmatprep.subr.mxu0 0.0
    %2184 = vmatpush1.msra.mxu0 0.0
    %2185 = vmatprep.subr.mxu0 0.0
    %2186 = vmatpush1.msra.mxu0 0.0
    %2187 = vmatprep.subr.mxu0 0.0
    %2188 = vmatpush1.msra.mxu0 0.0
    %2189 = vmatprep.subr.mxu0 0.0
    %2190 = vmatpush1.msra.mxu0 0.0
    %2191 = vmatprep.subr.mxu0 0.0
    %2192 = vmatpush1.msra.mxu0 0.0
    %2193 = vmatprep.mubr.f32.mxu0 0.0
    %v2194 = vand.u32 %v370, 4294901760
    %v2195 = vsub.f32 %v370, %v2194
    %v2196 = vand.u32 %v2195, 4294901760
    %2197 = vmatmul.mubr.f32.gmra.mrb[0].mxu0 %v2196
    %v2198 = vpop.f32.mrb[0].mxu0
    %v2199 = vadd.f32 %v2093, %v2198
    %v2200 = vpop.f32.mrb[0].mxu0
    %v2201 = vadd.f32 %v2095, %v2200
    %2202 = vmatprep.mubr.f32.mxu0 0.0
    %v2203 = vand.u32 %v372, 4294901760
    %v2204 = vsub.f32 %v372, %v2203
    %v2205 = vand.u32 %v2204, 4294901760
    %2206 = vmatmul.mubr.f32.gmra.mrb[0].mxu0 %v2205
    %v2207 = vpop.f32.mrb[0].mxu0
    %v2208 = vadd.f32 %v2101, %v2207
    %v2209 = vpop.f32.mrb[0].mxu0
    %v2210 = vadd.f32 %v2103, %v2209
    %2211 = vmatprep.mubr.f32.mxu0 0.0
    %v2212 = vand.u32 %v374, 4294901760
    %v2213 = vsub.f32 %v374, %v2212
    %v2214 = vand.u32 %v2213, 4294901760
    %2215 = vmatmul.mubr.f32.gmra.mrb[0].mxu0 %v2214
    %v2216 = vpop.f32.mrb[0].mxu0
    %v2217 = vadd.f32 %v2109, %v2216
    %v2218 = vpop.f32.mrb[0].mxu0
    %v2219 = vadd.f32 %v2111, %v2218
    %2220 = vmatprep.mubr.f32.mxu0 0.0
    %v2221 = vand.u32 %v376, 4294901760
    %v2222 = vsub.f32 %v376, %v2221
    %v2223 = vand.u32 %v2222, 4294901760
    %2224 = vmatmul.mubr.f32.gmra.mrb[0].mxu0 %v2223
    %v2225 = vpop.f32.mrb[0].mxu0
    %v2226 = vadd.f32 %v2117, %v2225
    %v2227 = vpop.f32.mrb[0].mxu0
    %v2228 = vadd.f32 %v2119, %v2227
    %2229 = vdwg.mxu0
    %v2230 = vand.u32 %v326, 4294901760
    %v2231 = vsub.f32 %v326, %v2230
    %v2232 = vand.u32 %v2231, 4294901760
    %2233 = vmatprep.subr.mxu0 %v2232
    %v2234 = vand.u32 %v325, 4294901760
    %v2235 = vsub.f32 %v325, %v2234
    %v2236 = vand.u32 %v2235, 4294901760
    %2237 = vmatpush1.msra.mxu0 %v2236
    %v2238 = vand.u32 %v334, 4294901760
    %v2239 = vsub.f32 %v334, %v2238
    %v2240 = vand.u32 %v2239, 4294901760
    %2241 = vmatprep.subr.mxu0 %v2240
    %v2242 = vand.u32 %v333, 4294901760
    %v2243 = vsub.f32 %v333, %v2242
    %v2244 = vand.u32 %v2243, 4294901760
    %2245 = vmatpush1.msra.mxu0 %v2244
    %v2246 = vand.u32 %v342, 4294901760
    %v2247 = vsub.f32 %v342, %v2246
    %v2248 = vand.u32 %v2247, 4294901760
    %2249 = vmatprep.subr.mxu0 %v2248
    %v2250 = vand.u32 %v341, 4294901760
    %v2251 = vsub.f32 %v341, %v2250
    %v2252 = vand.u32 %v2251, 4294901760
    %2253 = vmatpush1.msra.mxu0 %v2252
    %v2254 = vand.u32 %v350, 4294901760
    %v2255 = vsub.f32 %v350, %v2254
    %v2256 = vand.u32 %v2255, 4294901760
    %2257 = vmatprep.subr.mxu0 %v2256
    %v2258 = vand.u32 %v349, 4294901760
    %v2259 = vsub.f32 %v349, %v2258
    %v2260 = vand.u32 %v2259, 4294901760
    %2261 = vmatpush1.msra.mxu0 %v2260
    %2262 = vmatprep.subr.mxu0 0.0
    %2263 = vmatpush1.msra.mxu0 0.0
    %2264 = vmatprep.subr.mxu0 0.0
    %2265 = vmatpush1.msra.mxu0 0.0
    %2266 = vmatprep.subr.mxu0 0.0
    %2267 = vmatpush1.msra.mxu0 0.0
    %2268 = vmatprep.subr.mxu0 0.0
    %2269 = vmatpush1.msra.mxu0 0.0
    %2270 = vmatprep.subr.mxu0 0.0
    %2271 = vmatpush1.msra.mxu0 0.0
    %2272 = vmatprep.subr.mxu0 0.0
    %2273 = vmatpush1.msra.mxu0 0.0
    %2274 = vmatprep.subr.mxu0 0.0
    %2275 = vmatpush1.msra.mxu0 0.0
    %2276 = vmatprep.subr.mxu0 0.0
    %2277 = vmatpush1.msra.mxu0 0.0
    %2278 = vmatprep.subr.mxu0 0.0
    %2279 = vmatpush1.msra.mxu0 0.0
    %2280 = vmatprep.subr.mxu0 0.0
    %2281 = vmatpush1.msra.mxu0 0.0
    %2282 = vmatprep.subr.mxu0 0.0
    %2283 = vmatpush1.msra.mxu0 0.0
    %2284 = vmatprep.subr.mxu0 0.0
    %2285 = vmatpush1.msra.mxu0 0.0
    %2286 = vmatprep.subr.mxu0 0.0
    %2287 = vmatpush1.msra.mxu0 0.0
    %2288 = vmatprep.subr.mxu0 0.0
    %2289 = vmatpush1.msra.mxu0 0.0
    %2290 = vmatprep.subr.mxu0 0.0
    %2291 = vmatpush1.msra.mxu0 0.0
    %2292 = vmatprep.subr.mxu0 0.0
    %2293 = vmatpush1.msra.mxu0 0.0
    %2294 = vmatprep.subr.mxu0 0.0
    %2295 = vmatpush1.msra.mxu0 0.0
    %2296 = vmatprep.subr.mxu0 0.0
    %2297 = vmatpush1.msra.mxu0 0.0
    %2298 = vmatprep.subr.mxu0 0.0
    %2299 = vmatpush1.msra.mxu0 0.0
    %2300 = vmatprep.subr.mxu0 0.0
    %2301 = vmatpush1.msra.mxu0 0.0
    %2302 = vmatprep.subr.mxu0 0.0
    %2303 = vmatpush1.msra.mxu0 0.0
    %2304 = vmatprep.subr.mxu0 0.0
    %2305 = vmatpush1.msra.mxu0 0.0
    %2306 = vmatprep.subr.mxu0 0.0
    %2307 = vmatpush1.msra.mxu0 0.0
    %2308 = vmatprep.subr.mxu0 0.0
    %2309 = vmatpush1.msra.mxu0 0.0
    %2310 = vmatprep.subr.mxu0 0.0
    %2311 = vmatpush1.msra.mxu0 0.0
    %2312 = vmatprep.subr.mxu0 0.0
    %2313 = vmatpush1.msra.mxu0 0.0
    %2314 = vmatprep.subr.mxu0 0.0
    %2315 = vmatpush1.msra.mxu0 0.0
    %2316 = vmatprep.subr.mxu0 0.0
    %2317 = vmatpush1.msra.mxu0 0.0
    %2318 = vmatprep.mubr.f32.mxu0 0.0
    %v2319 = vand.u32 %v370, 4294901760
    %2320 = vmatmul.mubr.f32.gmra.mrb[0].mxu0 %v2319
    %v2321 = vpop.f32.mrb[0].mxu0
    %v2322 = vadd.f32 %v2199, %v2321
    %v2323 = vpop.f32.mrb[0].mxu0
    %v2324 = vadd.f32 %v2201, %v2323
    %2325 = vmatprep.mubr.f32.mxu0 0.0
    %v2326 = vand.u32 %v372, 4294901760
    %2327 = vmatmul.mubr.f32.gmra.mrb[0].mxu0 %v2326
    %v2328 = vpop.f32.mrb[0].mxu0
    %v2329 = vadd.f32 %v2208, %v2328
    %v2330 = vpop.f32.mrb[0].mxu0
    %v2331 = vadd.f32 %v2210, %v2330
    %2332 = vmatprep.mubr.f32.mxu0 0.0
    %v2333 = vand.u32 %v374, 4294901760
    %2334 = vmatmul.mubr.f32.gmra.mrb[0].mxu0 %v2333
    %v2335 = vpop.f32.mrb[0].mxu0
    %v2336 = vadd.f32 %v2217, %v2335
    %v2337 = vpop.f32.mrb[0].mxu0
    %v2338 = vadd.f32 %v2219, %v2337
    %2339 = vmatprep.mubr.f32.mxu0 0.0
    %v2340 = vand.u32 %v376, 4294901760
    %2341 = vmatmul.mubr.f32.gmra.mrb[0].mxu0 %v2340
    %v2342 = vpop.f32.mrb[0].mxu0
    %v2343 = vadd.f32 %v2226, %v2342
    %v2344 = vpop.f32.mrb[0].mxu0
    %v2345 = vadd.f32 %v2228, %v2344
    %2346 = vdwg.mxu0
    %v2347 = vand.u32 %v326, 4294901760
    %2348 = vmatprep.subr.mxu0 %v2347
    %v2349 = vand.u32 %v325, 4294901760
    %2350 = vmatpush1.msra.mxu0 %v2349
    %v2351 = vand.u32 %v334, 4294901760
    %2352 = vmatprep.subr.mxu0 %v2351
    %v2353 = vand.u32 %v333, 4294901760
    %2354 = vmatpush1.msra.mxu0 %v2353
    %v2355 = vand.u32 %v342, 4294901760
    %2356 = vmatprep.subr.mxu0 %v2355
    %v2357 = vand.u32 %v341, 4294901760
    %2358 = vmatpush1.msra.mxu0 %v2357
    %v2359 = vand.u32 %v350, 4294901760
    %2360 = vmatprep.subr.mxu0 %v2359
    %v2361 = vand.u32 %v349, 4294901760
    %2362 = vmatpush1.msra.mxu0 %v2361
    %2363 = vmatprep.subr.mxu0 0.0
    %2364 = vmatpush1.msra.mxu0 0.0
    %2365 = vmatprep.subr.mxu0 0.0
    %2366 = vmatpush1.msra.mxu0 0.0
    %2367 = vmatprep.subr.mxu0 0.0
    %2368 = vmatpush1.msra.mxu0 0.0
    %2369 = vmatprep.subr.mxu0 0.0
    %2370 = vmatpush1.msra.mxu0 0.0
    %2371 = vmatprep.subr.mxu0 0.0
    %2372 = vmatpush1.msra.mxu0 0.0
    %2373 = vmatprep.subr.mxu0 0.0
    %2374 = vmatpush1.msra.mxu0 0.0
    %2375 = vmatprep.subr.mxu0 0.0
    %2376 = vmatpush1.msra.mxu0 0.0
    %2377 = vmatprep.subr.mxu0 0.0
    %2378 = vmatpush1.msra.mxu0 0.0
    %2379 = vmatprep.subr.mxu0 0.0
    %2380 = vmatpush1.msra.mxu0 0.0
    %2381 = vmatprep.subr.mxu0 0.0
    %2382 = vmatpush1.msra.mxu0 0.0
    %2383 = vmatprep.subr.mxu0 0.0
    %2384 = vmatpush1.msra.mxu0 0.0
    %2385 = vmatprep.subr.mxu0 0.0
    %2386 = vmatpush1.msra.mxu0 0.0
    %2387 = vmatprep.subr.mxu0 0.0
    %2388 = vmatpush1.msra.mxu0 0.0
    %2389 = vmatprep.subr.mxu0 0.0
    %2390 = vmatpush1.msra.mxu0 0.0
    %2391 = vmatprep.subr.mxu0 0.0
    %2392 = vmatpush1.msra.mxu0 0.0
    %2393 = vmatprep.subr.mxu0 0.0
    %2394 = vmatpush1.msra.mxu0 0.0
    %2395 = vmatprep.subr.mxu0 0.0
    %2396 = vmatpush1.msra.mxu0 0.0
    %2397 = vmatprep.subr.mxu0 0.0
    %2398 = vmatpush1.msra.mxu0 0.0
    %2399 = vmatprep.subr.mxu0 0.0
    %2400 = vmatpush1.msra.mxu0 0.0
    %2401 = vmatprep.subr.mxu0 0.0
    %2402 = vmatpush1.msra.mxu0 0.0
    %2403 = vmatprep.subr.mxu0 0.0
    %2404 = vmatpush1.msra.mxu0 0.0
    %2405 = vmatprep.subr.mxu0 0.0
    %2406 = vmatpush1.msra.mxu0 0.0
    %2407 = vmatprep.subr.mxu0 0.0
    %2408 = vmatpush1.msra.mxu0 0.0
    %2409 = vmatprep.subr.mxu0 0.0
    %2410 = vmatpush1.msra.mxu0 0.0
    %2411 = vmatprep.subr.mxu0 0.0
    %2412 = vmatpush1.msra.mxu0 0.0
    %2413 = vmatprep.subr.mxu0 0.0
    %2414 = vmatpush1.msra.mxu0 0.0
    %2415 = vmatprep.subr.mxu0 0.0
    %2416 = vmatpush1.msra.mxu0 0.0
    %2417 = vmatprep.subr.mxu0 0.0
    %2418 = vmatpush1.msra.mxu0 0.0
    %2419 = vmatprep.mubr.f32.mxu0 0.0
    %v2420 = vand.u32 %v370, 4294901760
    %2421 = vmatmul.mubr.f32.gmra.mrb[0].mxu0 %v2420
    %v2422 = vpop.f32.mrb[0].mxu0
    %v2423 = vadd.f32 %v2322, %v2422
    %v2424 = vpop.f32.mrb[0].mxu0
    %v2425 = vadd.f32 %v2324, %v2424
    %2426 = vmatprep.mubr.f32.mxu0 0.0
    %v2427 = vand.u32 %v372, 4294901760
    %2428 = vmatmul.mubr.f32.gmra.mrb[0].mxu0 %v2427
    %v2429 = vpop.f32.mrb[0].mxu0
    %v2430 = vadd.f32 %v2329, %v2429
    %v2431 = vpop.f32.mrb[0].mxu0
    %v2432 = vadd.f32 %v2331, %v2431
    %2433 = vmatprep.mubr.f32.mxu0 0.0
    %v2434 = vand.u32 %v374, 4294901760
    %2435 = vmatmul.mubr.f32.gmra.mrb[0].mxu0 %v2434
    %v2436 = vpop.f32.mrb[0].mxu0
    %v2437 = vadd.f32 %v2336, %v2436
    %v2438 = vpop.f32.mrb[0].mxu0
    %v2439 = vadd.f32 %v2338, %v2438
    %2440 = vmatprep.mubr.f32.mxu0 0.0
    %v2441 = vand.u32 %v376, 4294901760
    %2442 = vmatmul.mubr.f32.gmra.mrb[0].mxu0 %v2441
    %v2443 = vpop.f32.mrb[0].mxu0
    %v2444 = vadd.f32 %v2343, %v2443
    %v2445 = vpop.f32.mrb[0].mxu0
    %v2446 = vadd.f32 %v2345, %v2445
    %2447 = vdwg.mxu0
    %v2448 = vand.u32 %v328, 4294901760
    %2449 = vmatprep.subr.mxu0 %v2448
    %v2450 = vand.u32 %v327, 4294901760
    %2451 = vmatpush1.msra.mxu0 %v2450
    %v2452 = vand.u32 %v336, 4294901760
    %2453 = vmatprep.subr.mxu0 %v2452
    %v2454 = vand.u32 %v335, 4294901760
    %2455 = vmatpush1.msra.mxu0 %v2454
    %v2456 = vand.u32 %v344, 4294901760
    %2457 = vmatprep.subr.mxu0 %v2456
    %v2458 = vand.u32 %v343, 4294901760
    %2459 = vmatpush1.msra.mxu0 %v2458
    %v2460 = vand.u32 %v352, 4294901760
    %2461 = vmatprep.subr.mxu0 %v2460
    %v2462 = vand.u32 %v351, 4294901760
    %2463 = vmatpush1.msra.mxu0 %v2462
    %2464 = vmatprep.subr.mxu0 0.0
    %2465 = vmatpush1.msra.mxu0 0.0
    %2466 = vmatprep.subr.mxu0 0.0
    %2467 = vmatpush1.msra.mxu0 0.0
    %2468 = vmatprep.subr.mxu0 0.0
    %2469 = vmatpush1.msra.mxu0 0.0
    %2470 = vmatprep.subr.mxu0 0.0
    %2471 = vmatpush1.msra.mxu0 0.0
    %2472 = vmatprep.subr.mxu0 0.0
    %2473 = vmatpush1.msra.mxu0 0.0
    %2474 = vmatprep.subr.mxu0 0.0
    %2475 = vmatpush1.msra.mxu0 0.0
    %2476 = vmatprep.subr.mxu0 0.0
    %2477 = vmatpush1.msra.mxu0 0.0
    %2478 = vmatprep.subr.mxu0 0.0
    %2479 = vmatpush1.msra.mxu0 0.0
    %2480 = vmatprep.subr.mxu0 0.0
    %2481 = vmatpush1.msra.mxu0 0.0
    %2482 = vmatprep.subr.mxu0 0.0
    %2483 = vmatpush1.msra.mxu0 0.0
    %2484 = vmatprep.subr.mxu0 0.0
    %2485 = vmatpush1.msra.mxu0 0.0
    %2486 = vmatprep.subr.mxu0 0.0
    %2487 = vmatpush1.msra.mxu0 0.0
    %2488 = vmatprep.subr.mxu0 0.0
    %2489 = vmatpush1.msra.mxu0 0.0
    %2490 = vmatprep.subr.mxu0 0.0
    %2491 = vmatpush1.msra.mxu0 0.0
    %2492 = vmatprep.subr.mxu0 0.0
    %2493 = vmatpush1.msra.mxu0 0.0
    %2494 = vmatprep.subr.mxu0 0.0
    %2495 = vmatpush1.msra.mxu0 0.0
    %2496 = vmatprep.subr.mxu0 0.0
    %2497 = vmatpush1.msra.mxu0 0.0
    %2498 = vmatprep.subr.mxu0 0.0
    %2499 = vmatpush1.msra.mxu0 0.0
    %2500 = vmatprep.subr.mxu0 0.0
    %2501 = vmatpush1.msra.mxu0 0.0
    %2502 = vmatprep.subr.mxu0 0.0
    %2503 = vmatpush1.msra.mxu0 0.0
    %2504 = vmatprep.subr.mxu0 0.0
    %2505 = vmatpush1.msra.mxu0 0.0
    %2506 = vmatprep.subr.mxu0 0.0
    %2507 = vmatpush1.msra.mxu0 0.0
    %2508 = vmatprep.subr.mxu0 0.0
    %2509 = vmatpush1.msra.mxu0 0.0
    %2510 = vmatprep.subr.mxu0 0.0
    %2511 = vmatpush1.msra.mxu0 0.0
    %2512 = vmatprep.subr.mxu0 0.0
    %2513 = vmatpush1.msra.mxu0 0.0
    %2514 = vmatprep.subr.mxu0 0.0
    %2515 = vmatpush1.msra.mxu0 0.0
    %2516 = vmatprep.subr.mxu0 0.0
    %2517 = vmatpush1.msra.mxu0 0.0
    %2518 = vmatprep.subr.mxu0 0.0
    %2519 = vmatpush1.msra.mxu0 0.0
    %2520 = vmatprep.mubr.f32.mxu0 0.0
    %v2521 = vand.u32 %v370, 4294901760
    %v2522 = vsub.f32 %v370, %v2521
    %v2523 = vand.u32 %v2522, 4294901760
    %v2524 = vsub.f32 %v2522, %v2523
    %v2525 = vand.u32 %v2524, 4294901760
    %2526 = vmatmul.mubr.f32.gmra.mrb[0].mxu0 %v2525
    %v2527 = vpop.f32.mrb[0].mxu0
    %v2528 = vadd.f32 %v355, %v2527
    %v2529 = vpop.f32.mrb[0].mxu0
    %v2530 = vadd.f32 %v355, %v2529
    %2531 = vmatprep.mubr.f32.mxu0 0.0
    %v2532 = vand.u32 %v372, 4294901760
    %v2533 = vsub.f32 %v372, %v2532
    %v2534 = vand.u32 %v2533, 4294901760
    %v2535 = vsub.f32 %v2533, %v2534
    %v2536 = vand.u32 %v2535, 4294901760
    %2537 = vmatmul.mubr.f32.gmra.mrb[0].mxu0 %v2536
    %v2538 = vpop.f32.mrb[0].mxu0
    %v2539 = vadd.f32 %v359, %v2538
    %v2540 = vpop.f32.mrb[0].mxu0
    %v2541 = vadd.f32 %v359, %v2540
    %2542 = vmatprep.mubr.f32.mxu0 0.0
    %v2543 = vand.u32 %v374, 4294901760
    %v2544 = vsub.f32 %v374, %v2543
    %v2545 = vand.u32 %v2544, 4294901760
    %v2546 = vsub.f32 %v2544, %v2545
    %v2547 = vand.u32 %v2546, 4294901760
    %2548 = vmatmul.mubr.f32.gmra.mrb[0].mxu0 %v2547
    %v2549 = vpop.f32.mrb[0].mxu0
    %v2550 = vadd.f32 %v363, %v2549
    %v2551 = vpop.f32.mrb[0].mxu0
    %v2552 = vadd.f32 %v363, %v2551
    %2553 = vmatprep.mubr.f32.mxu0 0.0
    %v2554 = vand.u32 %v376, 4294901760
    %v2555 = vsub.f32 %v376, %v2554
    %v2556 = vand.u32 %v2555, 4294901760
    %v2557 = vsub.f32 %v2555, %v2556
    %v2558 = vand.u32 %v2557, 4294901760
    %2559 = vmatmul.mubr.f32.gmra.mrb[0].mxu0 %v2558
    %v2560 = vpop.f32.mrb[0].mxu0
    %v2561 = vadd.f32 %v367, %v2560
    %v2562 = vpop.f32.mrb[0].mxu0
    %v2563 = vadd.f32 %v367, %v2562
    %2564 = vdwg.mxu0
    %v2565 = vand.u32 %v328, 4294901760
    %v2566 = vsub.f32 %v328, %v2565
    %v2567 = vand.u32 %v2566, 4294901760
    %v2568 = vsub.f32 %v2566, %v2567
    %v2569 = vand.u32 %v2568, 4294901760
    %2570 = vmatprep.subr.mxu0 %v2569
    %v2571 = vand.u32 %v327, 4294901760
    %v2572 = vsub.f32 %v327, %v2571
    %v2573 = vand.u32 %v2572, 4294901760
    %v2574 = vsub.f32 %v2572, %v2573
    %v2575 = vand.u32 %v2574, 4294901760
    %2576 = vmatpush1.msra.mxu0 %v2575
    %v2577 = vand.u32 %v336, 4294901760
    %v2578 = vsub.f32 %v336, %v2577
    %v2579 = vand.u32 %v2578, 4294901760
    %v2580 = vsub.f32 %v2578, %v2579
    %v2581 = vand.u32 %v2580, 4294901760
    %2582 = vmatprep.subr.mxu0 %v2581
    %v2583 = vand.u32 %v335, 4294901760
    %v2584 = vsub.f32 %v335, %v2583
    %v2585 = vand.u32 %v2584, 4294901760
    %v2586 = vsub.f32 %v2584, %v2585
    %v2587 = vand.u32 %v2586, 4294901760
    %2588 = vmatpush1.msra.mxu0 %v2587
    %v2589 = vand.u32 %v344, 4294901760
    %v2590 = vsub.f32 %v344, %v2589
    %v2591 = vand.u32 %v2590, 4294901760
    %v2592 = vsub.f32 %v2590, %v2591
    %v2593 = vand.u32 %v2592, 4294901760
    %2594 = vmatprep.subr.mxu0 %v2593
    %v2595 = vand.u32 %v343, 4294901760
    %v2596 = vsub.f32 %v343, %v2595
    %v2597 = vand.u32 %v2596, 4294901760
    %v2598 = vsub.f32 %v2596, %v2597
    %v2599 = vand.u32 %v2598, 4294901760
    %2600 = vmatpush1.msra.mxu0 %v2599
    %v2601 = vand.u32 %v352, 4294901760
    %v2602 = vsub.f32 %v352, %v2601
    %v2603 = vand.u32 %v2602, 4294901760
    %v2604 = vsub.f32 %v2602, %v2603
    %v2605 = vand.u32 %v2604, 4294901760
    %2606 = vmatprep.subr.mxu0 %v2605
    %v2607 = vand.u32 %v351, 4294901760
    %v2608 = vsub.f32 %v351, %v2607
    %v2609 = vand.u32 %v2608, 4294901760
    %v2610 = vsub.f32 %v2608, %v2609
    %v2611 = vand.u32 %v2610, 4294901760
    %2612 = vmatpush1.msra.mxu0 %v2611
    %2613 = vmatprep.subr.mxu0 0.0
    %2614 = vmatpush1.msra.mxu0 0.0
    %2615 = vmatprep.subr.mxu0 0.0
    %2616 = vmatpush1.msra.mxu0 0.0
    %2617 = vmatprep.subr.mxu0 0.0
    %2618 = vmatpush1.msra.mxu0 0.0
    %2619 = vmatprep.subr.mxu0 0.0
    %2620 = vmatpush1.msra.mxu0 0.0
    %2621 = vmatprep.subr.mxu0 0.0
    %2622 = vmatpush1.msra.mxu0 0.0
    %2623 = vmatprep.subr.mxu0 0.0
    %2624 = vmatpush1.msra.mxu0 0.0
    %2625 = vmatprep.subr.mxu0 0.0
    %2626 = vmatpush1.msra.mxu0 0.0
    %2627 = vmatprep.subr.mxu0 0.0
    %2628 = vmatpush1.msra.mxu0 0.0
    %2629 = vmatprep.subr.mxu0 0.0
    %2630 = vmatpush1.msra.mxu0 0.0
    %2631 = vmatprep.subr.mxu0 0.0
    %2632 = vmatpush1.msra.mxu0 0.0
    %2633 = vmatprep.subr.mxu0 0.0
    %2634 = vmatpush1.msra.mxu0 0.0
    %2635 = vmatprep.subr.mxu0 0.0
    %2636 = vmatpush1.msra.mxu0 0.0
    %2637 = vmatprep.subr.mxu0 0.0
    %2638 = vmatpush1.msra.mxu0 0.0
    %2639 = vmatprep.subr.mxu0 0.0
    %2640 = vmatpush1.msra.mxu0 0.0
    %2641 = vmatprep.subr.mxu0 0.0
    %2642 = vmatpush1.msra.mxu0 0.0
    %2643 = vmatprep.subr.mxu0 0.0
    %2644 = vmatpush1.msra.mxu0 0.0
    %2645 = vmatprep.subr.mxu0 0.0
    %2646 = vmatpush1.msra.mxu0 0.0
    %2647 = vmatprep.subr.mxu0 0.0
    %2648 = vmatpush1.msra.mxu0 0.0
    %2649 = vmatprep.subr.mxu0 0.0
    %2650 = vmatpush1.msra.mxu0 0.0
    %2651 = vmatprep.subr.mxu0 0.0
    %2652 = vmatpush1.msra.mxu0 0.0
    %2653 = vmatprep.subr.mxu0 0.0
    %2654 = vmatpush1.msra.mxu0 0.0
    %2655 = vmatprep.subr.mxu0 0.0
    %2656 = vmatpush1.msra.mxu0 0.0
    %2657 = vmatprep.subr.mxu0 0.0
    %2658 = vmatpush1.msra.mxu0 0.0
    %2659 = vmatprep.subr.mxu0 0.0
    %2660 = vmatpush1.msra.mxu0 0.0
    %2661 = vmatprep.subr.mxu0 0.0
    %2662 = vmatpush1.msra.mxu0 0.0
    %2663 = vmatprep.subr.mxu0 0.0
    %2664 = vmatpush1.msra.mxu0 0.0
    %2665 = vmatprep.subr.mxu0 0.0
    %2666 = vmatpush1.msra.mxu0 0.0
    %2667 = vmatprep.subr.mxu0 0.0
    %2668 = vmatpush1.msra.mxu0 0.0
    %2669 = vmatprep.mubr.f32.mxu0 0.0
    %v2670 = vand.u32 %v370, 4294901760
    %2671 = vmatmul.mubr.f32.gmra.mrb[0].mxu0 %v2670
    %v2672 = vpop.f32.mrb[0].mxu0
    %v2673 = vadd.f32 %v2528, %v2672
    %v2674 = vpop.f32.mrb[0].mxu0
    %v2675 = vadd.f32 %v2530, %v2674
    %2676 = vmatprep.mubr.f32.mxu0 0.0
    %v2677 = vand.u32 %v372, 4294901760
    %2678 = vmatmul.mubr.f32.gmra.mrb[0].mxu0 %v2677
    %v2679 = vpop.f32.mrb[0].mxu0
    %v2680 = vadd.f32 %v2539, %v2679
    %v2681 = vpop.f32.mrb[0].mxu0
    %v2682 = vadd.f32 %v2541, %v2681
    %2683 = vmatprep.mubr.f32.mxu0 0.0
    %v2684 = vand.u32 %v374, 4294901760
    %2685 = vmatmul.mubr.f32.gmra.mrb[0].mxu0 %v2684
    %v2686 = vpop.f32.mrb[0].mxu0
    %v2687 = vadd.f32 %v2550, %v2686
    %v2688 = vpop.f32.mrb[0].mxu0
    %v2689 = vadd.f32 %v2552, %v2688
    %2690 = vmatprep.mubr.f32.mxu0 0.0
    %v2691 = vand.u32 %v376, 4294901760
    %2692 = vmatmul.mubr.f32.gmra.mrb[0].mxu0 %v2691
    %v2693 = vpop.f32.mrb[0].mxu0
    %v2694 = vadd.f32 %v2561, %v2693
    %v2695 = vpop.f32.mrb[0].mxu0
    %v2696 = vadd.f32 %v2563, %v2695
    %2697 = vdwg.mxu0
    %v2698 = vand.u32 %v328, 4294901760
    %v2699 = vsub.f32 %v328, %v2698
    %2700 = vmatprep.subr.mxu0 %v2699
    %v2701 = vand.u32 %v327, 4294901760
    %v2702 = vsub.f32 %v327, %v2701
    %2703 = vmatpush1.msra.mxu0 %v2702
    %v2704 = vand.u32 %v336, 4294901760
    %v2705 = vsub.f32 %v336, %v2704
    %2706 = vmatprep.subr.mxu0 %v2705
    %v2707 = vand.u32 %v335, 4294901760
    %v2708 = vsub.f32 %v335, %v2707
    %2709 = vmatpush1.msra.mxu0 %v2708
    %v2710 = vand.u32 %v344, 4294901760
    %v2711 = vsub.f32 %v344, %v2710
    %2712 = vmatprep.subr.mxu0 %v2711
    %v2713 = vand.u32 %v343, 4294901760
    %v2714 = vsub.f32 %v343, %v2713
    %2715 = vmatpush1.msra.mxu0 %v2714
    %v2716 = vand.u32 %v352, 4294901760
    %v2717 = vsub.f32 %v352, %v2716
    %2718 = vmatprep.subr.mxu0 %v2717
    %v2719 = vand.u32 %v351, 4294901760
    %v2720 = vsub.f32 %v351, %v2719
    %2721 = vmatpush1.msra.mxu0 %v2720
    %2722 = vmatprep.subr.mxu0 0.0
    %2723 = vmatpush1.msra.mxu0 0.0
    %2724 = vmatprep.subr.mxu0 0.0
    %2725 = vmatpush1.msra.mxu0 0.0
    %2726 = vmatprep.subr.mxu0 0.0
    %2727 = vmatpush1.msra.mxu0 0.0
    %2728 = vmatprep.subr.mxu0 0.0
    %2729 = vmatpush1.msra.mxu0 0.0
    %2730 = vmatprep.subr.mxu0 0.0
    %2731 = vmatpush1.msra.mxu0 0.0
    %2732 = vmatprep.subr.mxu0 0.0
    %2733 = vmatpush1.msra.mxu0 0.0
    %2734 = vmatprep.subr.mxu0 0.0
    %2735 = vmatpush1.msra.mxu0 0.0
    %2736 = vmatprep.subr.mxu0 0.0
    %2737 = vmatpush1.msra.mxu0 0.0
    %2738 = vmatprep.subr.mxu0 0.0
    %2739 = vmatpush1.msra.mxu0 0.0
    %2740 = vmatprep.subr.mxu0 0.0
    %2741 = vmatpush1.msra.mxu0 0.0
    %2742 = vmatprep.subr.mxu0 0.0
    %2743 = vmatpush1.msra.mxu0 0.0
    %2744 = vmatprep.subr.mxu0 0.0
    %2745 = vmatpush1.msra.mxu0 0.0
    %2746 = vmatprep.subr.mxu0 0.0
    %2747 = vmatpush1.msra.mxu0 0.0
    %2748 = vmatprep.subr.mxu0 0.0
    %2749 = vmatpush1.msra.mxu0 0.0
    %2750 = vmatprep.subr.mxu0 0.0
    %2751 = vmatpush1.msra.mxu0 0.0
    %2752 = vmatprep.subr.mxu0 0.0
    %2753 = vmatpush1.msra.mxu0 0.0
    %2754 = vmatprep.subr.mxu0 0.0
    %2755 = vmatpush1.msra.mxu0 0.0
    %2756 = vmatprep.subr.mxu0 0.0
    %2757 = vmatpush1.msra.mxu0 0.0
    %2758 = vmatprep.subr.mxu0 0.0
    %2759 = vmatpush1.msra.mxu0 0.0
    %2760 = vmatprep.subr.mxu0 0.0
    %2761 = vmatpush1.msra.mxu0 0.0
    %2762 = vmatprep.subr.mxu0 0.0
    %2763 = vmatpush1.msra.mxu0 0.0
    %2764 = vmatprep.subr.mxu0 0.0
    %2765 = vmatpush1.msra.mxu0 0.0
    %2766 = vmatprep.subr.mxu0 0.0
    %2767 = vmatpush1.msra.mxu0 0.0
    %2768 = vmatprep.subr.mxu0 0.0
    %2769 = vmatpush1.msra.mxu0 0.0
    %2770 = vmatprep.subr.mxu0 0.0
    %2771 = vmatpush1.msra.mxu0 0.0
    %2772 = vmatprep.subr.mxu0 0.0
    %2773 = vmatpush1.msra.mxu0 0.0
    %2774 = vmatprep.subr.mxu0 0.0
    %2775 = vmatpush1.msra.mxu0 0.0
    %2776 = vmatprep.subr.mxu0 0.0
    %2777 = vmatpush1.msra.mxu0 0.0
    %2778 = vmatprep.mubr.f32.mxu0 0.0
    %v2779 = vand.u32 %v370, 4294901760
    %v2780 = vsub.f32 %v370, %v2779
    %2781 = vmatmul.mubr.f32.gmra.mrb[0].mxu0 %v2780
    %v2782 = vpop.f32.mrb[0].mxu0
    %v2783 = vadd.f32 %v2673, %v2782
    %v2784 = vpop.f32.mrb[0].mxu0
    %v2785 = vadd.f32 %v2675, %v2784
    %2786 = vmatprep.mubr.f32.mxu0 0.0
    %v2787 = vand.u32 %v372, 4294901760
    %v2788 = vsub.f32 %v372, %v2787
    %2789 = vmatmul.mubr.f32.gmra.mrb[0].mxu0 %v2788
    %v2790 = vpop.f32.mrb[0].mxu0
    %v2791 = vadd.f32 %v2680, %v2790
    %v2792 = vpop.f32.mrb[0].mxu0
    %v2793 = vadd.f32 %v2682, %v2792
    %2794 = vmatprep.mubr.f32.mxu0 0.0
    %v2795 = vand.u32 %v374, 4294901760
    %v2796 = vsub.f32 %v374, %v2795
    %2797 = vmatmul.mubr.f32.gmra.mrb[0].mxu0 %v2796
    %v2798 = vpop.f32.mrb[0].mxu0
    %v2799 = vadd.f32 %v2687, %v2798
    %v2800 = vpop.f32.mrb[0].mxu0
    %v2801 = vadd.f32 %v2689, %v2800
    %2802 = vmatprep.mubr.f32.mxu0 0.0
    %v2803 = vand.u32 %v376, 4294901760
    %v2804 = vsub.f32 %v376, %v2803
    %2805 = vmatmul.mubr.f32.gmra.mrb[0].mxu0 %v2804
    %v2806 = vpop.f32.mrb[0].mxu0
    %v2807 = vadd.f32 %v2694, %v2806
    %v2808 = vpop.f32.mrb[0].mxu0
    %v2809 = vadd.f32 %v2696, %v2808
    %2810 = vdwg.mxu0
    %v2811 = vand.u32 %v328, 4294901760
    %2812 = vmatprep.subr.mxu0 %v2811
    %v2813 = vand.u32 %v327, 4294901760
    %2814 = vmatpush1.msra.mxu0 %v2813
    %v2815 = vand.u32 %v336, 4294901760
    %2816 = vmatprep.subr.mxu0 %v2815
    %v2817 = vand.u32 %v335, 4294901760
    %2818 = vmatpush1.msra.mxu0 %v2817
    %v2819 = vand.u32 %v344, 4294901760
    %2820 = vmatprep.subr.mxu0 %v2819
    %v2821 = vand.u32 %v343, 4294901760
    %2822 = vmatpush1.msra.mxu0 %v2821
    %v2823 = vand.u32 %v352, 4294901760
    %2824 = vmatprep.subr.mxu0 %v2823
    %v2825 = vand.u32 %v351, 4294901760
    %2826 = vmatpush1.msra.mxu0 %v2825
    %2827 = vmatprep.subr.mxu0 0.0
    %2828 = vmatpush1.msra.mxu0 0.0
    %2829 = vmatprep.subr.mxu0 0.0
    %2830 = vmatpush1.msra.mxu0 0.0
    %2831 = vmatprep.subr.mxu0 0.0
    %2832 = vmatpush1.msra.mxu0 0.0
    %2833 = vmatprep.subr.mxu0 0.0
    %2834 = vmatpush1.msra.mxu0 0.0
    %2835 = vmatprep.subr.mxu0 0.0
    %2836 = vmatpush1.msra.mxu0 0.0
    %2837 = vmatprep.subr.mxu0 0.0
    %2838 = vmatpush1.msra.mxu0 0.0
    %2839 = vmatprep.subr.mxu0 0.0
    %2840 = vmatpush1.msra.mxu0 0.0
    %2841 = vmatprep.subr.mxu0 0.0
    %2842 = vmatpush1.msra.mxu0 0.0
    %2843 = vmatprep.subr.mxu0 0.0
    %2844 = vmatpush1.msra.mxu0 0.0
    %2845 = vmatprep.subr.mxu0 0.0
    %2846 = vmatpush1.msra.mxu0 0.0
    %2847 = vmatprep.subr.mxu0 0.0
    %2848 = vmatpush1.msra.mxu0 0.0
    %2849 = vmatprep.subr.mxu0 0.0
    %2850 = vmatpush1.msra.mxu0 0.0
    %2851 = vmatprep.subr.mxu0 0.0
    %2852 = vmatpush1.msra.mxu0 0.0
    %2853 = vmatprep.subr.mxu0 0.0
    %2854 = vmatpush1.msra.mxu0 0.0
    %2855 = vmatprep.subr.mxu0 0.0
    %2856 = vmatpush1.msra.mxu0 0.0
    %2857 = vmatprep.subr.mxu0 0.0
    %2858 = vmatpush1.msra.mxu0 0.0
    %2859 = vmatprep.subr.mxu0 0.0
    %2860 = vmatpush1.msra.mxu0 0.0
    %2861 = vmatprep.subr.mxu0 0.0
    %2862 = vmatpush1.msra.mxu0 0.0
    %2863 = vmatprep.subr.mxu0 0.0
    %2864 = vmatpush1.msra.mxu0 0.0
    %2865 = vmatprep.subr.mxu0 0.0
    %2866 = vmatpush1.msra.mxu0 0.0
    %2867 = vmatprep.subr.mxu0 0.0
    %2868 = vmatpush1.msra.mxu0 0.0
    %2869 = vmatprep.subr.mxu0 0.0
    %2870 = vmatpush1.msra.mxu0 0.0
    %2871 = vmatprep.subr.mxu0 0.0
    %2872 = vmatpush1.msra.mxu0 0.0
    %2873 = vmatprep.subr.mxu0 0.0
    %2874 = vmatpush1.msra.mxu0 0.0
    %2875 = vmatprep.subr.mxu0 0.0
    %2876 = vmatpush1.msra.mxu0 0.0
    %2877 = vmatprep.subr.mxu0 0.0
    %2878 = vmatpush1.msra.mxu0 0.0
    %2879 = vmatprep.subr.mxu0 0.0
    %2880 = vmatpush1.msra.mxu0 0.0
    %2881 = vmatprep.subr.mxu0 0.0
    %2882 = vmatpush1.msra.mxu0 0.0
    %2883 = vmatprep.mubr.f32.mxu0 0.0
    %v2884 = vand.u32 %v370, 4294901760
    %v2885 = vsub.f32 %v370, %v2884
    %v2886 = vand.u32 %v2885, 4294901760
    %2887 = vmatmul.mubr.f32.gmra.mrb[0].mxu0 %v2886
    %v2888 = vpop.f32.mrb[0].mxu0
    %v2889 = vadd.f32 %v2783, %v2888
    %v2890 = vpop.f32.mrb[0].mxu0
    %v2891 = vadd.f32 %v2785, %v2890
    %2892 = vmatprep.mubr.f32.mxu0 0.0
    %v2893 = vand.u32 %v372, 4294901760
    %v2894 = vsub.f32 %v372, %v2893
    %v2895 = vand.u32 %v2894, 4294901760
    %2896 = vmatmul.mubr.f32.gmra.mrb[0].mxu0 %v2895
    %v2897 = vpop.f32.mrb[0].mxu0
    %v2898 = vadd.f32 %v2791, %v2897
    %v2899 = vpop.f32.mrb[0].mxu0
    %v2900 = vadd.f32 %v2793, %v2899
    %2901 = vmatprep.mubr.f32.mxu0 0.0
    %v2902 = vand.u32 %v374, 4294901760
    %v2903 = vsub.f32 %v374, %v2902
    %v2904 = vand.u32 %v2903, 4294901760
    %2905 = vmatmul.mubr.f32.gmra.mrb[0].mxu0 %v2904
    %v2906 = vpop.f32.mrb[0].mxu0
    %v2907 = vadd.f32 %v2799, %v2906
    %v2908 = vpop.f32.mrb[0].mxu0
    %v2909 = vadd.f32 %v2801, %v2908
    %2910 = vmatprep.mubr.f32.mxu0 0.0
    %v2911 = vand.u32 %v376, 4294901760
    %v2912 = vsub.f32 %v376, %v2911
    %v2913 = vand.u32 %v2912, 4294901760
    %2914 = vmatmul.mubr.f32.gmra.mrb[0].mxu0 %v2913
    %v2915 = vpop.f32.mrb[0].mxu0
    %v2916 = vadd.f32 %v2807, %v2915
    %v2917 = vpop.f32.mrb[0].mxu0
    %v2918 = vadd.f32 %v2809, %v2917
    %2919 = vdwg.mxu0
    %v2920 = vand.u32 %v328, 4294901760
    %v2921 = vsub.f32 %v328, %v2920
    %v2922 = vand.u32 %v2921, 4294901760
    %2923 = vmatprep.subr.mxu0 %v2922
    %v2924 = vand.u32 %v327, 4294901760
    %v2925 = vsub.f32 %v327, %v2924
    %v2926 = vand.u32 %v2925, 4294901760
    %2927 = vmatpush1.msra.mxu0 %v2926
    %v2928 = vand.u32 %v336, 4294901760
    %v2929 = vsub.f32 %v336, %v2928
    %v2930 = vand.u32 %v2929, 4294901760
    %2931 = vmatprep.subr.mxu0 %v2930
    %v2932 = vand.u32 %v335, 4294901760
    %v2933 = vsub.f32 %v335, %v2932
    %v2934 = vand.u32 %v2933, 4294901760
    %2935 = vmatpush1.msra.mxu0 %v2934
    %v2936 = vand.u32 %v344, 4294901760
    %v2937 = vsub.f32 %v344, %v2936
    %v2938 = vand.u32 %v2937, 4294901760
    %2939 = vmatprep.subr.mxu0 %v2938
    %v2940 = vand.u32 %v343, 4294901760
    %v2941 = vsub.f32 %v343, %v2940
    %v2942 = vand.u32 %v2941, 4294901760
    %2943 = vmatpush1.msra.mxu0 %v2942
    %v2944 = vand.u32 %v352, 4294901760
    %v2945 = vsub.f32 %v352, %v2944
    %v2946 = vand.u32 %v2945, 4294901760
    %2947 = vmatprep.subr.mxu0 %v2946
    %v2948 = vand.u32 %v351, 4294901760
    %v2949 = vsub.f32 %v351, %v2948
    %v2950 = vand.u32 %v2949, 4294901760
    %2951 = vmatpush1.msra.mxu0 %v2950
    %2952 = vmatprep.subr.mxu0 0.0
    %2953 = vmatpush1.msra.mxu0 0.0
    %2954 = vmatprep.subr.mxu0 0.0
    %2955 = vmatpush1.msra.mxu0 0.0
    %2956 = vmatprep.subr.mxu0 0.0
    %2957 = vmatpush1.msra.mxu0 0.0
    %2958 = vmatprep.subr.mxu0 0.0
    %2959 = vmatpush1.msra.mxu0 0.0
    %2960 = vmatprep.subr.mxu0 0.0
    %2961 = vmatpush1.msra.mxu0 0.0
    %2962 = vmatprep.subr.mxu0 0.0
    %2963 = vmatpush1.msra.mxu0 0.0
    %2964 = vmatprep.subr.mxu0 0.0
    %2965 = vmatpush1.msra.mxu0 0.0
    %2966 = vmatprep.subr.mxu0 0.0
    %2967 = vmatpush1.msra.mxu0 0.0
    %2968 = vmatprep.subr.mxu0 0.0
    %2969 = vmatpush1.msra.mxu0 0.0
    %2970 = vmatprep.subr.mxu0 0.0
    %2971 = vmatpush1.msra.mxu0 0.0
    %2972 = vmatprep.subr.mxu0 0.0
    %2973 = vmatpush1.msra.mxu0 0.0
    %2974 = vmatprep.subr.mxu0 0.0
    %2975 = vmatpush1.msra.mxu0 0.0
    %2976 = vmatprep.subr.mxu0 0.0
    %2977 = vmatpush1.msra.mxu0 0.0
    %2978 = vmatprep.subr.mxu0 0.0
    %2979 = vmatpush1.msra.mxu0 0.0
    %2980 = vmatprep.subr.mxu0 0.0
    %2981 = vmatpush1.msra.mxu0 0.0
    %2982 = vmatprep.subr.mxu0 0.0
    %2983 = vmatpush1.msra.mxu0 0.0
    %2984 = vmatprep.subr.mxu0 0.0
    %2985 = vmatpush1.msra.mxu0 0.0
    %2986 = vmatprep.subr.mxu0 0.0
    %2987 = vmatpush1.msra.mxu0 0.0
    %2988 = vmatprep.subr.mxu0 0.0
    %2989 = vmatpush1.msra.mxu0 0.0
    %2990 = vmatprep.subr.mxu0 0.0
    %2991 = vmatpush1.msra.mxu0 0.0
    %2992 = vmatprep.subr.mxu0 0.0
    %2993 = vmatpush1.msra.mxu0 0.0
    %2994 = vmatprep.subr.mxu0 0.0
    %2995 = vmatpush1.msra.mxu0 0.0
    %2996 = vmatprep.subr.mxu0 0.0
    %2997 = vmatpush1.msra.mxu0 0.0
    %2998 = vmatprep.subr.mxu0 0.0
    %2999 = vmatpush1.msra.mxu0 0.0
    %3000 = vmatprep.subr.mxu0 0.0
    %3001 = vmatpush1.msra.mxu0 0.0
    %3002 = vmatprep.subr.mxu0 0.0
    %3003 = vmatpush1.msra.mxu0 0.0
    %3004 = vmatprep.subr.mxu0 0.0
    %3005 = vmatpush1.msra.mxu0 0.0
    %3006 = vmatprep.subr.mxu0 0.0
    %3007 = vmatpush1.msra.mxu0 0.0
    %3008 = vmatprep.mubr.f32.mxu0 0.0
    %v3009 = vand.u32 %v370, 4294901760
    %3010 = vmatmul.mubr.f32.gmra.mrb[0].mxu0 %v3009
    %v3011 = vpop.f32.mrb[0].mxu0
    %v3012 = vadd.f32 %v2889, %v3011
    %v3013 = vpop.f32.mrb[0].mxu0
    %v3014 = vadd.f32 %v2891, %v3013
    %3015 = vmatprep.mubr.f32.mxu0 0.0
    %v3016 = vand.u32 %v372, 4294901760
    %3017 = vmatmul.mubr.f32.gmra.mrb[0].mxu0 %v3016
    %v3018 = vpop.f32.mrb[0].mxu0
    %v3019 = vadd.f32 %v2898, %v3018
    %v3020 = vpop.f32.mrb[0].mxu0
    %v3021 = vadd.f32 %v2900, %v3020
    %3022 = vmatprep.mubr.f32.mxu0 0.0
    %v3023 = vand.u32 %v374, 4294901760
    %3024 = vmatmul.mubr.f32.gmra.mrb[0].mxu0 %v3023
    %v3025 = vpop.f32.mrb[0].mxu0
    %v3026 = vadd.f32 %v2907, %v3025
    %v3027 = vpop.f32.mrb[0].mxu0
    %v3028 = vadd.f32 %v2909, %v3027
    %3029 = vmatprep.mubr.f32.mxu0 0.0
    %v3030 = vand.u32 %v376, 4294901760
    %3031 = vmatmul.mubr.f32.gmra.mrb[0].mxu0 %v3030
    %v3032 = vpop.f32.mrb[0].mxu0
    %v3033 = vadd.f32 %v2916, %v3032
    %v3034 = vpop.f32.mrb[0].mxu0
    %v3035 = vadd.f32 %v2918, %v3034
    %3036 = vdwg.mxu0
    %v3037 = vand.u32 %v328, 4294901760
    %3038 = vmatprep.subr.mxu0 %v3037
    %v3039 = vand.u32 %v327, 4294901760
    %3040 = vmatpush1.msra.mxu0 %v3039
    %v3041 = vand.u32 %v336, 4294901760
    %3042 = vmatprep.subr.mxu0 %v3041
    %v3043 = vand.u32 %v335, 4294901760
    %3044 = vmatpush1.msra.mxu0 %v3043
    %v3045 = vand.u32 %v344, 4294901760
    %3046 = vmatprep.subr.mxu0 %v3045
    %v3047 = vand.u32 %v343, 4294901760
    %3048 = vmatpush1.msra.mxu0 %v3047
    %v3049 = vand.u32 %v352, 4294901760
    %3050 = vmatprep.subr.mxu0 %v3049
    %v3051 = vand.u32 %v351, 4294901760
    %3052 = vmatpush1.msra.mxu0 %v3051
    %3053 = vmatprep.subr.mxu0 0.0
    %3054 = vmatpush1.msra.mxu0 0.0
    %3055 = vmatprep.subr.mxu0 0.0
    %3056 = vmatpush1.msra.mxu0 0.0
    %3057 = vmatprep.subr.mxu0 0.0
    %3058 = vmatpush1.msra.mxu0 0.0
    %3059 = vmatprep.subr.mxu0 0.0
    %3060 = vmatpush1.msra.mxu0 0.0
    %3061 = vmatprep.subr.mxu0 0.0
    %3062 = vmatpush1.msra.mxu0 0.0
    %3063 = vmatprep.subr.mxu0 0.0
    %3064 = vmatpush1.msra.mxu0 0.0
    %3065 = vmatprep.subr.mxu0 0.0
    %3066 = vmatpush1.msra.mxu0 0.0
    %3067 = vmatprep.subr.mxu0 0.0
    %3068 = vmatpush1.msra.mxu0 0.0
    %3069 = vmatprep.subr.mxu0 0.0
    %3070 = vmatpush1.msra.mxu0 0.0
    %3071 = vmatprep.subr.mxu0 0.0
    %3072 = vmatpush1.msra.mxu0 0.0
    %3073 = vmatprep.subr.mxu0 0.0
    %3074 = vmatpush1.msra.mxu0 0.0
    %3075 = vmatprep.subr.mxu0 0.0
    %3076 = vmatpush1.msra.mxu0 0.0
    %3077 = vmatprep.subr.mxu0 0.0
    %3078 = vmatpush1.msra.mxu0 0.0
    %3079 = vmatprep.subr.mxu0 0.0
    %3080 = vmatpush1.msra.mxu0 0.0
    %3081 = vmatprep.subr.mxu0 0.0
    %3082 = vmatpush1.msra.mxu0 0.0
    %3083 = vmatprep.subr.mxu0 0.0
    %3084 = vmatpush1.msra.mxu0 0.0
    %3085 = vmatprep.subr.mxu0 0.0
    %3086 = vmatpush1.msra.mxu0 0.0
    %3087 = vmatprep.subr.mxu0 0.0
    %3088 = vmatpush1.msra.mxu0 0.0
    %3089 = vmatprep.subr.mxu0 0.0
    %3090 = vmatpush1.msra.mxu0 0.0
    %3091 = vmatprep.subr.mxu0 0.0
    %3092 = vmatpush1.msra.mxu0 0.0
    %3093 = vmatprep.subr.mxu0 0.0
    %3094 = vmatpush1.msra.mxu0 0.0
    %3095 = vmatprep.subr.mxu0 0.0
    %3096 = vmatpush1.msra.mxu0 0.0
    %3097 = vmatprep.subr.mxu0 0.0
    %3098 = vmatpush1.msra.mxu0 0.0
    %3099 = vmatprep.subr.mxu0 0.0
    %3100 = vmatpush1.msra.mxu0 0.0
    %3101 = vmatprep.subr.mxu0 0.0
    %3102 = vmatpush1.msra.mxu0 0.0
    %3103 = vmatprep.subr.mxu0 0.0
    %3104 = vmatpush1.msra.mxu0 0.0
    %3105 = vmatprep.subr.mxu0 0.0
    %3106 = vmatpush1.msra.mxu0 0.0
    %3107 = vmatprep.subr.mxu0 0.0
    %3108 = vmatpush1.msra.mxu0 0.0
    %3109 = vmatprep.mubr.f32.mxu0 0.0
    %v3110 = vand.u32 %v370, 4294901760
    %3111 = vmatmul.mubr.f32.gmra.mrb[0].mxu0 %v3110
    %v3112 = vpop.f32.mrb[0].mxu0
    %v3113 = vadd.f32 %v3012, %v3112
    %v3114 = vpop.f32.mrb[0].mxu0
    %v3115 = vadd.f32 %v3014, %v3114
    %3116 = vmatprep.mubr.f32.mxu0 0.0
    %v3117 = vand.u32 %v372, 4294901760
    %3118 = vmatmul.mubr.f32.gmra.mrb[0].mxu0 %v3117
    %v3119 = vpop.f32.mrb[0].mxu0
    %v3120 = vadd.f32 %v3019, %v3119
    %v3121 = vpop.f32.mrb[0].mxu0
    %v3122 = vadd.f32 %v3021, %v3121
    %3123 = vmatprep.mubr.f32.mxu0 0.0
    %v3124 = vand.u32 %v374, 4294901760
    %3125 = vmatmul.mubr.f32.gmra.mrb[0].mxu0 %v3124
    %v3126 = vpop.f32.mrb[0].mxu0
    %v3127 = vadd.f32 %v3026, %v3126
    %v3128 = vpop.f32.mrb[0].mxu0
    %v3129 = vadd.f32 %v3028, %v3128
    %3130 = vmatprep.mubr.f32.mxu0 0.0
    %v3131 = vand.u32 %v376, 4294901760
    %3132 = vmatmul.mubr.f32.gmra.mrb[0].mxu0 %v3131
    %v3133 = vpop.f32.mrb[0].mxu0
    %v3134 = vadd.f32 %v3033, %v3133
    %v3135 = vpop.f32.mrb[0].mxu0
    %v3136 = vadd.f32 %v3035, %v3135
    %3137 = vdwg.mxu0
    %v3138 = vtanh.pop %v1043
    %v3139 = vtanh.pop %v1045
    %v3140 = vtanh.pop %v1733
    %v3141 = vtanh.pop %v1735
    %v3142 = vtanh.pop %v2423
    %v3143 = vtanh.pop %v2425
    %v3144 = vtanh.pop %v3113
    %v3145 = vtanh.pop %v3115
    %v3146 = vtanh.pop %v1050
    %v3147 = vtanh.pop %v1052
    %v3148 = vtanh.pop %v1740
    %v3149 = vtanh.pop %v1742
    %v3150 = vtanh.pop %v2430
    %v3151 = vtanh.pop %v2432
    %v3152 = vtanh.pop %v3120
    %v3153 = vtanh.pop %v3122
    %v3154 = vtanh.pop %v1057
    %v3155 = vtanh.pop %v1059
    %v3156 = vtanh.pop %v1747
    %v3157 = vtanh.pop %v1749
    %v3158 = vtanh.pop %v2437
    %v3159 = vtanh.pop %v2439
    %v3160 = vtanh.pop %v3127
    %v3161 = vtanh.pop %v3129
    %v3162 = vtanh.pop %v1064
    %v3163 = vtanh.pop %v1066
    %v3164 = vtanh.pop %v1754
    %v3165 = vtanh.pop %v1756
    %v3166 = vtanh.pop %v2444
    %v3167 = vtanh.pop %v2446
    %v3168 = vtanh.pop %v3134
    %v3169 = vtanh.pop %v3136
    %3170 = vset.pattern.permute.xlu0 68
    %3171 = vperm.xlu0 %3170, %v54
    %v3172 = vpop.permute.xlu0 %3171
    %3174 = vset.pattern.permute.xlu0 68
    %3175 = vperm.xlu0 %3174, %v55
    %v3176 = vpop.permute.xlu0 %3175
    %3178 = vset.pattern.permute.xlu0 68
    %3179 = vperm.xlu0 %3178, %v56
    %v3180 = vpop.permute.xlu0 %3179
    %3182 = vset.pattern.permute.xlu0 68
    %3183 = vperm.xlu0 %3182, %v57
    %v3184 = vpop.permute.xlu0 %3183
    %3186 = vrot.lane.b32.xlu0 %v54, 96
    %v3187 = vpop.permute.xlu0 %3186
    %3188 = vrot.lane.b32.xlu0 %v55, 96
    %v3189 = vpop.permute.xlu0 %3188
    %3190 = vrot.lane.b32.xlu0 %v56, 96
    %v3191 = vpop.permute.xlu0 %3190
    %3192 = vrot.lane.b32.xlu0 %v57, 96
    %v3193 = vpop.permute.xlu0 %3192
    %v3194 = vsel %vm369, %v3187, 0
    %v3196 = vsel %vm369, %v3189, 0
    %v3198 = vsel %vm369, %v3191, 0
    %v3200 = vsel %vm369, %v3193, 0
    %v3202 = vand.u32 %v3139, 4294901760
    %3203 = vmatprep.subr.mxu0 %v3202
    %v3204 = vand.u32 %v3138, 4294901760
    %3205 = vmatpush1.msra.mxu0 %v3204
    %v3206 = vand.u32 %v3147, 4294901760
    %3207 = vmatprep.subr.mxu0 %v3206
    %v3208 = vand.u32 %v3146, 4294901760
    %3209 = vmatpush1.msra.mxu0 %v3208
    %v3210 = vand.u32 %v3155, 4294901760
    %3211 = vmatprep.subr.mxu0 %v3210
    %v3212 = vand.u32 %v3154, 4294901760
    %3213 = vmatpush1.msra.mxu0 %v3212
    %v3214 = vand.u32 %v3163, 4294901760
    %3215 = vmatprep.subr.mxu0 %v3214
    %v3216 = vand.u32 %v3162, 4294901760
    %3217 = vmatpush1.msra.mxu0 %v3216
    %3218 = vmatprep.subr.mxu0 0.0
    %3219 = vmatpush1.msra.mxu0 0.0
    %3220 = vmatprep.subr.mxu0 0.0
    %3221 = vmatpush1.msra.mxu0 0.0
    %3222 = vmatprep.subr.mxu0 0.0
    %3223 = vmatpush1.msra.mxu0 0.0
    %3224 = vmatprep.subr.mxu0 0.0
    %3225 = vmatpush1.msra.mxu0 0.0
    %3226 = vmatprep.subr.mxu0 0.0
    %3227 = vmatpush1.msra.mxu0 0.0
    %3228 = vmatprep.subr.mxu0 0.0
    %3229 = vmatpush1.msra.mxu0 0.0
    %3230 = vmatprep.subr.mxu0 0.0
    %3231 = vmatpush1.msra.mxu0 0.0
    %3232 = vmatprep.subr.mxu0 0.0
    %3233 = vmatpush1.msra.mxu0 0.0
    %3234 = vmatprep.subr.mxu0 0.0
    %3235 = vmatpush1.msra.mxu0 0.0
    %3236 = vmatprep.subr.mxu0 0.0
    %3237 = vmatpush1.msra.mxu0 0.0
    %3238 = vmatprep.subr.mxu0 0.0
    %3239 = vmatpush1.msra.mxu0 0.0
    %3240 = vmatprep.subr.mxu0 0.0
    %3241 = vmatpush1.msra.mxu0 0.0
    %3242 = vmatprep.subr.mxu0 0.0
    %3243 = vmatpush1.msra.mxu0 0.0
    %3244 = vmatprep.subr.mxu0 0.0
    %3245 = vmatpush1.msra.mxu0 0.0
    %3246 = vmatprep.subr.mxu0 0.0
    %3247 = vmatpush1.msra.mxu0 0.0
    %3248 = vmatprep.subr.mxu0 0.0
    %3249 = vmatpush1.msra.mxu0 0.0
    %3250 = vmatprep.subr.mxu0 0.0
    %3251 = vmatpush1.msra.mxu0 0.0
    %3252 = vmatprep.subr.mxu0 0.0
    %3253 = vmatpush1.msra.mxu0 0.0
    %3254 = vmatprep.subr.mxu0 0.0
    %3255 = vmatpush1.msra.mxu0 0.0
    %3256 = vmatprep.subr.mxu0 0.0
    %3257 = vmatpush1.msra.mxu0 0.0
    %3258 = vmatprep.subr.mxu0 0.0
    %3259 = vmatpush1.msra.mxu0 0.0
    %3260 = vmatprep.subr.mxu0 0.0
    %3261 = vmatpush1.msra.mxu0 0.0
    %3262 = vmatprep.subr.mxu0 0.0
    %3263 = vmatpush1.msra.mxu0 0.0
    %3264 = vmatprep.subr.mxu0 0.0
    %3265 = vmatpush1.msra.mxu0 0.0
    %3266 = vmatprep.subr.mxu0 0.0
    %3267 = vmatpush1.msra.mxu0 0.0
    %3268 = vmatprep.subr.mxu0 0.0
    %3269 = vmatpush1.msra.mxu0 0.0
    %3270 = vmatprep.subr.mxu0 0.0
    %3271 = vmatpush1.msra.mxu0 0.0
    %3272 = vmatprep.subr.mxu0 0.0
    %3273 = vmatpush1.msra.mxu0 0.0
    %3274 = vmatprep.mubr.f32.mxu0 0.0
    %v3275 = vand.u32 %v3194, 4294901760
    %v3276 = vsub.f32 %v3194, %v3275
    %v3277 = vand.u32 %v3276, 4294901760
    %v3278 = vsub.f32 %v3276, %v3277
    %v3279 = vand.u32 %v3278, 4294901760
    %3280 = vmatmul.mubr.f32.gmra.mrb[0].mxu0 %v3279
    %v3281 = vpop.f32.mrb[0].mxu0
    %v3282 = vadd.f32 %v3172, %v3281
    %v3283 = vpop.f32.mrb[0].mxu0
    %v3284 = vadd.f32 %v3172, %v3283
    %3285 = vmatprep.mubr.f32.mxu0 0.0
    %v3286 = vand.u32 %v3196, 4294901760
    %v3287 = vsub.f32 %v3196, %v3286
    %v3288 = vand.u32 %v3287, 4294901760
    %v3289 = vsub.f32 %v3287, %v3288
    %v3290 = vand.u32 %v3289, 4294901760
    %3291 = vmatmul.mubr.f32.gmra.mrb[0].mxu0 %v3290
    %v3292 = vpop.f32.mrb[0].mxu0
    %v3293 = vadd.f32 %v3176, %v3292
    %v3294 = vpop.f32.mrb[0].mxu0
    %v3295 = vadd.f32 %v3176, %v3294
    %3296 = vmatprep.mubr.f32.mxu0 0.0
    %v3297 = vand.u32 %v3198, 4294901760
    %v3298 = vsub.f32 %v3198, %v3297
    %v3299 = vand.u32 %v3298, 4294901760
    %v3300 = vsub.f32 %v3298, %v3299
    %v3301 = vand.u32 %v3300, 4294901760
    %3302 = vmatmul.mubr.f32.gmra.mrb[0].mxu0 %v3301
    %v3303 = vpop.f32.mrb[0].mxu0
    %v3304 = vadd.f32 %v3180, %v3303
    %v3305 = vpop.f32.mrb[0].mxu0
    %v3306 = vadd.f32 %v3180, %v3305
    %3307 = vmatprep.mubr.f32.mxu0 0.0
    %v3308 = vand.u32 %v3200, 4294901760
    %v3309 = vsub.f32 %v3200, %v3308
    %v3310 = vand.u32 %v3309, 4294901760
    %v3311 = vsub.f32 %v3309, %v3310
    %v3312 = vand.u32 %v3311, 4294901760
    %3313 = vmatmul.mubr.f32.gmra.mrb[0].mxu0 %v3312
    %v3314 = vpop.f32.mrb[0].mxu0
    %v3315 = vadd.f32 %v3184, %v3314
    %v3316 = vpop.f32.mrb[0].mxu0
    %v3317 = vadd.f32 %v3184, %v3316
    %3318 = vdwg.mxu0
    %v3319 = vand.u32 %v3139, 4294901760
    %v3320 = vsub.f32 %v3139, %v3319
    %v3321 = vand.u32 %v3320, 4294901760
    %v3322 = vsub.f32 %v3320, %v3321
    %v3323 = vand.u32 %v3322, 4294901760
    %3324 = vmatprep.subr.mxu0 %v3323
    %v3325 = vand.u32 %v3138, 4294901760
    %v3326 = vsub.f32 %v3138, %v3325
    %v3327 = vand.u32 %v3326, 4294901760
    %v3328 = vsub.f32 %v3326, %v3327
    %v3329 = vand.u32 %v3328, 4294901760
    %3330 = vmatpush1.msra.mxu0 %v3329
    %v3331 = vand.u32 %v3147, 4294901760
    %v3332 = vsub.f32 %v3147, %v3331
    %v3333 = vand.u32 %v3332, 4294901760
    %v3334 = vsub.f32 %v3332, %v3333
    %v3335 = vand.u32 %v3334, 4294901760
    %3336 = vmatprep.subr.mxu0 %v3335
    %v3337 = vand.u32 %v3146, 4294901760
    %v3338 = vsub.f32 %v3146, %v3337
    %v3339 = vand.u32 %v3338, 4294901760
    %v3340 = vsub.f32 %v3338, %v3339
    %v3341 = vand.u32 %v3340, 4294901760
    %3342 = vmatpush1.msra.mxu0 %v3341
    %v3343 = vand.u32 %v3155, 4294901760
    %v3344 = vsub.f32 %v3155, %v3343
    %v3345 = vand.u32 %v3344, 4294901760
    %v3346 = vsub.f32 %v3344, %v3345
    %v3347 = vand.u32 %v3346, 4294901760
    %3348 = vmatprep.subr.mxu0 %v3347
    %v3349 = vand.u32 %v3154, 4294901760
    %v3350 = vsub.f32 %v3154, %v3349
    %v3351 = vand.u32 %v3350, 4294901760
    %v3352 = vsub.f32 %v3350, %v3351
    %v3353 = vand.u32 %v3352, 4294901760
    %3354 = vmatpush1.msra.mxu0 %v3353
    %v3355 = vand.u32 %v3163, 4294901760
    %v3356 = vsub.f32 %v3163, %v3355
    %v3357 = vand.u32 %v3356, 4294901760
    %v3358 = vsub.f32 %v3356, %v3357
    %v3359 = vand.u32 %v3358, 4294901760
    %3360 = vmatprep.subr.mxu0 %v3359
    %v3361 = vand.u32 %v3162, 4294901760
    %v3362 = vsub.f32 %v3162, %v3361
    %v3363 = vand.u32 %v3362, 4294901760
    %v3364 = vsub.f32 %v3362, %v3363
    %v3365 = vand.u32 %v3364, 4294901760
    %3366 = vmatpush1.msra.mxu0 %v3365
    %3367 = vmatprep.subr.mxu0 0.0
    %3368 = vmatpush1.msra.mxu0 0.0
    %3369 = vmatprep.subr.mxu0 0.0
    %3370 = vmatpush1.msra.mxu0 0.0
    %3371 = vmatprep.subr.mxu0 0.0
    %3372 = vmatpush1.msra.mxu0 0.0
    %3373 = vmatprep.subr.mxu0 0.0
    %3374 = vmatpush1.msra.mxu0 0.0
    %3375 = vmatprep.subr.mxu0 0.0
    %3376 = vmatpush1.msra.mxu0 0.0
    %3377 = vmatprep.subr.mxu0 0.0
    %3378 = vmatpush1.msra.mxu0 0.0
    %3379 = vmatprep.subr.mxu0 0.0
    %3380 = vmatpush1.msra.mxu0 0.0
    %3381 = vmatprep.subr.mxu0 0.0
    %3382 = vmatpush1.msra.mxu0 0.0
    %3383 = vmatprep.subr.mxu0 0.0
    %3384 = vmatpush1.msra.mxu0 0.0
    %3385 = vmatprep.subr.mxu0 0.0
    %3386 = vmatpush1.msra.mxu0 0.0
    %3387 = vmatprep.subr.mxu0 0.0
    %3388 = vmatpush1.msra.mxu0 0.0
    %3389 = vmatprep.subr.mxu0 0.0
    %3390 = vmatpush1.msra.mxu0 0.0
    %3391 = vmatprep.subr.mxu0 0.0
    %3392 = vmatpush1.msra.mxu0 0.0
    %3393 = vmatprep.subr.mxu0 0.0
    %3394 = vmatpush1.msra.mxu0 0.0
    %3395 = vmatprep.subr.mxu0 0.0
    %3396 = vmatpush1.msra.mxu0 0.0
    %3397 = vmatprep.subr.mxu0 0.0
    %3398 = vmatpush1.msra.mxu0 0.0
    %3399 = vmatprep.subr.mxu0 0.0
    %3400 = vmatpush1.msra.mxu0 0.0
    %3401 = vmatprep.subr.mxu0 0.0
    %3402 = vmatpush1.msra.mxu0 0.0
    %3403 = vmatprep.subr.mxu0 0.0
    %3404 = vmatpush1.msra.mxu0 0.0
    %3405 = vmatprep.subr.mxu0 0.0
    %3406 = vmatpush1.msra.mxu0 0.0
    %3407 = vmatprep.subr.mxu0 0.0
    %3408 = vmatpush1.msra.mxu0 0.0
    %3409 = vmatprep.subr.mxu0 0.0
    %3410 = vmatpush1.msra.mxu0 0.0
    %3411 = vmatprep.subr.mxu0 0.0
    %3412 = vmatpush1.msra.mxu0 0.0
    %3413 = vmatprep.subr.mxu0 0.0
    %3414 = vmatpush1.msra.mxu0 0.0
    %3415 = vmatprep.subr.mxu0 0.0
    %3416 = vmatpush1.msra.mxu0 0.0
    %3417 = vmatprep.subr.mxu0 0.0
    %3418 = vmatpush1.msra.mxu0 0.0
    %3419 = vmatprep.subr.mxu0 0.0
    %3420 = vmatpush1.msra.mxu0 0.0
    %3421 = vmatprep.subr.mxu0 0.0
    %3422 = vmatpush1.msra.mxu0 0.0
    %3423 = vmatprep.mubr.f32.mxu0 0.0
    %v3424 = vand.u32 %v3194, 4294901760
    %3425 = vmatmul.mubr.f32.gmra.mrb[0].mxu0 %v3424
    %v3426 = vpop.f32.mrb[0].mxu0
    %v3427 = vadd.f32 %v3282, %v3426
    %v3428 = vpop.f32.mrb[0].mxu0
    %v3429 = vadd.f32 %v3284, %v3428
    %3430 = vmatprep.mubr.f32.mxu0 0.0
    %v3431 = vand.u32 %v3196, 4294901760
    %3432 = vmatmul.mubr.f32.gmra.mrb[0].mxu0 %v3431
    %v3433 = vpop.f32.mrb[0].mxu0
    %v3434 = vadd.f32 %v3293, %v3433
    %v3435 = vpop.f32.mrb[0].mxu0
    %v3436 = vadd.f32 %v3295, %v3435
    %3437 = vmatprep.mubr.f32.mxu0 0.0
    %v3438 = vand.u32 %v3198, 4294901760
    %3439 = vmatmul.mubr.f32.gmra.mrb[0].mxu0 %v3438
    %v3440 = vpop.f32.mrb[0].mxu0
    %v3441 = vadd.f32 %v3304, %v3440
    %v3442 = vpop.f32.mrb[0].mxu0
    %v3443 = vadd.f32 %v3306, %v3442
    %3444 = vmatprep.mubr.f32.mxu0 0.0
    %v3445 = vand.u32 %v3200, 4294901760
    %3446 = vmatmul.mubr.f32.gmra.mrb[0].mxu0 %v3445
    %v3447 = vpop.f32.mrb[0].mxu0
    %v3448 = vadd.f32 %v3315, %v3447
    %v3449 = vpop.f32.mrb[0].mxu0
    %v3450 = vadd.f32 %v3317, %v3449
    %3451 = vdwg.mxu0
    %v3452 = vand.u32 %v3139, 4294901760
    %v3453 = vsub.f32 %v3139, %v3452
    %3454 = vmatprep.subr.mxu0 %v3453
    %v3455 = vand.u32 %v3138, 4294901760
    %v3456 = vsub.f32 %v3138, %v3455
    %3457 = vmatpush1.msra.mxu0 %v3456
    %v3458 = vand.u32 %v3147, 4294901760
    %v3459 = vsub.f32 %v3147, %v3458
    %3460 = vmatprep.subr.mxu0 %v3459
    %v3461 = vand.u32 %v3146, 4294901760
    %v3462 = vsub.f32 %v3146, %v3461
    %3463 = vmatpush1.msra.mxu0 %v3462
    %v3464 = vand.u32 %v3155, 4294901760
    %v3465 = vsub.f32 %v3155, %v3464
    %3466 = vmatprep.subr.mxu0 %v3465
    %v3467 = vand.u32 %v3154, 4294901760
    %v3468 = vsub.f32 %v3154, %v3467
    %3469 = vmatpush1.msra.mxu0 %v3468
    %v3470 = vand.u32 %v3163, 4294901760
    %v3471 = vsub.f32 %v3163, %v3470
    %3472 = vmatprep.subr.mxu0 %v3471
    %v3473 = vand.u32 %v3162, 4294901760
    %v3474 = vsub.f32 %v3162, %v3473
    %3475 = vmatpush1.msra.mxu0 %v3474
    %3476 = vmatprep.subr.mxu0 0.0
    %3477 = vmatpush1.msra.mxu0 0.0
    %3478 = vmatprep.subr.mxu0 0.0
    %3479 = vmatpush1.msra.mxu0 0.0
    %3480 = vmatprep.subr.mxu0 0.0
    %3481 = vmatpush1.msra.mxu0 0.0
    %3482 = vmatprep.subr.mxu0 0.0
    %3483 = vmatpush1.msra.mxu0 0.0
    %3484 = vmatprep.subr.mxu0 0.0
    %3485 = vmatpush1.msra.mxu0 0.0
    %3486 = vmatprep.subr.mxu0 0.0
    %3487 = vmatpush1.msra.mxu0 0.0
    %3488 = vmatprep.subr.mxu0 0.0
    %3489 = vmatpush1.msra.mxu0 0.0
    %3490 = vmatprep.subr.mxu0 0.0
    %3491 = vmatpush1.msra.mxu0 0.0
    %3492 = vmatprep.subr.mxu0 0.0
    %3493 = vmatpush1.msra.mxu0 0.0
    %3494 = vmatprep.subr.mxu0 0.0
    %3495 = vmatpush1.msra.mxu0 0.0
    %3496 = vmatprep.subr.mxu0 0.0
    %3497 = vmatpush1.msra.mxu0 0.0
    %3498 = vmatprep.subr.mxu0 0.0
    %3499 = vmatpush1.msra.mxu0 0.0
    %3500 = vmatprep.subr.mxu0 0.0
    %3501 = vmatpush1.msra.mxu0 0.0
    %3502 = vmatprep.subr.mxu0 0.0
    %3503 = vmatpush1.msra.mxu0 0.0
    %3504 = vmatprep.subr.mxu0 0.0
    %3505 = vmatpush1.msra.mxu0 0.0
    %3506 = vmatprep.subr.mxu0 0.0
    %3507 = vmatpush1.msra.mxu0 0.0
    %3508 = vmatprep.subr.mxu0 0.0
    %3509 = vmatpush1.msra.mxu0 0.0
    %3510 = vmatprep.subr.mxu0 0.0
    %3511 = vmatpush1.msra.mxu0 0.0
    %3512 = vmatprep.subr.mxu0 0.0
    %3513 = vmatpush1.msra.mxu0 0.0
    %3514 = vmatprep.subr.mxu0 0.0
    %3515 = vmatpush1.msra.mxu0 0.0
    %3516 = vmatprep.subr.mxu0 0.0
    %3517 = vmatpush1.msra.mxu0 0.0
    %3518 = vmatprep.subr.mxu0 0.0
    %3519 = vmatpush1.msra.mxu0 0.0
    %3520 = vmatprep.subr.mxu0 0.0
    %3521 = vmatpush1.msra.mxu0 0.0
    %3522 = vmatprep.subr.mxu0 0.0
    %3523 = vmatpush1.msra.mxu0 0.0
    %3524 = vmatprep.subr.mxu0 0.0
    %3525 = vmatpush1.msra.mxu0 0.0
    %3526 = vmatprep.subr.mxu0 0.0
    %3527 = vmatpush1.msra.mxu0 0.0
    %3528 = vmatprep.subr.mxu0 0.0
    %3529 = vmatpush1.msra.mxu0 0.0
    %3530 = vmatprep.subr.mxu0 0.0
    %3531 = vmatpush1.msra.mxu0 0.0
    %3532 = vmatprep.mubr.f32.mxu0 0.0
    %v3533 = vand.u32 %v3194, 4294901760
    %v3534 = vsub.f32 %v3194, %v3533
    %3535 = vmatmul.mubr.f32.gmra.mrb[0].mxu0 %v3534
    %v3536 = vpop.f32.mrb[0].mxu0
    %v3537 = vadd.f32 %v3427, %v3536
    %v3538 = vpop.f32.mrb[0].mxu0
    %v3539 = vadd.f32 %v3429, %v3538
    %3540 = vmatprep.mubr.f32.mxu0 0.0
    %v3541 = vand.u32 %v3196, 4294901760
    %v3542 = vsub.f32 %v3196, %v3541
    %3543 = vmatmul.mubr.f32.gmra.mrb[0].mxu0 %v3542
    %v3544 = vpop.f32.mrb[0].mxu0
    %v3545 = vadd.f32 %v3434, %v3544
    %v3546 = vpop.f32.mrb[0].mxu0
    %v3547 = vadd.f32 %v3436, %v3546
    %3548 = vmatprep.mubr.f32.mxu0 0.0
    %v3549 = vand.u32 %v3198, 4294901760
    %v3550 = vsub.f32 %v3198, %v3549
    %3551 = vmatmul.mubr.f32.gmra.mrb[0].mxu0 %v3550
    %v3552 = vpop.f32.mrb[0].mxu0
    %v3553 = vadd.f32 %v3441, %v3552
    %v3554 = vpop.f32.mrb[0].mxu0
    %v3555 = vadd.f32 %v3443, %v3554
    %3556 = vmatprep.mubr.f32.mxu0 0.0
    %v3557 = vand.u32 %v3200, 4294901760
    %v3558 = vsub.f32 %v3200, %v3557
    %3559 = vmatmul.mubr.f32.gmra.mrb[0].mxu0 %v3558
    %v3560 = vpop.f32.mrb[0].mxu0
    %v3561 = vadd.f32 %v3448, %v3560
    %v3562 = vpop.f32.mrb[0].mxu0
    %v3563 = vadd.f32 %v3450, %v3562
    %3564 = vdwg.mxu0
    %v3565 = vand.u32 %v3139, 4294901760
    %3566 = vmatprep.subr.mxu0 %v3565
    %v3567 = vand.u32 %v3138, 4294901760
    %3568 = vmatpush1.msra.mxu0 %v3567
    %v3569 = vand.u32 %v3147, 4294901760
    %3570 = vmatprep.subr.mxu0 %v3569
    %v3571 = vand.u32 %v3146, 4294901760
    %3572 = vmatpush1.msra.mxu0 %v3571
    %v3573 = vand.u32 %v3155, 4294901760
    %3574 = vmatprep.subr.mxu0 %v3573
    %v3575 = vand.u32 %v3154, 4294901760
    %3576 = vmatpush1.msra.mxu0 %v3575
    %v3577 = vand.u32 %v3163, 4294901760
    %3578 = vmatprep.subr.mxu0 %v3577
    %v3579 = vand.u32 %v3162, 4294901760
    %3580 = vmatpush1.msra.mxu0 %v3579
    %3581 = vmatprep.subr.mxu0 0.0
    %3582 = vmatpush1.msra.mxu0 0.0
    %3583 = vmatprep.subr.mxu0 0.0
    %3584 = vmatpush1.msra.mxu0 0.0
    %3585 = vmatprep.subr.mxu0 0.0
    %3586 = vmatpush1.msra.mxu0 0.0
    %3587 = vmatprep.subr.mxu0 0.0
    %3588 = vmatpush1.msra.mxu0 0.0
    %3589 = vmatprep.subr.mxu0 0.0
    %3590 = vmatpush1.msra.mxu0 0.0
    %3591 = vmatprep.subr.mxu0 0.0
    %3592 = vmatpush1.msra.mxu0 0.0
    %3593 = vmatprep.subr.mxu0 0.0
    %3594 = vmatpush1.msra.mxu0 0.0
    %3595 = vmatprep.subr.mxu0 0.0
    %3596 = vmatpush1.msra.mxu0 0.0
    %3597 = vmatprep.subr.mxu0 0.0
    %3598 = vmatpush1.msra.mxu0 0.0
    %3599 = vmatprep.subr.mxu0 0.0
    %3600 = vmatpush1.msra.mxu0 0.0
    %3601 = vmatprep.subr.mxu0 0.0
    %3602 = vmatpush1.msra.mxu0 0.0
    %3603 = vmatprep.subr.mxu0 0.0
    %3604 = vmatpush1.msra.mxu0 0.0
    %3605 = vmatprep.subr.mxu0 0.0
    %3606 = vmatpush1.msra.mxu0 0.0
    %3607 = vmatprep.subr.mxu0 0.0
    %3608 = vmatpush1.msra.mxu0 0.0
    %3609 = vmatprep.subr.mxu0 0.0
    %3610 = vmatpush1.msra.mxu0 0.0
    %3611 = vmatprep.subr.mxu0 0.0
    %3612 = vmatpush1.msra.mxu0 0.0
    %3613 = vmatprep.subr.mxu0 0.0
    %3614 = vmatpush1.msra.mxu0 0.0
    %3615 = vmatprep.subr.mxu0 0.0
    %3616 = vmatpush1.msra.mxu0 0.0
    %3617 = vmatprep.subr.mxu0 0.0
    %3618 = vmatpush1.msra.mxu0 0.0
    %3619 = vmatprep.subr.mxu0 0.0
    %3620 = vmatpush1.msra.mxu0 0.0
    %3621 = vmatprep.subr.mxu0 0.0
    %3622 = vmatpush1.msra.mxu0 0.0
    %3623 = vmatprep.subr.mxu0 0.0
    %3624 = vmatpush1.msra.mxu0 0.0
    %3625 = vmatprep.subr.mxu0 0.0
    %3626 = vmatpush1.msra.mxu0 0.0
    %3627 = vmatprep.subr.mxu0 0.0
    %3628 = vmatpush1.msra.mxu0 0.0
    %3629 = vmatprep.subr.mxu0 0.0
    %3630 = vmatpush1.msra.mxu0 0.0
    %3631 = vmatprep.subr.mxu0 0.0
    %3632 = vmatpush1.msra.mxu0 0.0
    %3633 = vmatprep.subr.mxu0 0.0
    %3634 = vmatpush1.msra.mxu0 0.0
    %3635 = vmatprep.subr.mxu0 0.0
    %3636 = vmatpush1.msra.mxu0 0.0
    %3637 = vmatprep.mubr.f32.mxu0 0.0
    %v3638 = vand.u32 %v3194, 4294901760
    %v3639 = vsub.f32 %v3194, %v3638
    %v3640 = vand.u32 %v3639, 4294901760
    %3641 = vmatmul.mubr.f32.gmra.mrb[0].mxu0 %v3640
    %v3642 = vpop.f32.mrb[0].mxu0
    %v3643 = vadd.f32 %v3537, %v3642
    %v3644 = vpop.f32.mrb[0].mxu0
    %v3645 = vadd.f32 %v3539, %v3644
    %3646 = vmatprep.mubr.f32.mxu0 0.0
    %v3647 = vand.u32 %v3196, 4294901760
    %v3648 = vsub.f32 %v3196, %v3647
    %v3649 = vand.u32 %v3648, 4294901760
    %3650 = vmatmul.mubr.f32.gmra.mrb[0].mxu0 %v3649
    %v3651 = vpop.f32.mrb[0].mxu0
    %v3652 = vadd.f32 %v3545, %v3651
    %v3653 = vpop.f32.mrb[0].mxu0
    %v3654 = vadd.f32 %v3547, %v3653
    %3655 = vmatprep.mubr.f32.mxu0 0.0
    %v3656 = vand.u32 %v3198, 4294901760
    %v3657 = vsub.f32 %v3198, %v3656
    %v3658 = vand.u32 %v3657, 4294901760
    %3659 = vmatmul.mubr.f32.gmra.mrb[0].mxu0 %v3658
    %v3660 = vpop.f32.mrb[0].mxu0
    %v3661 = vadd.f32 %v3553, %v3660
    %v3662 = vpop.f32.mrb[0].mxu0
    %v3663 = vadd.f32 %v3555, %v3662
    %3664 = vmatprep.mubr.f32.mxu0 0.0
    %v3665 = vand.u32 %v3200, 4294901760
    %v3666 = vsub.f32 %v3200, %v3665
    %v3667 = vand.u32 %v3666, 4294901760
    %3668 = vmatmul.mubr.f32.gmra.mrb[0].mxu0 %v3667
    %v3669 = vpop.f32.mrb[0].mxu0
    %v3670 = vadd.f32 %v3561, %v3669
    %v3671 = vpop.f32.mrb[0].mxu0
    %v3672 = vadd.f32 %v3563, %v3671
    %3673 = vdwg.mxu0
    %v3674 = vand.u32 %v3139, 4294901760
    %v3675 = vsub.f32 %v3139, %v3674
    %v3676 = vand.u32 %v3675, 4294901760
    %3677 = vmatprep.subr.mxu0 %v3676
    %v3678 = vand.u32 %v3138, 4294901760
    %v3679 = vsub.f32 %v3138, %v3678
    %v3680 = vand.u32 %v3679, 4294901760
    %3681 = vmatpush1.msra.mxu0 %v3680
    %v3682 = vand.u32 %v3147, 4294901760
    %v3683 = vsub.f32 %v3147, %v3682
    %v3684 = vand.u32 %v3683, 4294901760
    %3685 = vmatprep.subr.mxu0 %v3684
    %v3686 = vand.u32 %v3146, 4294901760
    %v3687 = vsub.f32 %v3146, %v3686
    %v3688 = vand.u32 %v3687, 4294901760
    %3689 = vmatpush1.msra.mxu0 %v3688
    %v3690 = vand.u32 %v3155, 4294901760
    %v3691 = vsub.f32 %v3155, %v3690
    %v3692 = vand.u32 %v3691, 4294901760
    %3693 = vmatprep.subr.mxu0 %v3692
    %v3694 = vand.u32 %v3154, 4294901760
    %v3695 = vsub.f32 %v3154, %v3694
    %v3696 = vand.u32 %v3695, 4294901760
    %3697 = vmatpush1.msra.mxu0 %v3696
    %v3698 = vand.u32 %v3163, 4294901760
    %v3699 = vsub.f32 %v3163, %v3698
    %v3700 = vand.u32 %v3699, 4294901760
    %3701 = vmatprep.subr.mxu0 %v3700
    %v3702 = vand.u32 %v3162, 4294901760
    %v3703 = vsub.f32 %v3162, %v3702
    %v3704 = vand.u32 %v3703, 4294901760
    %3705 = vmatpush1.msra.mxu0 %v3704
    %3706 = vmatprep.subr.mxu0 0.0
    %3707 = vmatpush1.msra.mxu0 0.0
    %3708 = vmatprep.subr.mxu0 0.0
    %3709 = vmatpush1.msra.mxu0 0.0
    %3710 = vmatprep.subr.mxu0 0.0
    %3711 = vmatpush1.msra.mxu0 0.0
    %3712 = vmatprep.subr.mxu0 0.0
    %3713 = vmatpush1.msra.mxu0 0.0
    %3714 = vmatprep.subr.mxu0 0.0
    %3715 = vmatpush1.msra.mxu0 0.0
    %3716 = vmatprep.subr.mxu0 0.0
    %3717 = vmatpush1.msra.mxu0 0.0
    %3718 = vmatprep.subr.mxu0 0.0
    %3719 = vmatpush1.msra.mxu0 0.0
    %3720 = vmatprep.subr.mxu0 0.0
    %3721 = vmatpush1.msra.mxu0 0.0
    %3722 = vmatprep.subr.mxu0 0.0
    %3723 = vmatpush1.msra.mxu0 0.0
    %3724 = vmatprep.subr.mxu0 0.0
    %3725 = vmatpush1.msra.mxu0 0.0
    %3726 = vmatprep.subr.mxu0 0.0
    %3727 = vmatpush1.msra.mxu0 0.0
    %3728 = vmatprep.subr.mxu0 0.0
    %3729 = vmatpush1.msra.mxu0 0.0
    %3730 = vmatprep.subr.mxu0 0.0
    %3731 = vmatpush1.msra.mxu0 0.0
    %3732 = vmatprep.subr.mxu0 0.0
    %3733 = vmatpush1.msra.mxu0 0.0
    %3734 = vmatprep.subr.mxu0 0.0
    %3735 = vmatpush1.msra.mxu0 0.0
    %3736 = vmatprep.subr.mxu0 0.0
    %3737 = vmatpush1.msra.mxu0 0.0
    %3738 = vmatprep.subr.mxu0 0.0
    %3739 = vmatpush1.msra.mxu0 0.0
    %3740 = vmatprep.subr.mxu0 0.0
    %3741 = vmatpush1.msra.mxu0 0.0
    %3742 = vmatprep.subr.mxu0 0.0
    %3743 = vmatpush1.msra.mxu0 0.0
    %3744 = vmatprep.subr.mxu0 0.0
    %3745 = vmatpush1.msra.mxu0 0.0
    %3746 = vmatprep.subr.mxu0 0.0
    %3747 = vmatpush1.msra.mxu0 0.0
    %3748 = vmatprep.subr.mxu0 0.0
    %3749 = vmatpush1.msra.mxu0 0.0
    %3750 = vmatprep.subr.mxu0 0.0
    %3751 = vmatpush1.msra.mxu0 0.0
    %3752 = vmatprep.subr.mxu0 0.0
    %3753 = vmatpush1.msra.mxu0 0.0
    %3754 = vmatprep.subr.mxu0 0.0
    %3755 = vmatpush1.msra.mxu0 0.0
    %3756 = vmatprep.subr.mxu0 0.0
    %3757 = vmatpush1.msra.mxu0 0.0
    %3758 = vmatprep.subr.mxu0 0.0
    %3759 = vmatpush1.msra.mxu0 0.0
    %3760 = vmatprep.subr.mxu0 0.0
    %3761 = vmatpush1.msra.mxu0 0.0
    %3762 = vmatprep.mubr.f32.mxu0 0.0
    %v3763 = vand.u32 %v3194, 4294901760
    %3764 = vmatmul.mubr.f32.gmra.mrb[0].mxu0 %v3763
    %v3765 = vpop.f32.mrb[0].mxu0
    %v3766 = vadd.f32 %v3643, %v3765
    %v3767 = vpop.f32.mrb[0].mxu0
    %v3768 = vadd.f32 %v3645, %v3767
    %3769 = vmatprep.mubr.f32.mxu0 0.0
    %v3770 = vand.u32 %v3196, 4294901760
    %3771 = vmatmul.mubr.f32.gmra.mrb[0].mxu0 %v3770
    %v3772 = vpop.f32.mrb[0].mxu0
    %v3773 = vadd.f32 %v3652, %v3772
    %v3774 = vpop.f32.mrb[0].mxu0
    %v3775 = vadd.f32 %v3654, %v3774
    %3776 = vmatprep.mubr.f32.mxu0 0.0
    %v3777 = vand.u32 %v3198, 4294901760
    %3778 = vmatmul.mubr.f32.gmra.mrb[0].mxu0 %v3777
    %v3779 = vpop.f32.mrb[0].mxu0
    %v3780 = vadd.f32 %v3661, %v3779
    %v3781 = vpop.f32.mrb[0].mxu0
    %v3782 = vadd.f32 %v3663, %v3781
    %3783 = vmatprep.mubr.f32.mxu0 0.0
    %v3784 = vand.u32 %v3200, 4294901760
    %3785 = vmatmul.mubr.f32.gmra.mrb[0].mxu0 %v3784
    %v3786 = vpop.f32.mrb[0].mxu0
    %v3787 = vadd.f32 %v3670, %v3786
    %v3788 = vpop.f32.mrb[0].mxu0
    %v3789 = vadd.f32 %v3672, %v3788
    %3790 = vdwg.mxu0
    %v3791 = vand.u32 %v3139, 4294901760
    %3792 = vmatprep.subr.mxu0 %v3791
    %v3793 = vand.u32 %v3138, 4294901760
    %3794 = vmatpush1.msra.mxu0 %v3793
    %v3795 = vand.u32 %v3147, 4294901760
    %3796 = vmatprep.subr.mxu0 %v3795
    %v3797 = vand.u32 %v3146, 4294901760
    %3798 = vmatpush1.msra.mxu0 %v3797
    %v3799 = vand.u32 %v3155, 4294901760
    %3800 = vmatprep.subr.mxu0 %v3799
    %v3801 = vand.u32 %v3154, 4294901760
    %3802 = vmatpush1.msra.mxu0 %v3801
    %v3803 = vand.u32 %v3163, 4294901760
    %3804 = vmatprep.subr.mxu0 %v3803
    %v3805 = vand.u32 %v3162, 4294901760
    %3806 = vmatpush1.msra.mxu0 %v3805
    %3807 = vmatprep.subr.mxu0 0.0
    %3808 = vmatpush1.msra.mxu0 0.0
    %3809 = vmatprep.subr.mxu0 0.0
    %3810 = vmatpush1.msra.mxu0 0.0
    %3811 = vmatprep.subr.mxu0 0.0
    %3812 = vmatpush1.msra.mxu0 0.0
    %3813 = vmatprep.subr.mxu0 0.0
    %3814 = vmatpush1.msra.mxu0 0.0
    %3815 = vmatprep.subr.mxu0 0.0
    %3816 = vmatpush1.msra.mxu0 0.0
    %3817 = vmatprep.subr.mxu0 0.0
    %3818 = vmatpush1.msra.mxu0 0.0
    %3819 = vmatprep.subr.mxu0 0.0
    %3820 = vmatpush1.msra.mxu0 0.0
    %3821 = vmatprep.subr.mxu0 0.0
    %3822 = vmatpush1.msra.mxu0 0.0
    %3823 = vmatprep.subr.mxu0 0.0
    %3824 = vmatpush1.msra.mxu0 0.0
    %3825 = vmatprep.subr.mxu0 0.0
    %3826 = vmatpush1.msra.mxu0 0.0
    %3827 = vmatprep.subr.mxu0 0.0
    %3828 = vmatpush1.msra.mxu0 0.0
    %3829 = vmatprep.subr.mxu0 0.0
    %3830 = vmatpush1.msra.mxu0 0.0
    %3831 = vmatprep.subr.mxu0 0.0
    %3832 = vmatpush1.msra.mxu0 0.0
    %3833 = vmatprep.subr.mxu0 0.0
    %3834 = vmatpush1.msra.mxu0 0.0
    %3835 = vmatprep.subr.mxu0 0.0
    %3836 = vmatpush1.msra.mxu0 0.0
    %3837 = vmatprep.subr.mxu0 0.0
    %3838 = vmatpush1.msra.mxu0 0.0
    %3839 = vmatprep.subr.mxu0 0.0
    %3840 = vmatpush1.msra.mxu0 0.0
    %3841 = vmatprep.subr.mxu0 0.0
    %3842 = vmatpush1.msra.mxu0 0.0
    %3843 = vmatprep.subr.mxu0 0.0
    %3844 = vmatpush1.msra.mxu0 0.0
    %3845 = vmatprep.subr.mxu0 0.0
    %3846 = vmatpush1.msra.mxu0 0.0
    %3847 = vmatprep.subr.mxu0 0.0
    %3848 = vmatpush1.msra.mxu0 0.0
    %3849 = vmatprep.subr.mxu0 0.0
    %3850 = vmatpush1.msra.mxu0 0.0
    %3851 = vmatprep.subr.mxu0 0.0
    %3852 = vmatpush1.msra.mxu0 0.0
    %3853 = vmatprep.subr.mxu0 0.0
    %3854 = vmatpush1.msra.mxu0 0.0
    %3855 = vmatprep.subr.mxu0 0.0
    %3856 = vmatpush1.msra.mxu0 0.0
    %3857 = vmatprep.subr.mxu0 0.0
    %3858 = vmatpush1.msra.mxu0 0.0
    %3859 = vmatprep.subr.mxu0 0.0
    %3860 = vmatpush1.msra.mxu0 0.0
    %3861 = vmatprep.subr.mxu0 0.0
    %3862 = vmatpush1.msra.mxu0 0.0
    %3863 = vmatprep.mubr.f32.mxu0 0.0
    %v3864 = vand.u32 %v3194, 4294901760
    %3865 = vmatmul.mubr.f32.gmra.mrb[0].mxu0 %v3864
    %v3866 = vpop.f32.mrb[0].mxu0
    %v3867 = vadd.f32 %v3766, %v3866
    %v3868 = vpop.f32.mrb[0].mxu0
    %v3869 = vadd.f32 %v3768, %v3868
    %3870 = vmatprep.mubr.f32.mxu0 0.0
    %v3871 = vand.u32 %v3196, 4294901760
    %3872 = vmatmul.mubr.f32.gmra.mrb[0].mxu0 %v3871
    %v3873 = vpop.f32.mrb[0].mxu0
    %v3874 = vadd.f32 %v3773, %v3873
    %v3875 = vpop.f32.mrb[0].mxu0
    %v3876 = vadd.f32 %v3775, %v3875
    %3877 = vmatprep.mubr.f32.mxu0 0.0
    %v3878 = vand.u32 %v3198, 4294901760
    %3879 = vmatmul.mubr.f32.gmra.mrb[0].mxu0 %v3878
    %v3880 = vpop.f32.mrb[0].mxu0
    %v3881 = vadd.f32 %v3780, %v3880
    %v3882 = vpop.f32.mrb[0].mxu0
    %v3883 = vadd.f32 %v3782, %v3882
    %3884 = vmatprep.mubr.f32.mxu0 0.0
    %v3885 = vand.u32 %v3200, 4294901760
    %3886 = vmatmul.mubr.f32.gmra.mrb[0].mxu0 %v3885
    %v3887 = vpop.f32.mrb[0].mxu0
    %v3888 = vadd.f32 %v3787, %v3887
    %v3889 = vpop.f32.mrb[0].mxu0
    %v3890 = vadd.f32 %v3789, %v3889
    %3891 = vdwg.mxu0
    %v3892 = vand.u32 %v3141, 4294901760
    %3893 = vmatprep.subr.mxu0 %v3892
    %v3894 = vand.u32 %v3140, 4294901760
    %3895 = vmatpush1.msra.mxu0 %v3894
    %v3896 = vand.u32 %v3149, 4294901760
    %3897 = vmatprep.subr.mxu0 %v3896
    %v3898 = vand.u32 %v3148, 4294901760
    %3899 = vmatpush1.msra.mxu0 %v3898
    %v3900 = vand.u32 %v3157, 4294901760
    %3901 = vmatprep.subr.mxu0 %v3900
    %v3902 = vand.u32 %v3156, 4294901760
    %3903 = vmatpush1.msra.mxu0 %v3902
    %v3904 = vand.u32 %v3165, 4294901760
    %3905 = vmatprep.subr.mxu0 %v3904
    %v3906 = vand.u32 %v3164, 4294901760
    %3907 = vmatpush1.msra.mxu0 %v3906
    %3908 = vmatprep.subr.mxu0 0.0
    %3909 = vmatpush1.msra.mxu0 0.0
    %3910 = vmatprep.subr.mxu0 0.0
    %3911 = vmatpush1.msra.mxu0 0.0
    %3912 = vmatprep.subr.mxu0 0.0
    %3913 = vmatpush1.msra.mxu0 0.0
    %3914 = vmatprep.subr.mxu0 0.0
    %3915 = vmatpush1.msra.mxu0 0.0
    %3916 = vmatprep.subr.mxu0 0.0
    %3917 = vmatpush1.msra.mxu0 0.0
    %3918 = vmatprep.subr.mxu0 0.0
    %3919 = vmatpush1.msra.mxu0 0.0
    %3920 = vmatprep.subr.mxu0 0.0
    %3921 = vmatpush1.msra.mxu0 0.0
    %3922 = vmatprep.subr.mxu0 0.0
    %3923 = vmatpush1.msra.mxu0 0.0
    %3924 = vmatprep.subr.mxu0 0.0
    %3925 = vmatpush1.msra.mxu0 0.0
    %3926 = vmatprep.subr.mxu0 0.0
    %3927 = vmatpush1.msra.mxu0 0.0
    %3928 = vmatprep.subr.mxu0 0.0
    %3929 = vmatpush1.msra.mxu0 0.0
    %3930 = vmatprep.subr.mxu0 0.0
    %3931 = vmatpush1.msra.mxu0 0.0
    %3932 = vmatprep.subr.mxu0 0.0
    %3933 = vmatpush1.msra.mxu0 0.0
    %3934 = vmatprep.subr.mxu0 0.0
    %3935 = vmatpush1.msra.mxu0 0.0
    %3936 = vmatprep.subr.mxu0 0.0
    %3937 = vmatpush1.msra.mxu0 0.0
    %3938 = vmatprep.subr.mxu0 0.0
    %3939 = vmatpush1.msra.mxu0 0.0
    %3940 = vmatprep.subr.mxu0 0.0
    %3941 = vmatpush1.msra.mxu0 0.0
    %3942 = vmatprep.subr.mxu0 0.0
    %3943 = vmatpush1.msra.mxu0 0.0
    %3944 = vmatprep.subr.mxu0 0.0
    %3945 = vmatpush1.msra.mxu0 0.0
    %3946 = vmatprep.subr.mxu0 0.0
    %3947 = vmatpush1.msra.mxu0 0.0
    %3948 = vmatprep.subr.mxu0 0.0
    %3949 = vmatpush1.msra.mxu0 0.0
    %3950 = vmatprep.subr.mxu0 0.0
    %3951 = vmatpush1.msra.mxu0 0.0
    %3952 = vmatprep.subr.mxu0 0.0
    %3953 = vmatpush1.msra.mxu0 0.0
    %3954 = vmatprep.subr.mxu0 0.0
    %3955 = vmatpush1.msra.mxu0 0.0
    %3956 = vmatprep.subr.mxu0 0.0
    %3957 = vmatpush1.msra.mxu0 0.0
    %3958 = vmatprep.subr.mxu0 0.0
    %3959 = vmatpush1.msra.mxu0 0.0
    %3960 = vmatprep.subr.mxu0 0.0
    %3961 = vmatpush1.msra.mxu0 0.0
    %3962 = vmatprep.subr.mxu0 0.0
    %3963 = vmatpush1.msra.mxu0 0.0
    %3964 = vmatprep.mubr.f32.mxu0 0.0
    %v3965 = vand.u32 %v3194, 4294901760
    %v3966 = vsub.f32 %v3194, %v3965
    %v3967 = vand.u32 %v3966, 4294901760
    %v3968 = vsub.f32 %v3966, %v3967
    %v3969 = vand.u32 %v3968, 4294901760
    %3970 = vmatmul.mubr.f32.gmra.mrb[0].mxu0 %v3969
    %v3971 = vpop.f32.mrb[0].mxu0
    %v3972 = vadd.f32 %v3172, %v3971
    %v3973 = vpop.f32.mrb[0].mxu0
    %v3974 = vadd.f32 %v3172, %v3973
    %3975 = vmatprep.mubr.f32.mxu0 0.0
    %v3976 = vand.u32 %v3196, 4294901760
    %v3977 = vsub.f32 %v3196, %v3976
    %v3978 = vand.u32 %v3977, 4294901760
    %v3979 = vsub.f32 %v3977, %v3978
    %v3980 = vand.u32 %v3979, 4294901760
    %3981 = vmatmul.mubr.f32.gmra.mrb[0].mxu0 %v3980
    %v3982 = vpop.f32.mrb[0].mxu0
    %v3983 = vadd.f32 %v3176, %v3982
    %v3984 = vpop.f32.mrb[0].mxu0
    %v3985 = vadd.f32 %v3176, %v3984
    %3986 = vmatprep.mubr.f32.mxu0 0.0
    %v3987 = vand.u32 %v3198, 4294901760
    %v3988 = vsub.f32 %v3198, %v3987
    %v3989 = vand.u32 %v3988, 4294901760
    %v3990 = vsub.f32 %v3988, %v3989
    %v3991 = vand.u32 %v3990, 4294901760
    %3992 = vmatmul.mubr.f32.gmra.mrb[0].mxu0 %v3991
    %v3993 = vpop.f32.mrb[0].mxu0
    %v3994 = vadd.f32 %v3180, %v3993
    %v3995 = vpop.f32.mrb[0].mxu0
    %v3996 = vadd.f32 %v3180, %v3995
    %3997 = vmatprep.mubr.f32.mxu0 0.0
    %v3998 = vand.u32 %v3200, 4294901760
    %v3999 = vsub.f32 %v3200, %v3998
    %v4000 = vand.u32 %v3999, 4294901760
    %v4001 = vsub.f32 %v3999, %v4000
    %v4002 = vand.u32 %v4001, 4294901760
    %4003 = vmatmul.mubr.f32.gmra.mrb[0].mxu0 %v4002
    %v4004 = vpop.f32.mrb[0].mxu0
    %v4005 = vadd.f32 %v3184, %v4004
    %v4006 = vpop.f32.mrb[0].mxu0
    %v4007 = vadd.f32 %v3184, %v4006
    %4008 = vdwg.mxu0
    %v4009 = vand.u32 %v3141, 4294901760
    %v4010 = vsub.f32 %v3141, %v4009
    %v4011 = vand.u32 %v4010, 4294901760
    %v4012 = vsub.f32 %v4010, %v4011
    %v4013 = vand.u32 %v4012, 4294901760
    %4014 = vmatprep.subr.mxu0 %v4013
    %v4015 = vand.u32 %v3140, 4294901760
    %v4016 = vsub.f32 %v3140, %v4015
    %v4017 = vand.u32 %v4016, 4294901760
    %v4018 = vsub.f32 %v4016, %v4017
    %v4019 = vand.u32 %v4018, 4294901760
    %4020 = vmatpush1.msra.mxu0 %v4019
    %v4021 = vand.u32 %v3149, 4294901760
    %v4022 = vsub.f32 %v3149, %v4021
    %v4023 = vand.u32 %v4022, 4294901760
    %v4024 = vsub.f32 %v4022, %v4023
    %v4025 = vand.u32 %v4024, 4294901760
    %4026 = vmatprep.subr.mxu0 %v4025
    %v4027 = vand.u32 %v3148, 4294901760
    %v4028 = vsub.f32 %v3148, %v4027
    %v4029 = vand.u32 %v4028, 4294901760
    %v4030 = vsub.f32 %v4028, %v4029
    %v4031 = vand.u32 %v4030, 4294901760
    %4032 = vmatpush1.msra.mxu0 %v4031
    %v4033 = vand.u32 %v3157, 4294901760
    %v4034 = vsub.f32 %v3157, %v4033
    %v4035 = vand.u32 %v4034, 4294901760
    %v4036 = vsub.f32 %v4034, %v4035
    %v4037 = vand.u32 %v4036, 4294901760
    %4038 = vmatprep.subr.mxu0 %v4037
    %v4039 = vand.u32 %v3156, 4294901760
    %v4040 = vsub.f32 %v3156, %v4039
    %v4041 = vand.u32 %v4040, 4294901760
    %v4042 = vsub.f32 %v4040, %v4041
    %v4043 = vand.u32 %v4042, 4294901760
    %4044 = vmatpush1.msra.mxu0 %v4043
    %v4045 = vand.u32 %v3165, 4294901760
    %v4046 = vsub.f32 %v3165, %v4045
    %v4047 = vand.u32 %v4046, 4294901760
    %v4048 = vsub.f32 %v4046, %v4047
    %v4049 = vand.u32 %v4048, 4294901760
    %4050 = vmatprep.subr.mxu0 %v4049
    %v4051 = vand.u32 %v3164, 4294901760
    %v4052 = vsub.f32 %v3164, %v4051
    %v4053 = vand.u32 %v4052, 4294901760
    %v4054 = vsub.f32 %v4052, %v4053
    %v4055 = vand.u32 %v4054, 4294901760
    %4056 = vmatpush1.msra.mxu0 %v4055
    %4057 = vmatprep.subr.mxu0 0.0
    %4058 = vmatpush1.msra.mxu0 0.0
    %4059 = vmatprep.subr.mxu0 0.0
    %4060 = vmatpush1.msra.mxu0 0.0
    %4061 = vmatprep.subr.mxu0 0.0
    %4062 = vmatpush1.msra.mxu0 0.0
    %4063 = vmatprep.subr.mxu0 0.0
    %4064 = vmatpush1.msra.mxu0 0.0
    %4065 = vmatprep.subr.mxu0 0.0
    %4066 = vmatpush1.msra.mxu0 0.0
    %4067 = vmatprep.subr.mxu0 0.0
    %4068 = vmatpush1.msra.mxu0 0.0
    %4069 = vmatprep.subr.mxu0 0.0
    %4070 = vmatpush1.msra.mxu0 0.0
    %4071 = vmatprep.subr.mxu0 0.0
    %4072 = vmatpush1.msra.mxu0 0.0
    %4073 = vmatprep.subr.mxu0 0.0
    %4074 = vmatpush1.msra.mxu0 0.0
    %4075 = vmatprep.subr.mxu0 0.0
    %4076 = vmatpush1.msra.mxu0 0.0
    %4077 = vmatprep.subr.mxu0 0.0
    %4078 = vmatpush1.msra.mxu0 0.0
    %4079 = vmatprep.subr.mxu0 0.0
    %4080 = vmatpush1.msra.mxu0 0.0
    %4081 = vmatprep.subr.mxu0 0.0
    %4082 = vmatpush1.msra.mxu0 0.0
    %4083 = vmatprep.subr.mxu0 0.0
    %4084 = vmatpush1.msra.mxu0 0.0
    %4085 = vmatprep.subr.mxu0 0.0
    %4086 = vmatpush1.msra.mxu0 0.0
    %4087 = vmatprep.subr.mxu0 0.0
    %4088 = vmatpush1.msra.mxu0 0.0
    %4089 = vmatprep.subr.mxu0 0.0
    %4090 = vmatpush1.msra.mxu0 0.0
    %4091 = vmatprep.subr.mxu0 0.0
    %4092 = vmatpush1.msra.mxu0 0.0
    %4093 = vmatprep.subr.mxu0 0.0
    %4094 = vmatpush1.msra.mxu0 0.0
    %4095 = vmatprep.subr.mxu0 0.0
    %4096 = vmatpush1.msra.mxu0 0.0
    %4097 = vmatprep.subr.mxu0 0.0
    %4098 = vmatpush1.msra.mxu0 0.0
    %4099 = vmatprep.subr.mxu0 0.0
    %4100 = vmatpush1.msra.mxu0 0.0
    %4101 = vmatprep.subr.mxu0 0.0
    %4102 = vmatpush1.msra.mxu0 0.0
    %4103 = vmatprep.subr.mxu0 0.0
    %4104 = vmatpush1.msra.mxu0 0.0
    %4105 = vmatprep.subr.mxu0 0.0
    %4106 = vmatpush1.msra.mxu0 0.0
    %4107 = vmatprep.subr.mxu0 0.0
    %4108 = vmatpush1.msra.mxu0 0.0
    %4109 = vmatprep.subr.mxu0 0.0
    %4110 = vmatpush1.msra.mxu0 0.0
    %4111 = vmatprep.subr.mxu0 0.0
    %4112 = vmatpush1.msra.mxu0 0.0
    %4113 = vmatprep.mubr.f32.mxu0 0.0
    %v4114 = vand.u32 %v3194, 4294901760
    %4115 = vmatmul.mubr.f32.gmra.mrb[0].mxu0 %v4114
    %v4116 = vpop.f32.mrb[0].mxu0
    %v4117 = vadd.f32 %v3972, %v4116
    %v4118 = vpop.f32.mrb[0].mxu0
    %v4119 = vadd.f32 %v3974, %v4118
    %4120 = vmatprep.mubr.f32.mxu0 0.0
    %v4121 = vand.u32 %v3196, 4294901760
    %4122 = vmatmul.mubr.f32.gmra.mrb[0].mxu0 %v4121
    %v4123 = vpop.f32.mrb[0].mxu0
    %v4124 = vadd.f32 %v3983, %v4123
    %v4125 = vpop.f32.mrb[0].mxu0
    %v4126 = vadd.f32 %v3985, %v4125
    %4127 = vmatprep.mubr.f32.mxu0 0.0
    %v4128 = vand.u32 %v3198, 4294901760
    %4129 = vmatmul.mubr.f32.gmra.mrb[0].mxu0 %v4128
    %v4130 = vpop.f32.mrb[0].mxu0
    %v4131 = vadd.f32 %v3994, %v4130
    %v4132 = vpop.f32.mrb[0].mxu0
    %v4133 = vadd.f32 %v3996, %v4132
    %4134 = vmatprep.mubr.f32.mxu0 0.0
    %v4135 = vand.u32 %v3200, 4294901760
    %4136 = vmatmul.mubr.f32.gmra.mrb[0].mxu0 %v4135
    %v4137 = vpop.f32.mrb[0].mxu0
    %v4138 = vadd.f32 %v4005, %v4137
    %v4139 = vpop.f32.mrb[0].mxu0
    %v4140 = vadd.f32 %v4007, %v4139
    %4141 = vdwg.mxu0
    %v4142 = vand.u32 %v3141, 4294901760
    %v4143 = vsub.f32 %v3141, %v4142
    %4144 = vmatprep.subr.mxu0 %v4143
    %v4145 = vand.u32 %v3140, 4294901760
    %v4146 = vsub.f32 %v3140, %v4145
    %4147 = vmatpush1.msra.mxu0 %v4146
    %v4148 = vand.u32 %v3149, 4294901760
    %v4149 = vsub.f32 %v3149, %v4148
    %4150 = vmatprep.subr.mxu0 %v4149
    %v4151 = vand.u32 %v3148, 4294901760
    %v4152 = vsub.f32 %v3148, %v4151
    %4153 = vmatpush1.msra.mxu0 %v4152
    %v4154 = vand.u32 %v3157, 4294901760
    %v4155 = vsub.f32 %v3157, %v4154
    %4156 = vmatprep.subr.mxu0 %v4155
    %v4157 = vand.u32 %v3156, 4294901760
    %v4158 = vsub.f32 %v3156, %v4157
    %4159 = vmatpush1.msra.mxu0 %v4158
    %v4160 = vand.u32 %v3165, 4294901760
    %v4161 = vsub.f32 %v3165, %v4160
    %4162 = vmatprep.subr.mxu0 %v4161
    %v4163 = vand.u32 %v3164, 4294901760
    %v4164 = vsub.f32 %v3164, %v4163
    %4165 = vmatpush1.msra.mxu0 %v4164
    %4166 = vmatprep.subr.mxu0 0.0
    %4167 = vmatpush1.msra.mxu0 0.0
    %4168 = vmatprep.subr.mxu0 0.0
    %4169 = vmatpush1.msra.mxu0 0.0
    %4170 = vmatprep.subr.mxu0 0.0
    %4171 = vmatpush1.msra.mxu0 0.0
    %4172 = vmatprep.subr.mxu0 0.0
    %4173 = vmatpush1.msra.mxu0 0.0
    %4174 = vmatprep.subr.mxu0 0.0
    %4175 = vmatpush1.msra.mxu0 0.0
    %4176 = vmatprep.subr.mxu0 0.0
    %4177 = vmatpush1.msra.mxu0 0.0
    %4178 = vmatprep.subr.mxu0 0.0
    %4179 = vmatpush1.msra.mxu0 0.0
    %4180 = vmatprep.subr.mxu0 0.0
    %4181 = vmatpush1.msra.mxu0 0.0
    %4182 = vmatprep.subr.mxu0 0.0
    %4183 = vmatpush1.msra.mxu0 0.0
    %4184 = vmatprep.subr.mxu0 0.0
    %4185 = vmatpush1.msra.mxu0 0.0
    %4186 = vmatprep.subr.mxu0 0.0
    %4187 = vmatpush1.msra.mxu0 0.0
    %4188 = vmatprep.subr.mxu0 0.0
    %4189 = vmatpush1.msra.mxu0 0.0
    %4190 = vmatprep.subr.mxu0 0.0
    %4191 = vmatpush1.msra.mxu0 0.0
    %4192 = vmatprep.subr.mxu0 0.0
    %4193 = vmatpush1.msra.mxu0 0.0
    %4194 = vmatprep.subr.mxu0 0.0
    %4195 = vmatpush1.msra.mxu0 0.0
    %4196 = vmatprep.subr.mxu0 0.0
    %4197 = vmatpush1.msra.mxu0 0.0
    %4198 = vmatprep.subr.mxu0 0.0
    %4199 = vmatpush1.msra.mxu0 0.0
    %4200 = vmatprep.subr.mxu0 0.0
    %4201 = vmatpush1.msra.mxu0 0.0
    %4202 = vmatprep.subr.mxu0 0.0
    %4203 = vmatpush1.msra.mxu0 0.0
    %4204 = vmatprep.subr.mxu0 0.0
    %4205 = vmatpush1.msra.mxu0 0.0
    %4206 = vmatprep.subr.mxu0 0.0
    %4207 = vmatpush1.msra.mxu0 0.0
    %4208 = vmatprep.subr.mxu0 0.0
    %4209 = vmatpush1.msra.mxu0 0.0
    %4210 = vmatprep.subr.mxu0 0.0
    %4211 = vmatpush1.msra.mxu0 0.0
    %4212 = vmatprep.subr.mxu0 0.0
    %4213 = vmatpush1.msra.mxu0 0.0
    %4214 = vmatprep.subr.mxu0 0.0
    %4215 = vmatpush1.msra.mxu0 0.0
    %4216 = vmatprep.subr.mxu0 0.0
    %4217 = vmatpush1.msra.mxu0 0.0
    %4218 = vmatprep.subr.mxu0 0.0
    %4219 = vmatpush1.msra.mxu0 0.0
    %4220 = vmatprep.subr.mxu0 0.0
    %4221 = vmatpush1.msra.mxu0 0.0
    %4222 = vmatprep.mubr.f32.mxu0 0.0
    %v4223 = vand.u32 %v3194, 4294901760
    %v4224 = vsub.f32 %v3194, %v4223
    %4225 = vmatmul.mubr.f32.gmra.mrb[0].mxu0 %v4224
    %v4226 = vpop.f32.mrb[0].mxu0
    %v4227 = vadd.f32 %v4117, %v4226
    %v4228 = vpop.f32.mrb[0].mxu0
    %v4229 = vadd.f32 %v4119, %v4228
    %4230 = vmatprep.mubr.f32.mxu0 0.0
    %v4231 = vand.u32 %v3196, 4294901760
    %v4232 = vsub.f32 %v3196, %v4231
    %4233 = vmatmul.mubr.f32.gmra.mrb[0].mxu0 %v4232
    %v4234 = vpop.f32.mrb[0].mxu0
    %v4235 = vadd.f32 %v4124, %v4234
    %v4236 = vpop.f32.mrb[0].mxu0
    %v4237 = vadd.f32 %v4126, %v4236
    %4238 = vmatprep.mubr.f32.mxu0 0.0
    %v4239 = vand.u32 %v3198, 4294901760
    %v4240 = vsub.f32 %v3198, %v4239
    %4241 = vmatmul.mubr.f32.gmra.mrb[0].mxu0 %v4240
    %v4242 = vpop.f32.mrb[0].mxu0
    %v4243 = vadd.f32 %v4131, %v4242
    %v4244 = vpop.f32.mrb[0].mxu0
    %v4245 = vadd.f32 %v4133, %v4244
    %4246 = vmatprep.mubr.f32.mxu0 0.0
    %v4247 = vand.u32 %v3200, 4294901760
    %v4248 = vsub.f32 %v3200, %v4247
    %4249 = vmatmul.mubr.f32.gmra.mrb[0].mxu0 %v4248
    %v4250 = vpop.f32.mrb[0].mxu0
    %v4251 = vadd.f32 %v4138, %v4250
    %v4252 = vpop.f32.mrb[0].mxu0
    %v4253 = vadd.f32 %v4140, %v4252
    %4254 = vdwg.mxu0
    %v4255 = vand.u32 %v3141, 4294901760
    %4256 = vmatprep.subr.mxu0 %v4255
    %v4257 = vand.u32 %v3140, 4294901760
    %4258 = vmatpush1.msra.mxu0 %v4257
    %v4259 = vand.u32 %v3149, 4294901760
    %4260 = vmatprep.subr.mxu0 %v4259
    %v4261 = vand.u32 %v3148, 4294901760
    %4262 = vmatpush1.msra.mxu0 %v4261
    %v4263 = vand.u32 %v3157, 4294901760
    %4264 = vmatprep.subr.mxu0 %v4263
    %v4265 = vand.u32 %v3156, 4294901760
    %4266 = vmatpush1.msra.mxu0 %v4265
    %v4267 = vand.u32 %v3165, 4294901760
    %4268 = vmatprep.subr.mxu0 %v4267
    %v4269 = vand.u32 %v3164, 4294901760
    %4270 = vmatpush1.msra.mxu0 %v4269
    %4271 = vmatprep.subr.mxu0 0.0
    %4272 = vmatpush1.msra.mxu0 0.0
    %4273 = vmatprep.subr.mxu0 0.0
    %4274 = vmatpush1.msra.mxu0 0.0
    %4275 = vmatprep.subr.mxu0 0.0
    %4276 = vmatpush1.msra.mxu0 0.0
    %4277 = vmatprep.subr.mxu0 0.0
    %4278 = vmatpush1.msra.mxu0 0.0
    %4279 = vmatprep.subr.mxu0 0.0
    %4280 = vmatpush1.msra.mxu0 0.0
    %4281 = vmatprep.subr.mxu0 0.0
    %4282 = vmatpush1.msra.mxu0 0.0
    %4283 = vmatprep.subr.mxu0 0.0
    %4284 = vmatpush1.msra.mxu0 0.0
    %4285 = vmatprep.subr.mxu0 0.0
    %4286 = vmatpush1.msra.mxu0 0.0
    %4287 = vmatprep.subr.mxu0 0.0
    %4288 = vmatpush1.msra.mxu0 0.0
    %4289 = vmatprep.subr.mxu0 0.0
    %4290 = vmatpush1.msra.mxu0 0.0
    %4291 = vmatprep.subr.mxu0 0.0
    %4292 = vmatpush1.msra.mxu0 0.0
    %4293 = vmatprep.subr.mxu0 0.0
    %4294 = vmatpush1.msra.mxu0 0.0
    %4295 = vmatprep.subr.mxu0 0.0
    %4296 = vmatpush1.msra.mxu0 0.0
    %4297 = vmatprep.subr.mxu0 0.0
    %4298 = vmatpush1.msra.mxu0 0.0
    %4299 = vmatprep.subr.mxu0 0.0
    %4300 = vmatpush1.msra.mxu0 0.0
    %4301 = vmatprep.subr.mxu0 0.0
    %4302 = vmatpush1.msra.mxu0 0.0
    %4303 = vmatprep.subr.mxu0 0.0
    %4304 = vmatpush1.msra.mxu0 0.0
    %4305 = vmatprep.subr.mxu0 0.0
    %4306 = vmatpush1.msra.mxu0 0.0
    %4307 = vmatprep.subr.mxu0 0.0
    %4308 = vmatpush1.msra.mxu0 0.0
    %4309 = vmatprep.subr.mxu0 0.0
    %4310 = vmatpush1.msra.mxu0 0.0
    %4311 = vmatprep.subr.mxu0 0.0
    %4312 = vmatpush1.msra.mxu0 0.0
    %4313 = vmatprep.subr.mxu0 0.0
    %4314 = vmatpush1.msra.mxu0 0.0
    %4315 = vmatprep.subr.mxu0 0.0
    %4316 = vmatpush1.msra.mxu0 0.0
    %4317 = vmatprep.subr.mxu0 0.0
    %4318 = vmatpush1.msra.mxu0 0.0
    %4319 = vmatprep.subr.mxu0 0.0
    %4320 = vmatpush1.msra.mxu0 0.0
    %4321 = vmatprep.subr.mxu0 0.0
    %4322 = vmatpush1.msra.mxu0 0.0
    %4323 = vmatprep.subr.mxu0 0.0
    %4324 = vmatpush1.msra.mxu0 0.0
    %4325 = vmatprep.subr.mxu0 0.0
    %4326 = vmatpush1.msra.mxu0 0.0
    %4327 = vmatprep.mubr.f32.mxu0 0.0
    %v4328 = vand.u32 %v3194, 4294901760
    %v4329 = vsub.f32 %v3194, %v4328
    %v4330 = vand.u32 %v4329, 4294901760
    %4331 = vmatmul.mubr.f32.gmra.mrb[0].mxu0 %v4330
    %v4332 = vpop.f32.mrb[0].mxu0
    %v4333 = vadd.f32 %v4227, %v4332
    %v4334 = vpop.f32.mrb[0].mxu0
    %v4335 = vadd.f32 %v4229, %v4334
    %4336 = vmatprep.mubr.f32.mxu0 0.0
    %v4337 = vand.u32 %v3196, 4294901760
    %v4338 = vsub.f32 %v3196, %v4337
    %v4339 = vand.u32 %v4338, 4294901760
    %4340 = vmatmul.mubr.f32.gmra.mrb[0].mxu0 %v4339
    %v4341 = vpop.f32.mrb[0].mxu0
    %v4342 = vadd.f32 %v4235, %v4341
    %v4343 = vpop.f32.mrb[0].mxu0
    %v4344 = vadd.f32 %v4237, %v4343
    %4345 = vmatprep.mubr.f32.mxu0 0.0
    %v4346 = vand.u32 %v3198, 4294901760
    %v4347 = vsub.f32 %v3198, %v4346
    %v4348 = vand.u32 %v4347, 4294901760
    %4349 = vmatmul.mubr.f32.gmra.mrb[0].mxu0 %v4348
    %v4350 = vpop.f32.mrb[0].mxu0
    %v4351 = vadd.f32 %v4243, %v4350
    %v4352 = vpop.f32.mrb[0].mxu0
    %v4353 = vadd.f32 %v4245, %v4352
    %4354 = vmatprep.mubr.f32.mxu0 0.0
    %v4355 = vand.u32 %v3200, 4294901760
    %v4356 = vsub.f32 %v3200, %v4355
    %v4357 = vand.u32 %v4356, 4294901760
    %4358 = vmatmul.mubr.f32.gmra.mrb[0].mxu0 %v4357
    %v4359 = vpop.f32.mrb[0].mxu0
    %v4360 = vadd.f32 %v4251, %v4359
    %v4361 = vpop.f32.mrb[0].mxu0
    %v4362 = vadd.f32 %v4253, %v4361
    %4363 = vdwg.mxu0
    %v4364 = vand.u32 %v3141, 4294901760
    %v4365 = vsub.f32 %v3141, %v4364
    %v4366 = vand.u32 %v4365, 4294901760
    %4367 = vmatprep.subr.mxu0 %v4366
    %v4368 = vand.u32 %v3140, 4294901760
    %v4369 = vsub.f32 %v3140, %v4368
    %v4370 = vand.u32 %v4369, 4294901760
    %4371 = vmatpush1.msra.mxu0 %v4370
    %v4372 = vand.u32 %v3149, 4294901760
    %v4373 = vsub.f32 %v3149, %v4372
    %v4374 = vand.u32 %v4373, 4294901760
    %4375 = vmatprep.subr.mxu0 %v4374
    %v4376 = vand.u32 %v3148, 4294901760
    %v4377 = vsub.f32 %v3148, %v4376
    %v4378 = vand.u32 %v4377, 4294901760
    %4379 = vmatpush1.msra.mxu0 %v4378
    %v4380 = vand.u32 %v3157, 4294901760
    %v4381 = vsub.f32 %v3157, %v4380
    %v4382 = vand.u32 %v4381, 4294901760
    %4383 = vmatprep.subr.mxu0 %v4382
    %v4384 = vand.u32 %v3156, 4294901760
    %v4385 = vsub.f32 %v3156, %v4384
    %v4386 = vand.u32 %v4385, 4294901760
    %4387 = vmatpush1.msra.mxu0 %v4386
    %v4388 = vand.u32 %v3165, 4294901760
    %v4389 = vsub.f32 %v3165, %v4388
    %v4390 = vand.u32 %v4389, 4294901760
    %4391 = vmatprep.subr.mxu0 %v4390
    %v4392 = vand.u32 %v3164, 4294901760
    %v4393 = vsub.f32 %v3164, %v4392
    %v4394 = vand.u32 %v4393, 4294901760
    %4395 = vmatpush1.msra.mxu0 %v4394
    %4396 = vmatprep.subr.mxu0 0.0
    %4397 = vmatpush1.msra.mxu0 0.0
    %4398 = vmatprep.subr.mxu0 0.0
    %4399 = vmatpush1.msra.mxu0 0.0
    %4400 = vmatprep.subr.mxu0 0.0
    %4401 = vmatpush1.msra.mxu0 0.0
    %4402 = vmatprep.subr.mxu0 0.0
    %4403 = vmatpush1.msra.mxu0 0.0
    %4404 = vmatprep.subr.mxu0 0.0
    %4405 = vmatpush1.msra.mxu0 0.0
    %4406 = vmatprep.subr.mxu0 0.0
    %4407 = vmatpush1.msra.mxu0 0.0
    %4408 = vmatprep.subr.mxu0 0.0
    %4409 = vmatpush1.msra.mxu0 0.0
    %4410 = vmatprep.subr.mxu0 0.0
    %4411 = vmatpush1.msra.mxu0 0.0
    %4412 = vmatprep.subr.mxu0 0.0
    %4413 = vmatpush1.msra.mxu0 0.0
    %4414 = vmatprep.subr.mxu0 0.0
    %4415 = vmatpush1.msra.mxu0 0.0
    %4416 = vmatprep.subr.mxu0 0.0
    %4417 = vmatpush1.msra.mxu0 0.0
    %4418 = vmatprep.subr.mxu0 0.0
    %4419 = vmatpush1.msra.mxu0 0.0
    %4420 = vmatprep.subr.mxu0 0.0
    %4421 = vmatpush1.msra.mxu0 0.0
    %4422 = vmatprep.subr.mxu0 0.0
    %4423 = vmatpush1.msra.mxu0 0.0
    %4424 = vmatprep.subr.mxu0 0.0
    %4425 = vmatpush1.msra.mxu0 0.0
    %4426 = vmatprep.subr.mxu0 0.0
    %4427 = vmatpush1.msra.mxu0 0.0
    %4428 = vmatprep.subr.mxu0 0.0
    %4429 = vmatpush1.msra.mxu0 0.0
    %4430 = vmatprep.subr.mxu0 0.0
    %4431 = vmatpush1.msra.mxu0 0.0
    %4432 = vmatprep.subr.mxu0 0.0
    %4433 = vmatpush1.msra.mxu0 0.0
    %4434 = vmatprep.subr.mxu0 0.0
    %4435 = vmatpush1.msra.mxu0 0.0
    %4436 = vmatprep.subr.mxu0 0.0
    %4437 = vmatpush1.msra.mxu0 0.0
    %4438 = vmatprep.subr.mxu0 0.0
    %4439 = vmatpush1.msra.mxu0 0.0
    %4440 = vmatprep.subr.mxu0 0.0
    %4441 = vmatpush1.msra.mxu0 0.0
    %4442 = vmatprep.subr.mxu0 0.0
    %4443 = vmatpush1.msra.mxu0 0.0
    %4444 = vmatprep.subr.mxu0 0.0
    %4445 = vmatpush1.msra.mxu0 0.0
    %4446 = vmatprep.subr.mxu0 0.0
    %4447 = vmatpush1.msra.mxu0 0.0
    %4448 = vmatprep.subr.mxu0 0.0
    %4449 = vmatpush1.msra.mxu0 0.0
    %4450 = vmatprep.subr.mxu0 0.0
    %4451 = vmatpush1.msra.mxu0 0.0
    %4452 = vmatprep.mubr.f32.mxu0 0.0
    %v4453 = vand.u32 %v3194, 4294901760
    %4454 = vmatmul.mubr.f32.gmra.mrb[0].mxu0 %v4453
    %v4455 = vpop.f32.mrb[0].mxu0
    %v4456 = vadd.f32 %v4333, %v4455
    %v4457 = vpop.f32.mrb[0].mxu0
    %v4458 = vadd.f32 %v4335, %v4457
    %4459 = vmatprep.mubr.f32.mxu0 0.0
    %v4460 = vand.u32 %v3196, 4294901760
    %4461 = vmatmul.mubr.f32.gmra.mrb[0].mxu0 %v4460
    %v4462 = vpop.f32.mrb[0].mxu0
    %v4463 = vadd.f32 %v4342, %v4462
    %v4464 = vpop.f32.mrb[0].mxu0
    %v4465 = vadd.f32 %v4344, %v4464
    %4466 = vmatprep.mubr.f32.mxu0 0.0
    %v4467 = vand.u32 %v3198, 4294901760
    %4468 = vmatmul.mubr.f32.gmra.mrb[0].mxu0 %v4467
    %v4469 = vpop.f32.mrb[0].mxu0
    %v4470 = vadd.f32 %v4351, %v4469
    %v4471 = vpop.f32.mrb[0].mxu0
    %v4472 = vadd.f32 %v4353, %v4471
    %4473 = vmatprep.mubr.f32.mxu0 0.0
    %v4474 = vand.u32 %v3200, 4294901760
    %4475 = vmatmul.mubr.f32.gmra.mrb[0].mxu0 %v4474
    %v4476 = vpop.f32.mrb[0].mxu0
    %v4477 = vadd.f32 %v4360, %v4476
    %v4478 = vpop.f32.mrb[0].mxu0
    %v4479 = vadd.f32 %v4362, %v4478
    %4480 = vdwg.mxu0
    %v4481 = vand.u32 %v3141, 4294901760
    %4482 = vmatprep.subr.mxu0 %v4481
    %v4483 = vand.u32 %v3140, 4294901760
    %4484 = vmatpush1.msra.mxu0 %v4483
    %v4485 = vand.u32 %v3149, 4294901760
    %4486 = vmatprep.subr.mxu0 %v4485
    %v4487 = vand.u32 %v3148, 4294901760
    %4488 = vmatpush1.msra.mxu0 %v4487
    %v4489 = vand.u32 %v3157, 4294901760
    %4490 = vmatprep.subr.mxu0 %v4489
    %v4491 = vand.u32 %v3156, 4294901760
    %4492 = vmatpush1.msra.mxu0 %v4491
    %v4493 = vand.u32 %v3165, 4294901760
    %4494 = vmatprep.subr.mxu0 %v4493
    %v4495 = vand.u32 %v3164, 4294901760
    %4496 = vmatpush1.msra.mxu0 %v4495
    %4497 = vmatprep.subr.mxu0 0.0
    %4498 = vmatpush1.msra.mxu0 0.0
    %4499 = vmatprep.subr.mxu0 0.0
    %4500 = vmatpush1.msra.mxu0 0.0
    %4501 = vmatprep.subr.mxu0 0.0
    %4502 = vmatpush1.msra.mxu0 0.0
    %4503 = vmatprep.subr.mxu0 0.0
    %4504 = vmatpush1.msra.mxu0 0.0
    %4505 = vmatprep.subr.mxu0 0.0
    %4506 = vmatpush1.msra.mxu0 0.0
    %4507 = vmatprep.subr.mxu0 0.0
    %4508 = vmatpush1.msra.mxu0 0.0
    %4509 = vmatprep.subr.mxu0 0.0
    %4510 = vmatpush1.msra.mxu0 0.0
    %4511 = vmatprep.subr.mxu0 0.0
    %4512 = vmatpush1.msra.mxu0 0.0
    %4513 = vmatprep.subr.mxu0 0.0
    %4514 = vmatpush1.msra.mxu0 0.0
    %4515 = vmatprep.subr.mxu0 0.0
    %4516 = vmatpush1.msra.mxu0 0.0
    %4517 = vmatprep.subr.mxu0 0.0
    %4518 = vmatpush1.msra.mxu0 0.0
    %4519 = vmatprep.subr.mxu0 0.0
    %4520 = vmatpush1.msra.mxu0 0.0
    %4521 = vmatprep.subr.mxu0 0.0
    %4522 = vmatpush1.msra.mxu0 0.0
    %4523 = vmatprep.subr.mxu0 0.0
    %4524 = vmatpush1.msra.mxu0 0.0
    %4525 = vmatprep.subr.mxu0 0.0
    %4526 = vmatpush1.msra.mxu0 0.0
    %4527 = vmatprep.subr.mxu0 0.0
    %4528 = vmatpush1.msra.mxu0 0.0
    %4529 = vmatprep.subr.mxu0 0.0
    %4530 = vmatpush1.msra.mxu0 0.0
    %4531 = vmatprep.subr.mxu0 0.0
    %4532 = vmatpush1.msra.mxu0 0.0
    %4533 = vmatprep.subr.mxu0 0.0
    %4534 = vmatpush1.msra.mxu0 0.0
    %4535 = vmatprep.subr.mxu0 0.0
    %4536 = vmatpush1.msra.mxu0 0.0
    %4537 = vmatprep.subr.mxu0 0.0
    %4538 = vmatpush1.msra.mxu0 0.0
    %4539 = vmatprep.subr.mxu0 0.0
    %4540 = vmatpush1.msra.mxu0 0.0
    %4541 = vmatprep.subr.mxu0 0.0
    %4542 = vmatpush1.msra.mxu0 0.0
    %4543 = vmatprep.subr.mxu0 0.0
    %4544 = vmatpush1.msra.mxu0 0.0
    %4545 = vmatprep.subr.mxu0 0.0
    %4546 = vmatpush1.msra.mxu0 0.0
    %4547 = vmatprep.subr.mxu0 0.0
    %4548 = vmatpush1.msra.mxu0 0.0
    %4549 = vmatprep.subr.mxu0 0.0
    %4550 = vmatpush1.msra.mxu0 0.0
    %4551 = vmatprep.subr.mxu0 0.0
    %4552 = vmatpush1.msra.mxu0 0.0
    %4553 = vmatprep.mubr.f32.mxu0 0.0
    %v4554 = vand.u32 %v3194, 4294901760
    %4555 = vmatmul.mubr.f32.gmra.mrb[0].mxu0 %v4554
    %v4556 = vpop.f32.mrb[0].mxu0
    %v4557 = vadd.f32 %v4456, %v4556
    %v4558 = vpop.f32.mrb[0].mxu0
    %v4559 = vadd.f32 %v4458, %v4558
    %4560 = vmatprep.mubr.f32.mxu0 0.0
    %v4561 = vand.u32 %v3196, 4294901760
    %4562 = vmatmul.mubr.f32.gmra.mrb[0].mxu0 %v4561
    %v4563 = vpop.f32.mrb[0].mxu0
    %v4564 = vadd.f32 %v4463, %v4563
    %v4565 = vpop.f32.mrb[0].mxu0
    %v4566 = vadd.f32 %v4465, %v4565
    %4567 = vmatprep.mubr.f32.mxu0 0.0
    %v4568 = vand.u32 %v3198, 4294901760
    %4569 = vmatmul.mubr.f32.gmra.mrb[0].mxu0 %v4568
    %v4570 = vpop.f32.mrb[0].mxu0
    %v4571 = vadd.f32 %v4470, %v4570
    %v4572 = vpop.f32.mrb[0].mxu0
    %v4573 = vadd.f32 %v4472, %v4572
    %4574 = vmatprep.mubr.f32.mxu0 0.0
    %v4575 = vand.u32 %v3200, 4294901760
    %4576 = vmatmul.mubr.f32.gmra.mrb[0].mxu0 %v4575
    %v4577 = vpop.f32.mrb[0].mxu0
    %v4578 = vadd.f32 %v4477, %v4577
    %v4579 = vpop.f32.mrb[0].mxu0
    %v4580 = vadd.f32 %v4479, %v4579
    %4581 = vdwg.mxu0
    %v4582 = vand.u32 %v3143, 4294901760
    %4583 = vmatprep.subr.mxu0 %v4582
    %v4584 = vand.u32 %v3142, 4294901760
    %4585 = vmatpush1.msra.mxu0 %v4584
    %v4586 = vand.u32 %v3151, 4294901760
    %4587 = vmatprep.subr.mxu0 %v4586
    %v4588 = vand.u32 %v3150, 4294901760
    %4589 = vmatpush1.msra.mxu0 %v4588
    %v4590 = vand.u32 %v3159, 4294901760
    %4591 = vmatprep.subr.mxu0 %v4590
    %v4592 = vand.u32 %v3158, 4294901760
    %4593 = vmatpush1.msra.mxu0 %v4592
    %v4594 = vand.u32 %v3167, 4294901760
    %4595 = vmatprep.subr.mxu0 %v4594
    %v4596 = vand.u32 %v3166, 4294901760
    %4597 = vmatpush1.msra.mxu0 %v4596
    %4598 = vmatprep.subr.mxu0 0.0
    %4599 = vmatpush1.msra.mxu0 0.0
    %4600 = vmatprep.subr.mxu0 0.0
    %4601 = vmatpush1.msra.mxu0 0.0
    %4602 = vmatprep.subr.mxu0 0.0
    %4603 = vmatpush1.msra.mxu0 0.0
    %4604 = vmatprep.subr.mxu0 0.0
    %4605 = vmatpush1.msra.mxu0 0.0
    %4606 = vmatprep.subr.mxu0 0.0
    %4607 = vmatpush1.msra.mxu0 0.0
    %4608 = vmatprep.subr.mxu0 0.0
    %4609 = vmatpush1.msra.mxu0 0.0
    %4610 = vmatprep.subr.mxu0 0.0
    %4611 = vmatpush1.msra.mxu0 0.0
    %4612 = vmatprep.subr.mxu0 0.0
    %4613 = vmatpush1.msra.mxu0 0.0
    %4614 = vmatprep.subr.mxu0 0.0
    %4615 = vmatpush1.msra.mxu0 0.0
    %4616 = vmatprep.subr.mxu0 0.0
    %4617 = vmatpush1.msra.mxu0 0.0
    %4618 = vmatprep.subr.mxu0 0.0
    %4619 = vmatpush1.msra.mxu0 0.0
    %4620 = vmatprep.subr.mxu0 0.0
    %4621 = vmatpush1.msra.mxu0 0.0
    %4622 = vmatprep.subr.mxu0 0.0
    %4623 = vmatpush1.msra.mxu0 0.0
    %4624 = vmatprep.subr.mxu0 0.0
    %4625 = vmatpush1.msra.mxu0 0.0
    %4626 = vmatprep.subr.mxu0 0.0
    %4627 = vmatpush1.msra.mxu0 0.0
    %4628 = vmatprep.subr.mxu0 0.0
    %4629 = vmatpush1.msra.mxu0 0.0
    %4630 = vmatprep.subr.mxu0 0.0
    %4631 = vmatpush1.msra.mxu0 0.0
    %4632 = vmatprep.subr.mxu0 0.0
    %4633 = vmatpush1.msra.mxu0 0.0
    %4634 = vmatprep.subr.mxu0 0.0
    %4635 = vmatpush1.msra.mxu0 0.0
    %4636 = vmatprep.subr.mxu0 0.0
    %4637 = vmatpush1.msra.mxu0 0.0
    %4638 = vmatprep.subr.mxu0 0.0
    %4639 = vmatpush1.msra.mxu0 0.0
    %4640 = vmatprep.subr.mxu0 0.0
    %4641 = vmatpush1.msra.mxu0 0.0
    %4642 = vmatprep.subr.mxu0 0.0
    %4643 = vmatpush1.msra.mxu0 0.0
    %4644 = vmatprep.subr.mxu0 0.0
    %4645 = vmatpush1.msra.mxu0 0.0
    %4646 = vmatprep.subr.mxu0 0.0
    %4647 = vmatpush1.msra.mxu0 0.0
    %4648 = vmatprep.subr.mxu0 0.0
    %4649 = vmatpush1.msra.mxu0 0.0
    %4650 = vmatprep.subr.mxu0 0.0
    %4651 = vmatpush1.msra.mxu0 0.0
    %4652 = vmatprep.subr.mxu0 0.0
    %4653 = vmatpush1.msra.mxu0 0.0
    %4654 = vmatprep.mubr.f32.mxu0 0.0
    %v4655 = vand.u32 %v3194, 4294901760
    %v4656 = vsub.f32 %v3194, %v4655
    %v4657 = vand.u32 %v4656, 4294901760
    %v4658 = vsub.f32 %v4656, %v4657
    %v4659 = vand.u32 %v4658, 4294901760
    %4660 = vmatmul.mubr.f32.gmra.mrb[0].mxu0 %v4659
    %v4661 = vpop.f32.mrb[0].mxu0
    %v4662 = vadd.f32 %v3172, %v4661
    %v4663 = vpop.f32.mrb[0].mxu0
    %v4664 = vadd.f32 %v3172, %v4663
    %4665 = vmatprep.mubr.f32.mxu0 0.0
    %v4666 = vand.u32 %v3196, 4294901760
    %v4667 = vsub.f32 %v3196, %v4666
    %v4668 = vand.u32 %v4667, 4294901760
    %v4669 = vsub.f32 %v4667, %v4668
    %v4670 = vand.u32 %v4669, 4294901760
    %4671 = vmatmul.mubr.f32.gmra.mrb[0].mxu0 %v4670
    %v4672 = vpop.f32.mrb[0].mxu0
    %v4673 = vadd.f32 %v3176, %v4672
    %v4674 = vpop.f32.mrb[0].mxu0
    %v4675 = vadd.f32 %v3176, %v4674
    %4676 = vmatprep.mubr.f32.mxu0 0.0
    %v4677 = vand.u32 %v3198, 4294901760
    %v4678 = vsub.f32 %v3198, %v4677
    %v4679 = vand.u32 %v4678, 4294901760
    %v4680 = vsub.f32 %v4678, %v4679
    %v4681 = vand.u32 %v4680, 4294901760
    %4682 = vmatmul.mubr.f32.gmra.mrb[0].mxu0 %v4681
    %v4683 = vpop.f32.mrb[0].mxu0
    %v4684 = vadd.f32 %v3180, %v4683
    %v4685 = vpop.f32.mrb[0].mxu0
    %v4686 = vadd.f32 %v3180, %v4685
    %4687 = vmatprep.mubr.f32.mxu0 0.0
    %v4688 = vand.u32 %v3200, 4294901760
    %v4689 = vsub.f32 %v3200, %v4688
    %v4690 = vand.u32 %v4689, 4294901760
    %v4691 = vsub.f32 %v4689, %v4690
    %v4692 = vand.u32 %v4691, 4294901760
    %4693 = vmatmul.mubr.f32.gmra.mrb[0].mxu0 %v4692
    %v4694 = vpop.f32.mrb[0].mxu0
    %v4695 = vadd.f32 %v3184, %v4694
    %v4696 = vpop.f32.mrb[0].mxu0
    %v4697 = vadd.f32 %v3184, %v4696
    %4698 = vdwg.mxu0
    %v4699 = vand.u32 %v3143, 4294901760
    %v4700 = vsub.f32 %v3143, %v4699
    %v4701 = vand.u32 %v4700, 4294901760
    %v4702 = vsub.f32 %v4700, %v4701
    %v4703 = vand.u32 %v4702, 4294901760
    %4704 = vmatprep.subr.mxu0 %v4703
    %v4705 = vand.u32 %v3142, 4294901760
    %v4706 = vsub.f32 %v3142, %v4705
    %v4707 = vand.u32 %v4706, 4294901760
    %v4708 = vsub.f32 %v4706, %v4707
    %v4709 = vand.u32 %v4708, 4294901760
    %4710 = vmatpush1.msra.mxu0 %v4709
    %v4711 = vand.u32 %v3151, 4294901760
    %v4712 = vsub.f32 %v3151, %v4711
    %v4713 = vand.u32 %v4712, 4294901760
    %v4714 = vsub.f32 %v4712, %v4713
    %v4715 = vand.u32 %v4714, 4294901760
    %4716 = vmatprep.subr.mxu0 %v4715
    %v4717 = vand.u32 %v3150, 4294901760
    %v4718 = vsub.f32 %v3150, %v4717
    %v4719 = vand.u32 %v4718, 4294901760
    %v4720 = vsub.f32 %v4718, %v4719
    %v4721 = vand.u32 %v4720, 4294901760
    %4722 = vmatpush1.msra.mxu0 %v4721
    %v4723 = vand.u32 %v3159, 4294901760
    %v4724 = vsub.f32 %v3159, %v4723
    %v4725 = vand.u32 %v4724, 4294901760
    %v4726 = vsub.f32 %v4724, %v4725
    %v4727 = vand.u32 %v4726, 4294901760
    %4728 = vmatprep.subr.mxu0 %v4727
    %v4729 = vand.u32 %v3158, 4294901760
    %v4730 = vsub.f32 %v3158, %v4729
    %v4731 = vand.u32 %v4730, 4294901760
    %v4732 = vsub.f32 %v4730, %v4731
    %v4733 = vand.u32 %v4732, 4294901760
    %4734 = vmatpush1.msra.mxu0 %v4733
    %v4735 = vand.u32 %v3167, 4294901760
    %v4736 = vsub.f32 %v3167, %v4735
    %v4737 = vand.u32 %v4736, 4294901760
    %v4738 = vsub.f32 %v4736, %v4737
    %v4739 = vand.u32 %v4738, 4294901760
    %4740 = vmatprep.subr.mxu0 %v4739
    %v4741 = vand.u32 %v3166, 4294901760
    %v4742 = vsub.f32 %v3166, %v4741
    %v4743 = vand.u32 %v4742, 4294901760
    %v4744 = vsub.f32 %v4742, %v4743
    %v4745 = vand.u32 %v4744, 4294901760
    %4746 = vmatpush1.msra.mxu0 %v4745
    %4747 = vmatprep.subr.mxu0 0.0
    %4748 = vmatpush1.msra.mxu0 0.0
    %4749 = vmatprep.subr.mxu0 0.0
    %4750 = vmatpush1.msra.mxu0 0.0
    %4751 = vmatprep.subr.mxu0 0.0
    %4752 = vmatpush1.msra.mxu0 0.0
    %4753 = vmatprep.subr.mxu0 0.0
    %4754 = vmatpush1.msra.mxu0 0.0
    %4755 = vmatprep.subr.mxu0 0.0
    %4756 = vmatpush1.msra.mxu0 0.0
    %4757 = vmatprep.subr.mxu0 0.0
    %4758 = vmatpush1.msra.mxu0 0.0
    %4759 = vmatprep.subr.mxu0 0.0
    %4760 = vmatpush1.msra.mxu0 0.0
    %4761 = vmatprep.subr.mxu0 0.0
    %4762 = vmatpush1.msra.mxu0 0.0
    %4763 = vmatprep.subr.mxu0 0.0
    %4764 = vmatpush1.msra.mxu0 0.0
    %4765 = vmatprep.subr.mxu0 0.0
    %4766 = vmatpush1.msra.mxu0 0.0
    %4767 = vmatprep.subr.mxu0 0.0
    %4768 = vmatpush1.msra.mxu0 0.0
    %4769 = vmatprep.subr.mxu0 0.0
    %4770 = vmatpush1.msra.mxu0 0.0
    %4771 = vmatprep.subr.mxu0 0.0
    %4772 = vmatpush1.msra.mxu0 0.0
    %4773 = vmatprep.subr.mxu0 0.0
    %4774 = vmatpush1.msra.mxu0 0.0
    %4775 = vmatprep.subr.mxu0 0.0
    %4776 = vmatpush1.msra.mxu0 0.0
    %4777 = vmatprep.subr.mxu0 0.0
    %4778 = vmatpush1.msra.mxu0 0.0
    %4779 = vmatprep.subr.mxu0 0.0
    %4780 = vmatpush1.msra.mxu0 0.0
    %4781 = vmatprep.subr.mxu0 0.0
    %4782 = vmatpush1.msra.mxu0 0.0
    %4783 = vmatprep.subr.mxu0 0.0
    %4784 = vmatpush1.msra.mxu0 0.0
    %4785 = vmatprep.subr.mxu0 0.0
    %4786 = vmatpush1.msra.mxu0 0.0
    %4787 = vmatprep.subr.mxu0 0.0
    %4788 = vmatpush1.msra.mxu0 0.0
    %4789 = vmatprep.subr.mxu0 0.0
    %4790 = vmatpush1.msra.mxu0 0.0
    %4791 = vmatprep.subr.mxu0 0.0
    %4792 = vmatpush1.msra.mxu0 0.0
    %4793 = vmatprep.subr.mxu0 0.0
    %4794 = vmatpush1.msra.mxu0 0.0
    %4795 = vmatprep.subr.mxu0 0.0
    %4796 = vmatpush1.msra.mxu0 0.0
    %4797 = vmatprep.subr.mxu0 0.0
    %4798 = vmatpush1.msra.mxu0 0.0
    %4799 = vmatprep.subr.mxu0 0.0
    %4800 = vmatpush1.msra.mxu0 0.0
    %4801 = vmatprep.subr.mxu0 0.0
    %4802 = vmatpush1.msra.mxu0 0.0
    %4803 = vmatprep.mubr.f32.mxu0 0.0
    %v4804 = vand.u32 %v3194, 4294901760
    %4805 = vmatmul.mubr.f32.gmra.mrb[0].mxu0 %v4804
    %v4806 = vpop.f32.mrb[0].mxu0
    %v4807 = vadd.f32 %v4662, %v4806
    %v4808 = vpop.f32.mrb[0].mxu0
    %v4809 = vadd.f32 %v4664, %v4808
    %4810 = vmatprep.mubr.f32.mxu0 0.0
    %v4811 = vand.u32 %v3196, 4294901760
    %4812 = vmatmul.mubr.f32.gmra.mrb[0].mxu0 %v4811
    %v4813 = vpop.f32.mrb[0].mxu0
    %v4814 = vadd.f32 %v4673, %v4813
    %v4815 = vpop.f32.mrb[0].mxu0
    %v4816 = vadd.f32 %v4675, %v4815
    %4817 = vmatprep.mubr.f32.mxu0 0.0
    %v4818 = vand.u32 %v3198, 4294901760
    %4819 = vmatmul.mubr.f32.gmra.mrb[0].mxu0 %v4818
    %v4820 = vpop.f32.mrb[0].mxu0
    %v4821 = vadd.f32 %v4684, %v4820
    %v4822 = vpop.f32.mrb[0].mxu0
    %v4823 = vadd.f32 %v4686, %v4822
    %4824 = vmatprep.mubr.f32.mxu0 0.0
    %v4825 = vand.u32 %v3200, 4294901760
    %4826 = vmatmul.mubr.f32.gmra.mrb[0].mxu0 %v4825
    %v4827 = vpop.f32.mrb[0].mxu0
    %v4828 = vadd.f32 %v4695, %v4827
    %v4829 = vpop.f32.mrb[0].mxu0
    %v4830 = vadd.f32 %v4697, %v4829
    %4831 = vdwg.mxu0
    %v4832 = vand.u32 %v3143, 4294901760
    %v4833 = vsub.f32 %v3143, %v4832
    %4834 = vmatprep.subr.mxu0 %v4833
    %v4835 = vand.u32 %v3142, 4294901760
    %v4836 = vsub.f32 %v3142, %v4835
    %4837 = vmatpush1.msra.mxu0 %v4836
    %v4838 = vand.u32 %v3151, 4294901760
    %v4839 = vsub.f32 %v3151, %v4838
    %4840 = vmatprep.subr.mxu0 %v4839
    %v4841 = vand.u32 %v3150, 4294901760
    %v4842 = vsub.f32 %v3150, %v4841
    %4843 = vmatpush1.msra.mxu0 %v4842
    %v4844 = vand.u32 %v3159, 4294901760
    %v4845 = vsub.f32 %v3159, %v4844
    %4846 = vmatprep.subr.mxu0 %v4845
    %v4847 = vand.u32 %v3158, 4294901760
    %v4848 = vsub.f32 %v3158, %v4847
    %4849 = vmatpush1.msra.mxu0 %v4848
    %v4850 = vand.u32 %v3167, 4294901760
    %v4851 = vsub.f32 %v3167, %v4850
    %4852 = vmatprep.subr.mxu0 %v4851
    %v4853 = vand.u32 %v3166, 4294901760
    %v4854 = vsub.f32 %v3166, %v4853
    %4855 = vmatpush1.msra.mxu0 %v4854
    %4856 = vmatprep.subr.mxu0 0.0
    %4857 = vmatpush1.msra.mxu0 0.0
    %4858 = vmatprep.subr.mxu0 0.0
    %4859 = vmatpush1.msra.mxu0 0.0
    %4860 = vmatprep.subr.mxu0 0.0
    %4861 = vmatpush1.msra.mxu0 0.0
    %4862 = vmatprep.subr.mxu0 0.0
    %4863 = vmatpush1.msra.mxu0 0.0
    %4864 = vmatprep.subr.mxu0 0.0
    %4865 = vmatpush1.msra.mxu0 0.0
    %4866 = vmatprep.subr.mxu0 0.0
    %4867 = vmatpush1.msra.mxu0 0.0
    %4868 = vmatprep.subr.mxu0 0.0
    %4869 = vmatpush1.msra.mxu0 0.0
    %4870 = vmatprep.subr.mxu0 0.0
    %4871 = vmatpush1.msra.mxu0 0.0
    %4872 = vmatprep.subr.mxu0 0.0
    %4873 = vmatpush1.msra.mxu0 0.0
    %4874 = vmatprep.subr.mxu0 0.0
    %4875 = vmatpush1.msra.mxu0 0.0
    %4876 = vmatprep.subr.mxu0 0.0
    %4877 = vmatpush1.msra.mxu0 0.0
    %4878 = vmatprep.subr.mxu0 0.0
    %4879 = vmatpush1.msra.mxu0 0.0
    %4880 = vmatprep.subr.mxu0 0.0
    %4881 = vmatpush1.msra.mxu0 0.0
    %4882 = vmatprep.subr.mxu0 0.0
    %4883 = vmatpush1.msra.mxu0 0.0
    %4884 = vmatprep.subr.mxu0 0.0
    %4885 = vmatpush1.msra.mxu0 0.0
    %4886 = vmatprep.subr.mxu0 0.0
    %4887 = vmatpush1.msra.mxu0 0.0
    %4888 = vmatprep.subr.mxu0 0.0
    %4889 = vmatpush1.msra.mxu0 0.0
    %4890 = vmatprep.subr.mxu0 0.0
    %4891 = vmatpush1.msra.mxu0 0.0
    %4892 = vmatprep.subr.mxu0 0.0
    %4893 = vmatpush1.msra.mxu0 0.0
    %4894 = vmatprep.subr.mxu0 0.0
    %4895 = vmatpush1.msra.mxu0 0.0
    %4896 = vmatprep.subr.mxu0 0.0
    %4897 = vmatpush1.msra.mxu0 0.0
    %4898 = vmatprep.subr.mxu0 0.0
    %4899 = vmatpush1.msra.mxu0 0.0
    %4900 = vmatprep.subr.mxu0 0.0
    %4901 = vmatpush1.msra.mxu0 0.0
    %4902 = vmatprep.subr.mxu0 0.0
    %4903 = vmatpush1.msra.mxu0 0.0
    %4904 = vmatprep.subr.mxu0 0.0
    %4905 = vmatpush1.msra.mxu0 0.0
    %4906 = vmatprep.subr.mxu0 0.0
    %4907 = vmatpush1.msra.mxu0 0.0
    %4908 = vmatprep.subr.mxu0 0.0
    %4909 = vmatpush1.msra.mxu0 0.0
    %4910 = vmatprep.subr.mxu0 0.0
    %4911 = vmatpush1.msra.mxu0 0.0
    %4912 = vmatprep.mubr.f32.mxu0 0.0
    %v4913 = vand.u32 %v3194, 4294901760
    %v4914 = vsub.f32 %v3194, %v4913
    %4915 = vmatmul.mubr.f32.gmra.mrb[0].mxu0 %v4914
    %v4916 = vpop.f32.mrb[0].mxu0
    %v4917 = vadd.f32 %v4807, %v4916
    %v4918 = vpop.f32.mrb[0].mxu0
    %v4919 = vadd.f32 %v4809, %v4918
    %4920 = vmatprep.mubr.f32.mxu0 0.0
    %v4921 = vand.u32 %v3196, 4294901760
    %v4922 = vsub.f32 %v3196, %v4921
    %4923 = vmatmul.mubr.f32.gmra.mrb[0].mxu0 %v4922
    %v4924 = vpop.f32.mrb[0].mxu0
    %v4925 = vadd.f32 %v4814, %v4924
    %v4926 = vpop.f32.mrb[0].mxu0
    %v4927 = vadd.f32 %v4816, %v4926
    %4928 = vmatprep.mubr.f32.mxu0 0.0
    %v4929 = vand.u32 %v3198, 4294901760
    %v4930 = vsub.f32 %v3198, %v4929
    %4931 = vmatmul.mubr.f32.gmra.mrb[0].mxu0 %v4930
    %v4932 = vpop.f32.mrb[0].mxu0
    %v4933 = vadd.f32 %v4821, %v4932
    %v4934 = vpop.f32.mrb[0].mxu0
    %v4935 = vadd.f32 %v4823, %v4934
    %4936 = vmatprep.mubr.f32.mxu0 0.0
    %v4937 = vand.u32 %v3200, 4294901760
    %v4938 = vsub.f32 %v3200, %v4937
    %4939 = vmatmul.mubr.f32.gmra.mrb[0].mxu0 %v4938
    %v4940 = vpop.f32.mrb[0].mxu0
    %v4941 = vadd.f32 %v4828, %v4940
    %v4942 = vpop.f32.mrb[0].mxu0
    %v4943 = vadd.f32 %v4830, %v4942
    %4944 = vdwg.mxu0
    %v4945 = vand.u32 %v3143, 4294901760
    %4946 = vmatprep.subr.mxu0 %v4945
    %v4947 = vand.u32 %v3142, 4294901760
    %4948 = vmatpush1.msra.mxu0 %v4947
    %v4949 = vand.u32 %v3151, 4294901760
    %4950 = vmatprep.subr.mxu0 %v4949
    %v4951 = vand.u32 %v3150, 4294901760
    %4952 = vmatpush1.msra.mxu0 %v4951
    %v4953 = vand.u32 %v3159, 4294901760
    %4954 = vmatprep.subr.mxu0 %v4953
    %v4955 = vand.u32 %v3158, 4294901760
    %4956 = vmatpush1.msra.mxu0 %v4955
    %v4957 = vand.u32 %v3167, 4294901760
    %4958 = vmatprep.subr.mxu0 %v4957
    %v4959 = vand.u32 %v3166, 4294901760
    %4960 = vmatpush1.msra.mxu0 %v4959
    %4961 = vmatprep.subr.mxu0 0.0
    %4962 = vmatpush1.msra.mxu0 0.0
    %4963 = vmatprep.subr.mxu0 0.0
    %4964 = vmatpush1.msra.mxu0 0.0
    %4965 = vmatprep.subr.mxu0 0.0
    %4966 = vmatpush1.msra.mxu0 0.0
    %4967 = vmatprep.subr.mxu0 0.0
    %4968 = vmatpush1.msra.mxu0 0.0
    %4969 = vmatprep.subr.mxu0 0.0
    %4970 = vmatpush1.msra.mxu0 0.0
    %4971 = vmatprep.subr.mxu0 0.0
    %4972 = vmatpush1.msra.mxu0 0.0
    %4973 = vmatprep.subr.mxu0 0.0
    %4974 = vmatpush1.msra.mxu0 0.0
    %4975 = vmatprep.subr.mxu0 0.0
    %4976 = vmatpush1.msra.mxu0 0.0
    %4977 = vmatprep.subr.mxu0 0.0
    %4978 = vmatpush1.msra.mxu0 0.0
    %4979 = vmatprep.subr.mxu0 0.0
    %4980 = vmatpush1.msra.mxu0 0.0
    %4981 = vmatprep.subr.mxu0 0.0
    %4982 = vmatpush1.msra.mxu0 0.0
    %4983 = vmatprep.subr.mxu0 0.0
    %4984 = vmatpush1.msra.mxu0 0.0
    %4985 = vmatprep.subr.mxu0 0.0
    %4986 = vmatpush1.msra.mxu0 0.0
    %4987 = vmatprep.subr.mxu0 0.0
    %4988 = vmatpush1.msra.mxu0 0.0
    %4989 = vmatprep.subr.mxu0 0.0
    %4990 = vmatpush1.msra.mxu0 0.0
    %4991 = vmatprep.subr.mxu0 0.0
    %4992 = vmatpush1.msra.mxu0 0.0
    %4993 = vmatprep.subr.mxu0 0.0
    %4994 = vmatpush1.msra.mxu0 0.0
    %4995 = vmatprep.subr.mxu0 0.0
    %4996 = vmatpush1.msra.mxu0 0.0
    %4997 = vmatprep.subr.mxu0 0.0
    %4998 = vmatpush1.msra.mxu0 0.0
    %4999 = vmatprep.subr.mxu0 0.0
    %5000 = vmatpush1.msra.mxu0 0.0
    %5001 = vmatprep.subr.mxu0 0.0
    %5002 = vmatpush1.msra.mxu0 0.0
    %5003 = vmatprep.subr.mxu0 0.0
    %5004 = vmatpush1.msra.mxu0 0.0
    %5005 = vmatprep.subr.mxu0 0.0
    %5006 = vmatpush1.msra.mxu0 0.0
    %5007 = vmatprep.subr.mxu0 0.0
    %5008 = vmatpush1.msra.mxu0 0.0
    %5009 = vmatprep.subr.mxu0 0.0
    %5010 = vmatpush1.msra.mxu0 0.0
    %5011 = vmatprep.subr.mxu0 0.0
    %5012 = vmatpush1.msra.mxu0 0.0
    %5013 = vmatprep.subr.mxu0 0.0
    %5014 = vmatpush1.msra.mxu0 0.0
    %5015 = vmatprep.subr.mxu0 0.0
    %5016 = vmatpush1.msra.mxu0 0.0
    %5017 = vmatprep.mubr.f32.mxu0 0.0
    %v5018 = vand.u32 %v3194, 4294901760
    %v5019 = vsub.f32 %v3194, %v5018
    %v5020 = vand.u32 %v5019, 4294901760
    %5021 = vmatmul.mubr.f32.gmra.mrb[0].mxu0 %v5020
    %v5022 = vpop.f32.mrb[0].mxu0
    %v5023 = vadd.f32 %v4917, %v5022
    %v5024 = vpop.f32.mrb[0].mxu0
    %v5025 = vadd.f32 %v4919, %v5024
    %5026 = vmatprep.mubr.f32.mxu0 0.0
    %v5027 = vand.u32 %v3196, 4294901760
    %v5028 = vsub.f32 %v3196, %v5027
    %v5029 = vand.u32 %v5028, 4294901760
    %5030 = vmatmul.mubr.f32.gmra.mrb[0].mxu0 %v5029
    %v5031 = vpop.f32.mrb[0].mxu0
    %v5032 = vadd.f32 %v4925, %v5031
    %v5033 = vpop.f32.mrb[0].mxu0
    %v5034 = vadd.f32 %v4927, %v5033
    %5035 = vmatprep.mubr.f32.mxu0 0.0
    %v5036 = vand.u32 %v3198, 4294901760
    %v5037 = vsub.f32 %v3198, %v5036
    %v5038 = vand.u32 %v5037, 4294901760
    %5039 = vmatmul.mubr.f32.gmra.mrb[0].mxu0 %v5038
    %v5040 = vpop.f32.mrb[0].mxu0
    %v5041 = vadd.f32 %v4933, %v5040
    %v5042 = vpop.f32.mrb[0].mxu0
    %v5043 = vadd.f32 %v4935, %v5042
    %5044 = vmatprep.mubr.f32.mxu0 0.0
    %v5045 = vand.u32 %v3200, 4294901760
    %v5046 = vsub.f32 %v3200, %v5045
    %v5047 = vand.u32 %v5046, 4294901760
    %5048 = vmatmul.mubr.f32.gmra.mrb[0].mxu0 %v5047
    %v5049 = vpop.f32.mrb[0].mxu0
    %v5050 = vadd.f32 %v4941, %v5049
    %v5051 = vpop.f32.mrb[0].mxu0
    %v5052 = vadd.f32 %v4943, %v5051
    %5053 = vdwg.mxu0
    %v5054 = vand.u32 %v3143, 4294901760
    %v5055 = vsub.f32 %v3143, %v5054
    %v5056 = vand.u32 %v5055, 4294901760
    %5057 = vmatprep.subr.mxu0 %v5056
    %v5058 = vand.u32 %v3142, 4294901760
    %v5059 = vsub.f32 %v3142, %v5058
    %v5060 = vand.u32 %v5059, 4294901760
    %5061 = vmatpush1.msra.mxu0 %v5060
    %v5062 = vand.u32 %v3151, 4294901760
    %v5063 = vsub.f32 %v3151, %v5062
    %v5064 = vand.u32 %v5063, 4294901760
    %5065 = vmatprep.subr.mxu0 %v5064
    %v5066 = vand.u32 %v3150, 4294901760
    %v5067 = vsub.f32 %v3150, %v5066
    %v5068 = vand.u32 %v5067, 4294901760
    %5069 = vmatpush1.msra.mxu0 %v5068
    %v5070 = vand.u32 %v3159, 4294901760
    %v5071 = vsub.f32 %v3159, %v5070
    %v5072 = vand.u32 %v5071, 4294901760
    %5073 = vmatprep.subr.mxu0 %v5072
    %v5074 = vand.u32 %v3158, 4294901760
    %v5075 = vsub.f32 %v3158, %v5074
    %v5076 = vand.u32 %v5075, 4294901760
    %5077 = vmatpush1.msra.mxu0 %v5076
    %v5078 = vand.u32 %v3167, 4294901760
    %v5079 = vsub.f32 %v3167, %v5078
    %v5080 = vand.u32 %v5079, 4294901760
    %5081 = vmatprep.subr.mxu0 %v5080
    %v5082 = vand.u32 %v3166, 4294901760
    %v5083 = vsub.f32 %v3166, %v5082
    %v5084 = vand.u32 %v5083, 4294901760
    %5085 = vmatpush1.msra.mxu0 %v5084
    %5086 = vmatprep.subr.mxu0 0.0
    %5087 = vmatpush1.msra.mxu0 0.0
    %5088 = vmatprep.subr.mxu0 0.0
    %5089 = vmatpush1.msra.mxu0 0.0
    %5090 = vmatprep.subr.mxu0 0.0
    %5091 = vmatpush1.msra.mxu0 0.0
    %5092 = vmatprep.subr.mxu0 0.0
    %5093 = vmatpush1.msra.mxu0 0.0
    %5094 = vmatprep.subr.mxu0 0.0
    %5095 = vmatpush1.msra.mxu0 0.0
    %5096 = vmatprep.subr.mxu0 0.0
    %5097 = vmatpush1.msra.mxu0 0.0
    %5098 = vmatprep.subr.mxu0 0.0
    %5099 = vmatpush1.msra.mxu0 0.0
    %5100 = vmatprep.subr.mxu0 0.0
    %5101 = vmatpush1.msra.mxu0 0.0
    %5102 = vmatprep.subr.mxu0 0.0
    %5103 = vmatpush1.msra.mxu0 0.0
    %5104 = vmatprep.subr.mxu0 0.0
    %5105 = vmatpush1.msra.mxu0 0.0
    %5106 = vmatprep.subr.mxu0 0.0
    %5107 = vmatpush1.msra.mxu0 0.0
    %5108 = vmatprep.subr.mxu0 0.0
    %5109 = vmatpush1.msra.mxu0 0.0
    %5110 = vmatprep.subr.mxu0 0.0
    %5111 = vmatpush1.msra.mxu0 0.0
    %5112 = vmatprep.subr.mxu0 0.0
    %5113 = vmatpush1.msra.mxu0 0.0
    %5114 = vmatprep.subr.mxu0 0.0
    %5115 = vmatpush1.msra.mxu0 0.0
    %5116 = vmatprep.subr.mxu0 0.0
    %5117 = vmatpush1.msra.mxu0 0.0
    %5118 = vmatprep.subr.mxu0 0.0
    %5119 = vmatpush1.msra.mxu0 0.0
    %5120 = vmatprep.subr.mxu0 0.0
    %5121 = vmatpush1.msra.mxu0 0.0
    %5122 = vmatprep.subr.mxu0 0.0
    %5123 = vmatpush1.msra.mxu0 0.0
    %5124 = vmatprep.subr.mxu0 0.0
    %5125 = vmatpush1.msra.mxu0 0.0
    %5126 = vmatprep.subr.mxu0 0.0
    %5127 = vmatpush1.msra.mxu0 0.0
    %5128 = vmatprep.subr.mxu0 0.0
    %5129 = vmatpush1.msra.mxu0 0.0
    %5130 = vmatprep.subr.mxu0 0.0
    %5131 = vmatpush1.msra.mxu0 0.0
    %5132 = vmatprep.subr.mxu0 0.0
    %5133 = vmatpush1.msra.mxu0 0.0
    %5134 = vmatprep.subr.mxu0 0.0
    %5135 = vmatpush1.msra.mxu0 0.0
    %5136 = vmatprep.subr.mxu0 0.0
    %5137 = vmatpush1.msra.mxu0 0.0
    %5138 = vmatprep.subr.mxu0 0.0
    %5139 = vmatpush1.msra.mxu0 0.0
    %5140 = vmatprep.subr.mxu0 0.0
    %5141 = vmatpush1.msra.mxu0 0.0
    %5142 = vmatprep.mubr.f32.mxu0 0.0
    %v5143 = vand.u32 %v3194, 4294901760
    %5144 = vmatmul.mubr.f32.gmra.mrb[0].mxu0 %v5143
    %v5145 = vpop.f32.mrb[0].mxu0
    %v5146 = vadd.f32 %v5023, %v5145
    %v5147 = vpop.f32.mrb[0].mxu0
    %v5148 = vadd.f32 %v5025, %v5147
    %5149 = vmatprep.mubr.f32.mxu0 0.0
    %v5150 = vand.u32 %v3196, 4294901760
    %5151 = vmatmul.mubr.f32.gmra.mrb[0].mxu0 %v5150
    %v5152 = vpop.f32.mrb[0].mxu0
    %v5153 = vadd.f32 %v5032, %v5152
    %v5154 = vpop.f32.mrb[0].mxu0
    %v5155 = vadd.f32 %v5034, %v5154
    %5156 = vmatprep.mubr.f32.mxu0 0.0
    %v5157 = vand.u32 %v3198, 4294901760
    %5158 = vmatmul.mubr.f32.gmra.mrb[0].mxu0 %v5157
    %v5159 = vpop.f32.mrb[0].mxu0
    %v5160 = vadd.f32 %v5041, %v5159
    %v5161 = vpop.f32.mrb[0].mxu0
    %v5162 = vadd.f32 %v5043, %v5161
    %5163 = vmatprep.mubr.f32.mxu0 0.0
    %v5164 = vand.u32 %v3200, 4294901760
    %5165 = vmatmul.mubr.f32.gmra.mrb[0].mxu0 %v5164
    %v5166 = vpop.f32.mrb[0].mxu0
    %v5167 = vadd.f32 %v5050, %v5166
    %v5168 = vpop.f32.mrb[0].mxu0
    %v5169 = vadd.f32 %v5052, %v5168
    %5170 = vdwg.mxu0
    %v5171 = vand.u32 %v3143, 4294901760
    %5172 = vmatprep.subr.mxu0 %v5171
    %v5173 = vand.u32 %v3142, 4294901760
    %5174 = vmatpush1.msra.mxu0 %v5173
    %v5175 = vand.u32 %v3151, 4294901760
    %5176 = vmatprep.subr.mxu0 %v5175
    %v5177 = vand.u32 %v3150, 4294901760
    %5178 = vmatpush1.msra.mxu0 %v5177
    %v5179 = vand.u32 %v3159, 4294901760
    %5180 = vmatprep.subr.mxu0 %v5179
    %v5181 = vand.u32 %v3158, 4294901760
    %5182 = vmatpush1.msra.mxu0 %v5181
    %v5183 = vand.u32 %v3167, 4294901760
    %5184 = vmatprep.subr.mxu0 %v5183
    %v5185 = vand.u32 %v3166, 4294901760
    %5186 = vmatpush1.msra.mxu0 %v5185
    %5187 = vmatprep.subr.mxu0 0.0
    %5188 = vmatpush1.msra.mxu0 0.0
    %5189 = vmatprep.subr.mxu0 0.0
    %5190 = vmatpush1.msra.mxu0 0.0
    %5191 = vmatprep.subr.mxu0 0.0
    %5192 = vmatpush1.msra.mxu0 0.0
    %5193 = vmatprep.subr.mxu0 0.0
    %5194 = vmatpush1.msra.mxu0 0.0
    %5195 = vmatprep.subr.mxu0 0.0
    %5196 = vmatpush1.msra.mxu0 0.0
    %5197 = vmatprep.subr.mxu0 0.0
    %5198 = vmatpush1.msra.mxu0 0.0
    %5199 = vmatprep.subr.mxu0 0.0
    %5200 = vmatpush1.msra.mxu0 0.0
    %5201 = vmatprep.subr.mxu0 0.0
    %5202 = vmatpush1.msra.mxu0 0.0
    %5203 = vmatprep.subr.mxu0 0.0
    %5204 = vmatpush1.msra.mxu0 0.0
    %5205 = vmatprep.subr.mxu0 0.0
    %5206 = vmatpush1.msra.mxu0 0.0
    %5207 = vmatprep.subr.mxu0 0.0
    %5208 = vmatpush1.msra.mxu0 0.0
    %5209 = vmatprep.subr.mxu0 0.0
    %5210 = vmatpush1.msra.mxu0 0.0
    %5211 = vmatprep.subr.mxu0 0.0
    %5212 = vmatpush1.msra.mxu0 0.0
    %5213 = vmatprep.subr.mxu0 0.0
    %5214 = vmatpush1.msra.mxu0 0.0
    %5215 = vmatprep.subr.mxu0 0.0
    %5216 = vmatpush1.msra.mxu0 0.0
    %5217 = vmatprep.subr.mxu0 0.0
    %5218 = vmatpush1.msra.mxu0 0.0
    %5219 = vmatprep.subr.mxu0 0.0
    %5220 = vmatpush1.msra.mxu0 0.0
    %5221 = vmatprep.subr.mxu0 0.0
    %5222 = vmatpush1.msra.mxu0 0.0
    %5223 = vmatprep.subr.mxu0 0.0
    %5224 = vmatpush1.msra.mxu0 0.0
    %5225 = vmatprep.subr.mxu0 0.0
    %5226 = vmatpush1.msra.mxu0 0.0
    %5227 = vmatprep.subr.mxu0 0.0
    %5228 = vmatpush1.msra.mxu0 0.0
    %5229 = vmatprep.subr.mxu0 0.0
    %5230 = vmatpush1.msra.mxu0 0.0
    %5231 = vmatprep.subr.mxu0 0.0
    %5232 = vmatpush1.msra.mxu0 0.0
    %5233 = vmatprep.subr.mxu0 0.0
    %5234 = vmatpush1.msra.mxu0 0.0
    %5235 = vmatprep.subr.mxu0 0.0
    %5236 = vmatpush1.msra.mxu0 0.0
    %5237 = vmatprep.subr.mxu0 0.0
    %5238 = vmatpush1.msra.mxu0 0.0
    %5239 = vmatprep.subr.mxu0 0.0
    %5240 = vmatpush1.msra.mxu0 0.0
    %5241 = vmatprep.subr.mxu0 0.0
    %5242 = vmatpush1.msra.mxu0 0.0
    %5243 = vmatprep.mubr.f32.mxu0 0.0
    %v5244 = vand.u32 %v3194, 4294901760
    %5245 = vmatmul.mubr.f32.gmra.mrb[0].mxu0 %v5244
    %v5246 = vpop.f32.mrb[0].mxu0
    %v5247 = vadd.f32 %v5146, %v5246
    %v5248 = vpop.f32.mrb[0].mxu0
    %v5249 = vadd.f32 %v5148, %v5248
    %5250 = vmatprep.mubr.f32.mxu0 0.0
    %v5251 = vand.u32 %v3196, 4294901760
    %5252 = vmatmul.mubr.f32.gmra.mrb[0].mxu0 %v5251
    %v5253 = vpop.f32.mrb[0].mxu0
    %v5254 = vadd.f32 %v5153, %v5253
    %v5255 = vpop.f32.mrb[0].mxu0
    %v5256 = vadd.f32 %v5155, %v5255
    %5257 = vmatprep.mubr.f32.mxu0 0.0
    %v5258 = vand.u32 %v3198, 4294901760
    %5259 = vmatmul.mubr.f32.gmra.mrb[0].mxu0 %v5258
    %v5260 = vpop.f32.mrb[0].mxu0
    %v5261 = vadd.f32 %v5160, %v5260
    %v5262 = vpop.f32.mrb[0].mxu0
    %v5263 = vadd.f32 %v5162, %v5262
    %5264 = vmatprep.mubr.f32.mxu0 0.0
    %v5265 = vand.u32 %v3200, 4294901760
    %5266 = vmatmul.mubr.f32.gmra.mrb[0].mxu0 %v5265
    %v5267 = vpop.f32.mrb[0].mxu0
    %v5268 = vadd.f32 %v5167, %v5267
    %v5269 = vpop.f32.mrb[0].mxu0
    %v5270 = vadd.f32 %v5169, %v5269
    %5271 = vdwg.mxu0
    %v5272 = vand.u32 %v3145, 4294901760
    %5273 = vmatprep.subr.mxu0 %v5272
    %v5274 = vand.u32 %v3144, 4294901760
    %5275 = vmatpush1.msra.mxu0 %v5274
    %v5276 = vand.u32 %v3153, 4294901760
    %5277 = vmatprep.subr.mxu0 %v5276
    %v5278 = vand.u32 %v3152, 4294901760
    %5279 = vmatpush1.msra.mxu0 %v5278
    %v5280 = vand.u32 %v3161, 4294901760
    %5281 = vmatprep.subr.mxu0 %v5280
    %v5282 = vand.u32 %v3160, 4294901760
    %5283 = vmatpush1.msra.mxu0 %v5282
    %v5284 = vand.u32 %v3169, 4294901760
    %5285 = vmatprep.subr.mxu0 %v5284
    %v5286 = vand.u32 %v3168, 4294901760
    %5287 = vmatpush1.msra.mxu0 %v5286
    %5288 = vmatprep.subr.mxu0 0.0
    %5289 = vmatpush1.msra.mxu0 0.0
    %5290 = vmatprep.subr.mxu0 0.0
    %5291 = vmatpush1.msra.mxu0 0.0
    %5292 = vmatprep.subr.mxu0 0.0
    %5293 = vmatpush1.msra.mxu0 0.0
    %5294 = vmatprep.subr.mxu0 0.0
    %5295 = vmatpush1.msra.mxu0 0.0
    %5296 = vmatprep.subr.mxu0 0.0
    %5297 = vmatpush1.msra.mxu0 0.0
    %5298 = vmatprep.subr.mxu0 0.0
    %5299 = vmatpush1.msra.mxu0 0.0
    %5300 = vmatprep.subr.mxu0 0.0
    %5301 = vmatpush1.msra.mxu0 0.0
    %5302 = vmatprep.subr.mxu0 0.0
    %5303 = vmatpush1.msra.mxu0 0.0
    %5304 = vmatprep.subr.mxu0 0.0
    %5305 = vmatpush1.msra.mxu0 0.0
    %5306 = vmatprep.subr.mxu0 0.0
    %5307 = vmatpush1.msra.mxu0 0.0
    %5308 = vmatprep.subr.mxu0 0.0
    %5309 = vmatpush1.msra.mxu0 0.0
    %5310 = vmatprep.subr.mxu0 0.0
    %5311 = vmatpush1.msra.mxu0 0.0
    %5312 = vmatprep.subr.mxu0 0.0
    %5313 = vmatpush1.msra.mxu0 0.0
    %5314 = vmatprep.subr.mxu0 0.0
    %5315 = vmatpush1.msra.mxu0 0.0
    %5316 = vmatprep.subr.mxu0 0.0
    %5317 = vmatpush1.msra.mxu0 0.0
    %5318 = vmatprep.subr.mxu0 0.0
    %5319 = vmatpush1.msra.mxu0 0.0
    %5320 = vmatprep.subr.mxu0 0.0
    %5321 = vmatpush1.msra.mxu0 0.0
    %5322 = vmatprep.subr.mxu0 0.0
    %5323 = vmatpush1.msra.mxu0 0.0
    %5324 = vmatprep.subr.mxu0 0.0
    %5325 = vmatpush1.msra.mxu0 0.0
    %5326 = vmatprep.subr.mxu0 0.0
    %5327 = vmatpush1.msra.mxu0 0.0
    %5328 = vmatprep.subr.mxu0 0.0
    %5329 = vmatpush1.msra.mxu0 0.0
    %5330 = vmatprep.subr.mxu0 0.0
    %5331 = vmatpush1.msra.mxu0 0.0
    %5332 = vmatprep.subr.mxu0 0.0
    %5333 = vmatpush1.msra.mxu0 0.0
    %5334 = vmatprep.subr.mxu0 0.0
    %5335 = vmatpush1.msra.mxu0 0.0
    %5336 = vmatprep.subr.mxu0 0.0
    %5337 = vmatpush1.msra.mxu0 0.0
    %5338 = vmatprep.subr.mxu0 0.0
    %5339 = vmatpush1.msra.mxu0 0.0
    %5340 = vmatprep.subr.mxu0 0.0
    %5341 = vmatpush1.msra.mxu0 0.0
    %5342 = vmatprep.subr.mxu0 0.0
    %5343 = vmatpush1.msra.mxu0 0.0
    %5344 = vmatprep.mubr.f32.mxu0 0.0
    %v5345 = vand.u32 %v3194, 4294901760
    %v5346 = vsub.f32 %v3194, %v5345
    %v5347 = vand.u32 %v5346, 4294901760
    %v5348 = vsub.f32 %v5346, %v5347
    %v5349 = vand.u32 %v5348, 4294901760
    %5350 = vmatmul.mubr.f32.gmra.mrb[0].mxu0 %v5349
    %v5351 = vpop.f32.mrb[0].mxu0
    %v5352 = vadd.f32 %v3172, %v5351
    %v5353 = vpop.f32.mrb[0].mxu0
    %v5354 = vadd.f32 %v3172, %v5353
    %5355 = vmatprep.mubr.f32.mxu0 0.0
    %v5356 = vand.u32 %v3196, 4294901760
    %v5357 = vsub.f32 %v3196, %v5356
    %v5358 = vand.u32 %v5357, 4294901760
    %v5359 = vsub.f32 %v5357, %v5358
    %v5360 = vand.u32 %v5359, 4294901760
    %5361 = vmatmul.mubr.f32.gmra.mrb[0].mxu0 %v5360
    %v5362 = vpop.f32.mrb[0].mxu0
    %v5363 = vadd.f32 %v3176, %v5362
    %v5364 = vpop.f32.mrb[0].mxu0
    %v5365 = vadd.f32 %v3176, %v5364
    %5366 = vmatprep.mubr.f32.mxu0 0.0
    %v5367 = vand.u32 %v3198, 4294901760
    %v5368 = vsub.f32 %v3198, %v5367
    %v5369 = vand.u32 %v5368, 4294901760
    %v5370 = vsub.f32 %v5368, %v5369
    %v5371 = vand.u32 %v5370, 4294901760
    %5372 = vmatmul.mubr.f32.gmra.mrb[0].mxu0 %v5371
    %v5373 = vpop.f32.mrb[0].mxu0
    %v5374 = vadd.f32 %v3180, %v5373
    %v5375 = vpop.f32.mrb[0].mxu0
    %v5376 = vadd.f32 %v3180, %v5375
    %5377 = vmatprep.mubr.f32.mxu0 0.0
    %v5378 = vand.u32 %v3200, 4294901760
    %v5379 = vsub.f32 %v3200, %v5378
    %v5380 = vand.u32 %v5379, 4294901760
    %v5381 = vsub.f32 %v5379, %v5380
    %v5382 = vand.u32 %v5381, 4294901760
    %5383 = vmatmul.mubr.f32.gmra.mrb[0].mxu0 %v5382
    %v5384 = vpop.f32.mrb[0].mxu0
    %v5385 = vadd.f32 %v3184, %v5384
    %v5386 = vpop.f32.mrb[0].mxu0
    %v5387 = vadd.f32 %v3184, %v5386
    %5388 = vdwg.mxu0
    %v5389 = vand.u32 %v3145, 4294901760
    %v5390 = vsub.f32 %v3145, %v5389
    %v5391 = vand.u32 %v5390, 4294901760
    %v5392 = vsub.f32 %v5390, %v5391
    %v5393 = vand.u32 %v5392, 4294901760
    %5394 = vmatprep.subr.mxu0 %v5393
    %v5395 = vand.u32 %v3144, 4294901760
    %v5396 = vsub.f32 %v3144, %v5395
    %v5397 = vand.u32 %v5396, 4294901760
    %v5398 = vsub.f32 %v5396, %v5397
    %v5399 = vand.u32 %v5398, 4294901760
    %5400 = vmatpush1.msra.mxu0 %v5399
    %v5401 = vand.u32 %v3153, 4294901760
    %v5402 = vsub.f32 %v3153, %v5401
    %v5403 = vand.u32 %v5402, 4294901760
    %v5404 = vsub.f32 %v5402, %v5403
    %v5405 = vand.u32 %v5404, 4294901760
    %5406 = vmatprep.subr.mxu0 %v5405
    %v5407 = vand.u32 %v3152, 4294901760
    %v5408 = vsub.f32 %v3152, %v5407
    %v5409 = vand.u32 %v5408, 4294901760
    %v5410 = vsub.f32 %v5408, %v5409
    %v5411 = vand.u32 %v5410, 4294901760
    %5412 = vmatpush1.msra.mxu0 %v5411
    %v5413 = vand.u32 %v3161, 4294901760
    %v5414 = vsub.f32 %v3161, %v5413
    %v5415 = vand.u32 %v5414, 4294901760
    %v5416 = vsub.f32 %v5414, %v5415
    %v5417 = vand.u32 %v5416, 4294901760
    %5418 = vmatprep.subr.mxu0 %v5417
    %v5419 = vand.u32 %v3160, 4294901760
    %v5420 = vsub.f32 %v3160, %v5419
    %v5421 = vand.u32 %v5420, 4294901760
    %v5422 = vsub.f32 %v5420, %v5421
    %v5423 = vand.u32 %v5422, 4294901760
    %5424 = vmatpush1.msra.mxu0 %v5423
    %v5425 = vand.u32 %v3169, 4294901760
    %v5426 = vsub.f32 %v3169, %v5425
    %v5427 = vand.u32 %v5426, 4294901760
    %v5428 = vsub.f32 %v5426, %v5427
    %v5429 = vand.u32 %v5428, 4294901760
    %5430 = vmatprep.subr.mxu0 %v5429
    %v5431 = vand.u32 %v3168, 4294901760
    %v5432 = vsub.f32 %v3168, %v5431
    %v5433 = vand.u32 %v5432, 4294901760
    %v5434 = vsub.f32 %v5432, %v5433
    %v5435 = vand.u32 %v5434, 4294901760
    %5436 = vmatpush1.msra.mxu0 %v5435
    %5437 = vmatprep.subr.mxu0 0.0
    %5438 = vmatpush1.msra.mxu0 0.0
    %5439 = vmatprep.subr.mxu0 0.0
    %5440 = vmatpush1.msra.mxu0 0.0
    %5441 = vmatprep.subr.mxu0 0.0
    %5442 = vmatpush1.msra.mxu0 0.0
    %5443 = vmatprep.subr.mxu0 0.0
    %5444 = vmatpush1.msra.mxu0 0.0
    %5445 = vmatprep.subr.mxu0 0.0
    %5446 = vmatpush1.msra.mxu0 0.0
    %5447 = vmatprep.subr.mxu0 0.0
    %5448 = vmatpush1.msra.mxu0 0.0
    %5449 = vmatprep.subr.mxu0 0.0
    %5450 = vmatpush1.msra.mxu0 0.0
    %5451 = vmatprep.subr.mxu0 0.0
    %5452 = vmatpush1.msra.mxu0 0.0
    %5453 = vmatprep.subr.mxu0 0.0
    %5454 = vmatpush1.msra.mxu0 0.0
    %5455 = vmatprep.subr.mxu0 0.0
    %5456 = vmatpush1.msra.mxu0 0.0
    %5457 = vmatprep.subr.mxu0 0.0
    %5458 = vmatpush1.msra.mxu0 0.0
    %5459 = vmatprep.subr.mxu0 0.0
    %5460 = vmatpush1.msra.mxu0 0.0
    %5461 = vmatprep.subr.mxu0 0.0
    %5462 = vmatpush1.msra.mxu0 0.0
    %5463 = vmatprep.subr.mxu0 0.0
    %5464 = vmatpush1.msra.mxu0 0.0
    %5465 = vmatprep.subr.mxu0 0.0
    %5466 = vmatpush1.msra.mxu0 0.0
    %5467 = vmatprep.subr.mxu0 0.0
    %5468 = vmatpush1.msra.mxu0 0.0
    %5469 = vmatprep.subr.mxu0 0.0
    %5470 = vmatpush1.msra.mxu0 0.0
    %5471 = vmatprep.subr.mxu0 0.0
    %5472 = vmatpush1.msra.mxu0 0.0
    %5473 = vmatprep.subr.mxu0 0.0
    %5474 = vmatpush1.msra.mxu0 0.0
    %5475 = vmatprep.subr.mxu0 0.0
    %5476 = vmatpush1.msra.mxu0 0.0
    %5477 = vmatprep.subr.mxu0 0.0
    %5478 = vmatpush1.msra.mxu0 0.0
    %5479 = vmatprep.subr.mxu0 0.0
    %5480 = vmatpush1.msra.mxu0 0.0
    %5481 = vmatprep.subr.mxu0 0.0
    %5482 = vmatpush1.msra.mxu0 0.0
    %5483 = vmatprep.subr.mxu0 0.0
    %5484 = vmatpush1.msra.mxu0 0.0
    %5485 = vmatprep.subr.mxu0 0.0
    %5486 = vmatpush1.msra.mxu0 0.0
    %5487 = vmatprep.subr.mxu0 0.0
    %5488 = vmatpush1.msra.mxu0 0.0
    %5489 = vmatprep.subr.mxu0 0.0
    %5490 = vmatpush1.msra.mxu0 0.0
    %5491 = vmatprep.subr.mxu0 0.0
    %5492 = vmatpush1.msra.mxu0 0.0
    %5493 = vmatprep.mubr.f32.mxu0 0.0
    %v5494 = vand.u32 %v3194, 4294901760
    %5495 = vmatmul.mubr.f32.gmra.mrb[0].mxu0 %v5494
    %v5496 = vpop.f32.mrb[0].mxu0
    %v5497 = vadd.f32 %v5352, %v5496
    %v5498 = vpop.f32.mrb[0].mxu0
    %v5499 = vadd.f32 %v5354, %v5498
    %5500 = vmatprep.mubr.f32.mxu0 0.0
    %v5501 = vand.u32 %v3196, 4294901760
    %5502 = vmatmul.mubr.f32.gmra.mrb[0].mxu0 %v5501
    %v5503 = vpop.f32.mrb[0].mxu0
    %v5504 = vadd.f32 %v5363, %v5503
    %v5505 = vpop.f32.mrb[0].mxu0
    %v5506 = vadd.f32 %v5365, %v5505
    %5507 = vmatprep.mubr.f32.mxu0 0.0
    %v5508 = vand.u32 %v3198, 4294901760
    %5509 = vmatmul.mubr.f32.gmra.mrb[0].mxu0 %v5508
    %v5510 = vpop.f32.mrb[0].mxu0
    %v5511 = vadd.f32 %v5374, %v5510
    %v5512 = vpop.f32.mrb[0].mxu0
    %v5513 = vadd.f32 %v5376, %v5512
    %5514 = vmatprep.mubr.f32.mxu0 0.0
    %v5515 = vand.u32 %v3200, 4294901760
    %5516 = vmatmul.mubr.f32.gmra.mrb[0].mxu0 %v5515
    %v5517 = vpop.f32.mrb[0].mxu0
    %v5518 = vadd.f32 %v5385, %v5517
    %v5519 = vpop.f32.mrb[0].mxu0
    %v5520 = vadd.f32 %v5387, %v5519
    %5521 = vdwg.mxu0
    %v5522 = vand.u32 %v3145, 4294901760
    %v5523 = vsub.f32 %v3145, %v5522
    %5524 = vmatprep.subr.mxu0 %v5523
    %v5525 = vand.u32 %v3144, 4294901760
    %v5526 = vsub.f32 %v3144, %v5525
    %5527 = vmatpush1.msra.mxu0 %v5526
    %v5528 = vand.u32 %v3153, 4294901760
    %v5529 = vsub.f32 %v3153, %v5528
    %5530 = vmatprep.subr.mxu0 %v5529
    %v5531 = vand.u32 %v3152, 4294901760
    %v5532 = vsub.f32 %v3152, %v5531
    %5533 = vmatpush1.msra.mxu0 %v5532
    %v5534 = vand.u32 %v3161, 4294901760
    %v5535 = vsub.f32 %v3161, %v5534
    %5536 = vmatprep.subr.mxu0 %v5535
    %v5537 = vand.u32 %v3160, 4294901760
    %v5538 = vsub.f32 %v3160, %v5537
    %5539 = vmatpush1.msra.mxu0 %v5538
    %v5540 = vand.u32 %v3169, 4294901760
    %v5541 = vsub.f32 %v3169, %v5540
    %5542 = vmatprep.subr.mxu0 %v5541
    %v5543 = vand.u32 %v3168, 4294901760
    %v5544 = vsub.f32 %v3168, %v5543
    %5545 = vmatpush1.msra.mxu0 %v5544
    %5546 = vmatprep.subr.mxu0 0.0
    %5547 = vmatpush1.msra.mxu0 0.0
    %5548 = vmatprep.subr.mxu0 0.0
    %5549 = vmatpush1.msra.mxu0 0.0
    %5550 = vmatprep.subr.mxu0 0.0
    %5551 = vmatpush1.msra.mxu0 0.0
    %5552 = vmatprep.subr.mxu0 0.0
    %5553 = vmatpush1.msra.mxu0 0.0
    %5554 = vmatprep.subr.mxu0 0.0
    %5555 = vmatpush1.msra.mxu0 0.0
    %5556 = vmatprep.subr.mxu0 0.0
    %5557 = vmatpush1.msra.mxu0 0.0
    %5558 = vmatprep.subr.mxu0 0.0
    %5559 = vmatpush1.msra.mxu0 0.0
    %5560 = vmatprep.subr.mxu0 0.0
    %5561 = vmatpush1.msra.mxu0 0.0
    %5562 = vmatprep.subr.mxu0 0.0
    %5563 = vmatpush1.msra.mxu0 0.0
    %5564 = vmatprep.subr.mxu0 0.0
    %5565 = vmatpush1.msra.mxu0 0.0
    %5566 = vmatprep.subr.mxu0 0.0
    %5567 = vmatpush1.msra.mxu0 0.0
    %5568 = vmatprep.subr.mxu0 0.0
    %5569 = vmatpush1.msra.mxu0 0.0
    %5570 = vmatprep.subr.mxu0 0.0
    %5571 = vmatpush1.msra.mxu0 0.0
    %5572 = vmatprep.subr.mxu0 0.0
    %5573 = vmatpush1.msra.mxu0 0.0
    %5574 = vmatprep.subr.mxu0 0.0
    %5575 = vmatpush1.msra.mxu0 0.0
    %5576 = vmatprep.subr.mxu0 0.0
    %5577 = vmatpush1.msra.mxu0 0.0
    %5578 = vmatprep.subr.mxu0 0.0
    %5579 = vmatpush1.msra.mxu0 0.0
    %5580 = vmatprep.subr.mxu0 0.0
    %5581 = vmatpush1.msra.mxu0 0.0
    %5582 = vmatprep.subr.mxu0 0.0
    %5583 = vmatpush1.msra.mxu0 0.0
    %5584 = vmatprep.subr.mxu0 0.0
    %5585 = vmatpush1.msra.mxu0 0.0
    %5586 = vmatprep.subr.mxu0 0.0
    %5587 = vmatpush1.msra.mxu0 0.0
    %5588 = vmatprep.subr.mxu0 0.0
    %5589 = vmatpush1.msra.mxu0 0.0
    %5590 = vmatprep.subr.mxu0 0.0
    %5591 = vmatpush1.msra.mxu0 0.0
    %5592 = vmatprep.subr.mxu0 0.0
    %5593 = vmatpush1.msra.mxu0 0.0
    %5594 = vmatprep.subr.mxu0 0.0
    %5595 = vmatpush1.msra.mxu0 0.0
    %5596 = vmatprep.subr.mxu0 0.0
    %5597 = vmatpush1.msra.mxu0 0.0
    %5598 = vmatprep.subr.mxu0 0.0
    %5599 = vmatpush1.msra.mxu0 0.0
    %5600 = vmatprep.subr.mxu0 0.0
    %5601 = vmatpush1.msra.mxu0 0.0
    %5602 = vmatprep.mubr.f32.mxu0 0.0
    %v5603 = vand.u32 %v3194, 4294901760
    %v5604 = vsub.f32 %v3194, %v5603
    %5605 = vmatmul.mubr.f32.gmra.mrb[0].mxu0 %v5604
    %v5606 = vpop.f32.mrb[0].mxu0
    %v5607 = vadd.f32 %v5497, %v5606
    %v5608 = vpop.f32.mrb[0].mxu0
    %v5609 = vadd.f32 %v5499, %v5608
    %5610 = vmatprep.mubr.f32.mxu0 0.0
    %v5611 = vand.u32 %v3196, 4294901760
    %v5612 = vsub.f32 %v3196, %v5611
    %5613 = vmatmul.mubr.f32.gmra.mrb[0].mxu0 %v5612
    %v5614 = vpop.f32.mrb[0].mxu0
    %v5615 = vadd.f32 %v5504, %v5614
    %v5616 = vpop.f32.mrb[0].mxu0
    %v5617 = vadd.f32 %v5506, %v5616
    %5618 = vmatprep.mubr.f32.mxu0 0.0
    %v5619 = vand.u32 %v3198, 4294901760
    %v5620 = vsub.f32 %v3198, %v5619
    %5621 = vmatmul.mubr.f32.gmra.mrb[0].mxu0 %v5620
    %v5622 = vpop.f32.mrb[0].mxu0
    %v5623 = vadd.f32 %v5511, %v5622
    %v5624 = vpop.f32.mrb[0].mxu0
    %v5625 = vadd.f32 %v5513, %v5624
    %5626 = vmatprep.mubr.f32.mxu0 0.0
    %v5627 = vand.u32 %v3200, 4294901760
    %v5628 = vsub.f32 %v3200, %v5627
    %5629 = vmatmul.mubr.f32.gmra.mrb[0].mxu0 %v5628
    %v5630 = vpop.f32.mrb[0].mxu0
    %v5631 = vadd.f32 %v5518, %v5630
    %v5632 = vpop.f32.mrb[0].mxu0
    %v5633 = vadd.f32 %v5520, %v5632
    %5634 = vdwg.mxu0
    %v5635 = vand.u32 %v3145, 4294901760
    %5636 = vmatprep.subr.mxu0 %v5635
    %v5637 = vand.u32 %v3144, 4294901760
    %5638 = vmatpush1.msra.mxu0 %v5637
    %v5639 = vand.u32 %v3153, 4294901760
    %5640 = vmatprep.subr.mxu0 %v5639
    %v5641 = vand.u32 %v3152, 4294901760
    %5642 = vmatpush1.msra.mxu0 %v5641
    %v5643 = vand.u32 %v3161, 4294901760
    %5644 = vmatprep.subr.mxu0 %v5643
    %v5645 = vand.u32 %v3160, 4294901760
    %5646 = vmatpush1.msra.mxu0 %v5645
    %v5647 = vand.u32 %v3169, 4294901760
    %5648 = vmatprep.subr.mxu0 %v5647
    %v5649 = vand.u32 %v3168, 4294901760
    %5650 = vmatpush1.msra.mxu0 %v5649
    %5651 = vmatprep.subr.mxu0 0.0
    %5652 = vmatpush1.msra.mxu0 0.0
    %5653 = vmatprep.subr.mxu0 0.0
    %5654 = vmatpush1.msra.mxu0 0.0
    %5655 = vmatprep.subr.mxu0 0.0
    %5656 = vmatpush1.msra.mxu0 0.0
    %5657 = vmatprep.subr.mxu0 0.0
    %5658 = vmatpush1.msra.mxu0 0.0
    %5659 = vmatprep.subr.mxu0 0.0
    %5660 = vmatpush1.msra.mxu0 0.0
    %5661 = vmatprep.subr.mxu0 0.0
    %5662 = vmatpush1.msra.mxu0 0.0
    %5663 = vmatprep.subr.mxu0 0.0
    %5664 = vmatpush1.msra.mxu0 0.0
    %5665 = vmatprep.subr.mxu0 0.0
    %5666 = vmatpush1.msra.mxu0 0.0
    %5667 = vmatprep.subr.mxu0 0.0
    %5668 = vmatpush1.msra.mxu0 0.0
    %5669 = vmatprep.subr.mxu0 0.0
    %5670 = vmatpush1.msra.mxu0 0.0
    %5671 = vmatprep.subr.mxu0 0.0
    %5672 = vmatpush1.msra.mxu0 0.0
    %5673 = vmatprep.subr.mxu0 0.0
    %5674 = vmatpush1.msra.mxu0 0.0
    %5675 = vmatprep.subr.mxu0 0.0
    %5676 = vmatpush1.msra.mxu0 0.0
    %5677 = vmatprep.subr.mxu0 0.0
    %5678 = vmatpush1.msra.mxu0 0.0
    %5679 = vmatprep.subr.mxu0 0.0
    %5680 = vmatpush1.msra.mxu0 0.0
    %5681 = vmatprep.subr.mxu0 0.0
    %5682 = vmatpush1.msra.mxu0 0.0
    %5683 = vmatprep.subr.mxu0 0.0
    %5684 = vmatpush1.msra.mxu0 0.0
    %5685 = vmatprep.subr.mxu0 0.0
    %5686 = vmatpush1.msra.mxu0 0.0
    %5687 = vmatprep.subr.mxu0 0.0
    %5688 = vmatpush1.msra.mxu0 0.0
    %5689 = vmatprep.subr.mxu0 0.0
    %5690 = vmatpush1.msra.mxu0 0.0
    %5691 = vmatprep.subr.mxu0 0.0
    %5692 = vmatpush1.msra.mxu0 0.0
    %5693 = vmatprep.subr.mxu0 0.0
    %5694 = vmatpush1.msra.mxu0 0.0
    %5695 = vmatprep.subr.mxu0 0.0
    %5696 = vmatpush1.msra.mxu0 0.0
    %5697 = vmatprep.subr.mxu0 0.0
    %5698 = vmatpush1.msra.mxu0 0.0
    %5699 = vmatprep.subr.mxu0 0.0
    %5700 = vmatpush1.msra.mxu0 0.0
    %5701 = vmatprep.subr.mxu0 0.0
    %5702 = vmatpush1.msra.mxu0 0.0
    %5703 = vmatprep.subr.mxu0 0.0
    %5704 = vmatpush1.msra.mxu0 0.0
    %5705 = vmatprep.subr.mxu0 0.0
    %5706 = vmatpush1.msra.mxu0 0.0
    %5707 = vmatprep.mubr.f32.mxu0 0.0
    %v5708 = vand.u32 %v3194, 4294901760
    %v5709 = vsub.f32 %v3194, %v5708
    %v5710 = vand.u32 %v5709, 4294901760
    %5711 = vmatmul.mubr.f32.gmra.mrb[0].mxu0 %v5710
    %v5712 = vpop.f32.mrb[0].mxu0
    %v5713 = vadd.f32 %v5607, %v5712
    %v5714 = vpop.f32.mrb[0].mxu0
    %v5715 = vadd.f32 %v5609, %v5714
    %5716 = vmatprep.mubr.f32.mxu0 0.0
    %v5717 = vand.u32 %v3196, 4294901760
    %v5718 = vsub.f32 %v3196, %v5717
    %v5719 = vand.u32 %v5718, 4294901760
    %5720 = vmatmul.mubr.f32.gmra.mrb[0].mxu0 %v5719
    %v5721 = vpop.f32.mrb[0].mxu0
    %v5722 = vadd.f32 %v5615, %v5721
    %v5723 = vpop.f32.mrb[0].mxu0
    %v5724 = vadd.f32 %v5617, %v5723
    %5725 = vmatprep.mubr.f32.mxu0 0.0
    %v5726 = vand.u32 %v3198, 4294901760
    %v5727 = vsub.f32 %v3198, %v5726
    %v5728 = vand.u32 %v5727, 4294901760
    %5729 = vmatmul.mubr.f32.gmra.mrb[0].mxu0 %v5728
    %v5730 = vpop.f32.mrb[0].mxu0
    %v5731 = vadd.f32 %v5623, %v5730
    %v5732 = vpop.f32.mrb[0].mxu0
    %v5733 = vadd.f32 %v5625, %v5732
    %5734 = vmatprep.mubr.f32.mxu0 0.0
    %v5735 = vand.u32 %v3200, 4294901760
    %v5736 = vsub.f32 %v3200, %v5735
    %v5737 = vand.u32 %v5736, 4294901760
    %5738 = vmatmul.mubr.f32.gmra.mrb[0].mxu0 %v5737
    %v5739 = vpop.f32.mrb[0].mxu0
    %v5740 = vadd.f32 %v5631, %v5739
    %v5741 = vpop.f32.mrb[0].mxu0
    %v5742 = vadd.f32 %v5633, %v5741
    %5743 = vdwg.mxu0
    %v5744 = vand.u32 %v3145, 4294901760
    %v5745 = vsub.f32 %v3145, %v5744
    %v5746 = vand.u32 %v5745, 4294901760
    %5747 = vmatprep.subr.mxu0 %v5746
    %v5748 = vand.u32 %v3144, 4294901760
    %v5749 = vsub.f32 %v3144, %v5748
    %v5750 = vand.u32 %v5749, 4294901760
    %5751 = vmatpush1.msra.mxu0 %v5750
    %v5752 = vand.u32 %v3153, 4294901760
    %v5753 = vsub.f32 %v3153, %v5752
    %v5754 = vand.u32 %v5753, 4294901760
    %5755 = vmatprep.subr.mxu0 %v5754
    %v5756 = vand.u32 %v3152, 4294901760
    %v5757 = vsub.f32 %v3152, %v5756
    %v5758 = vand.u32 %v5757, 4294901760
    %5759 = vmatpush1.msra.mxu0 %v5758
    %v5760 = vand.u32 %v3161, 4294901760
    %v5761 = vsub.f32 %v3161, %v5760
    %v5762 = vand.u32 %v5761, 4294901760
    %5763 = vmatprep.subr.mxu0 %v5762
    %v5764 = vand.u32 %v3160, 4294901760
    %v5765 = vsub.f32 %v3160, %v5764
    %v5766 = vand.u32 %v5765, 4294901760
    %5767 = vmatpush1.msra.mxu0 %v5766
    %v5768 = vand.u32 %v3169, 4294901760
    %v5769 = vsub.f32 %v3169, %v5768
    %v5770 = vand.u32 %v5769, 4294901760
    %5771 = vmatprep.subr.mxu0 %v5770
    %v5772 = vand.u32 %v3168, 4294901760
    %v5773 = vsub.f32 %v3168, %v5772
    %v5774 = vand.u32 %v5773, 4294901760
    %5775 = vmatpush1.msra.mxu0 %v5774
    %5776 = vmatprep.subr.mxu0 0.0
    %5777 = vmatpush1.msra.mxu0 0.0
    %5778 = vmatprep.subr.mxu0 0.0
    %5779 = vmatpush1.msra.mxu0 0.0
    %5780 = vmatprep.subr.mxu0 0.0
    %5781 = vmatpush1.msra.mxu0 0.0
    %5782 = vmatprep.subr.mxu0 0.0
    %5783 = vmatpush1.msra.mxu0 0.0
    %5784 = vmatprep.subr.mxu0 0.0
    %5785 = vmatpush1.msra.mxu0 0.0
    %5786 = vmatprep.subr.mxu0 0.0
    %5787 = vmatpush1.msra.mxu0 0.0
    %5788 = vmatprep.subr.mxu0 0.0
    %5789 = vmatpush1.msra.mxu0 0.0
    %5790 = vmatprep.subr.mxu0 0.0
    %5791 = vmatpush1.msra.mxu0 0.0
    %5792 = vmatprep.subr.mxu0 0.0
    %5793 = vmatpush1.msra.mxu0 0.0
    %5794 = vmatprep.subr.mxu0 0.0
    %5795 = vmatpush1.msra.mxu0 0.0
    %5796 = vmatprep.subr.mxu0 0.0
    %5797 = vmatpush1.msra.mxu0 0.0
    %5798 = vmatprep.subr.mxu0 0.0
    %5799 = vmatpush1.msra.mxu0 0.0
    %5800 = vmatprep.subr.mxu0 0.0
    %5801 = vmatpush1.msra.mxu0 0.0
    %5802 = vmatprep.subr.mxu0 0.0
    %5803 = vmatpush1.msra.mxu0 0.0
    %5804 = vmatprep.subr.mxu0 0.0
    %5805 = vmatpush1.msra.mxu0 0.0
    %5806 = vmatprep.subr.mxu0 0.0
    %5807 = vmatpush1.msra.mxu0 0.0
    %5808 = vmatprep.subr.mxu0 0.0
    %5809 = vmatpush1.msra.mxu0 0.0
    %5810 = vmatprep.subr.mxu0 0.0
    %5811 = vmatpush1.msra.mxu0 0.0
    %5812 = vmatprep.subr.mxu0 0.0
    %5813 = vmatpush1.msra.mxu0 0.0
    %5814 = vmatprep.subr.mxu0 0.0
    %5815 = vmatpush1.msra.mxu0 0.0
    %5816 = vmatprep.subr.mxu0 0.0
    %5817 = vmatpush1.msra.mxu0 0.0
    %5818 = vmatprep.subr.mxu0 0.0
    %5819 = vmatpush1.msra.mxu0 0.0
    %5820 = vmatprep.subr.mxu0 0.0
    %5821 = vmatpush1.msra.mxu0 0.0
    %5822 = vmatprep.subr.mxu0 0.0
    %5823 = vmatpush1.msra.mxu0 0.0
    %5824 = vmatprep.subr.mxu0 0.0
    %5825 = vmatpush1.msra.mxu0 0.0
    %5826 = vmatprep.subr.mxu0 0.0
    %5827 = vmatpush1.msra.mxu0 0.0
    %5828 = vmatprep.subr.mxu0 0.0
    %5829 = vmatpush1.msra.mxu0 0.0
    %5830 = vmatprep.subr.mxu0 0.0
    %5831 = vmatpush1.msra.mxu0 0.0
    %5832 = vmatprep.mubr.f32.mxu0 0.0
    %v5833 = vand.u32 %v3194, 4294901760
    %5834 = vmatmul.mubr.f32.gmra.mrb[0].mxu0 %v5833
    %v5835 = vpop.f32.mrb[0].mxu0
    %v5836 = vadd.f32 %v5713, %v5835
    %v5837 = vpop.f32.mrb[0].mxu0
    %v5838 = vadd.f32 %v5715, %v5837
    %5839 = vmatprep.mubr.f32.mxu0 0.0
    %v5840 = vand.u32 %v3196, 4294901760
    %5841 = vmatmul.mubr.f32.gmra.mrb[0].mxu0 %v5840
    %v5842 = vpop.f32.mrb[0].mxu0
    %v5843 = vadd.f32 %v5722, %v5842
    %v5844 = vpop.f32.mrb[0].mxu0
    %v5845 = vadd.f32 %v5724, %v5844
    %5846 = vmatprep.mubr.f32.mxu0 0.0
    %v5847 = vand.u32 %v3198, 4294901760
    %5848 = vmatmul.mubr.f32.gmra.mrb[0].mxu0 %v5847
    %v5849 = vpop.f32.mrb[0].mxu0
    %v5850 = vadd.f32 %v5731, %v5849
    %v5851 = vpop.f32.mrb[0].mxu0
    %v5852 = vadd.f32 %v5733, %v5851
    %5853 = vmatprep.mubr.f32.mxu0 0.0
    %v5854 = vand.u32 %v3200, 4294901760
    %5855 = vmatmul.mubr.f32.gmra.mrb[0].mxu0 %v5854
    %v5856 = vpop.f32.mrb[0].mxu0
    %v5857 = vadd.f32 %v5740, %v5856
    %v5858 = vpop.f32.mrb[0].mxu0
    %v5859 = vadd.f32 %v5742, %v5858
    %5860 = vdwg.mxu0
    %v5861 = vand.u32 %v3145, 4294901760
    %5862 = vmatprep.subr.mxu0 %v5861
    %v5863 = vand.u32 %v3144, 4294901760
    %5864 = vmatpush1.msra.mxu0 %v5863
    %v5865 = vand.u32 %v3153, 4294901760
    %5866 = vmatprep.subr.mxu0 %v5865
    %v5867 = vand.u32 %v3152, 4294901760
    %5868 = vmatpush1.msra.mxu0 %v5867
    %v5869 = vand.u32 %v3161, 4294901760
    %5870 = vmatprep.subr.mxu0 %v5869
    %v5871 = vand.u32 %v3160, 4294901760
    %5872 = vmatpush1.msra.mxu0 %v5871
    %v5873 = vand.u32 %v3169, 4294901760
    %5874 = vmatprep.subr.mxu0 %v5873
    %v5875 = vand.u32 %v3168, 4294901760
    %5876 = vmatpush1.msra.mxu0 %v5875
    %5877 = vmatprep.subr.mxu0 0.0
    %5878 = vmatpush1.msra.mxu0 0.0
    %5879 = vmatprep.subr.mxu0 0.0
    %5880 = vmatpush1.msra.mxu0 0.0
    %5881 = vmatprep.subr.mxu0 0.0
    %5882 = vmatpush1.msra.mxu0 0.0
    %5883 = vmatprep.subr.mxu0 0.0
    %5884 = vmatpush1.msra.mxu0 0.0
    %5885 = vmatprep.subr.mxu0 0.0
    %5886 = vmatpush1.msra.mxu0 0.0
    %5887 = vmatprep.subr.mxu0 0.0
    %5888 = vmatpush1.msra.mxu0 0.0
    %5889 = vmatprep.subr.mxu0 0.0
    %5890 = vmatpush1.msra.mxu0 0.0
    %5891 = vmatprep.subr.mxu0 0.0
    %5892 = vmatpush1.msra.mxu0 0.0
    %5893 = vmatprep.subr.mxu0 0.0
    %5894 = vmatpush1.msra.mxu0 0.0
    %5895 = vmatprep.subr.mxu0 0.0
    %5896 = vmatpush1.msra.mxu0 0.0
    %5897 = vmatprep.subr.mxu0 0.0
    %5898 = vmatpush1.msra.mxu0 0.0
    %5899 = vmatprep.subr.mxu0 0.0
    %5900 = vmatpush1.msra.mxu0 0.0
    %5901 = vmatprep.subr.mxu0 0.0
    %5902 = vmatpush1.msra.mxu0 0.0
    %5903 = vmatprep.subr.mxu0 0.0
    %5904 = vmatpush1.msra.mxu0 0.0
    %5905 = vmatprep.subr.mxu0 0.0
    %5906 = vmatpush1.msra.mxu0 0.0
    %5907 = vmatprep.subr.mxu0 0.0
    %5908 = vmatpush1.msra.mxu0 0.0
    %5909 = vmatprep.subr.mxu0 0.0
    %5910 = vmatpush1.msra.mxu0 0.0
    %5911 = vmatprep.subr.mxu0 0.0
    %5912 = vmatpush1.msra.mxu0 0.0
    %5913 = vmatprep.subr.mxu0 0.0
    %5914 = vmatpush1.msra.mxu0 0.0
    %5915 = vmatprep.subr.mxu0 0.0
    %5916 = vmatpush1.msra.mxu0 0.0
    %5917 = vmatprep.subr.mxu0 0.0
    %5918 = vmatpush1.msra.mxu0 0.0
    %5919 = vmatprep.subr.mxu0 0.0
    %5920 = vmatpush1.msra.mxu0 0.0
    %5921 = vmatprep.subr.mxu0 0.0
    %5922 = vmatpush1.msra.mxu0 0.0
    %5923 = vmatprep.subr.mxu0 0.0
    %5924 = vmatpush1.msra.mxu0 0.0
    %5925 = vmatprep.subr.mxu0 0.0
    %5926 = vmatpush1.msra.mxu0 0.0
    %5927 = vmatprep.subr.mxu0 0.0
    %5928 = vmatpush1.msra.mxu0 0.0
    %5929 = vmatprep.subr.mxu0 0.0
    %5930 = vmatpush1.msra.mxu0 0.0
    %5931 = vmatprep.subr.mxu0 0.0
    %5932 = vmatpush1.msra.mxu0 0.0
    %5933 = vmatprep.mubr.f32.mxu0 0.0
    %v5934 = vand.u32 %v3194, 4294901760
    %5935 = vmatmul.mubr.f32.gmra.mrb[0].mxu0 %v5934
    %v5936 = vpop.f32.mrb[0].mxu0
    %v5937 = vadd.f32 %v5836, %v5936
    %v5938 = vpop.f32.mrb[0].mxu0
    %v5939 = vadd.f32 %v5838, %v5938
    %5940 = vmatprep.mubr.f32.mxu0 0.0
    %v5941 = vand.u32 %v3196, 4294901760
    %5942 = vmatmul.mubr.f32.gmra.mrb[0].mxu0 %v5941
    %v5943 = vpop.f32.mrb[0].mxu0
    %v5944 = vadd.f32 %v5843, %v5943
    %v5945 = vpop.f32.mrb[0].mxu0
    %v5946 = vadd.f32 %v5845, %v5945
    %5947 = vmatprep.mubr.f32.mxu0 0.0
    %v5948 = vand.u32 %v3198, 4294901760
    %5949 = vmatmul.mubr.f32.gmra.mrb[0].mxu0 %v5948
    %v5950 = vpop.f32.mrb[0].mxu0
    %v5951 = vadd.f32 %v5850, %v5950
    %v5952 = vpop.f32.mrb[0].mxu0
    %v5953 = vadd.f32 %v5852, %v5952
    %5954 = vmatprep.mubr.f32.mxu0 0.0
    %v5955 = vand.u32 %v3200, 4294901760
    %5956 = vmatmul.mubr.f32.gmra.mrb[0].mxu0 %v5955
    %v5957 = vpop.f32.mrb[0].mxu0
    %v5958 = vadd.f32 %v5857, %v5957
    %v5959 = vpop.f32.mrb[0].mxu0
    %v5960 = vadd.f32 %v5859, %v5959
    %5961 = vdwg.mxu0
    %v5962 = vtanh.pop %v3867
    %v5963 = vtanh.pop %v3869
    %v5964 = vtanh.pop %v4557
    %v5965 = vtanh.pop %v4559
    %v5966 = vtanh.pop %v5247
    %v5967 = vtanh.pop %v5249
    %v5968 = vtanh.pop %v5937
    %v5969 = vtanh.pop %v5939
    %v5970 = vtanh.pop %v3874
    %v5971 = vtanh.pop %v3876
    %v5972 = vtanh.pop %v4564
    %v5973 = vtanh.pop %v4566
    %v5974 = vtanh.pop %v5254
    %v5975 = vtanh.pop %v5256
    %v5976 = vtanh.pop %v5944
    %v5977 = vtanh.pop %v5946
    %v5978 = vtanh.pop %v3881
    %v5979 = vtanh.pop %v3883
    %v5980 = vtanh.pop %v4571
    %v5981 = vtanh.pop %v4573
    %v5982 = vtanh.pop %v5261
    %v5983 = vtanh.pop %v5263
    %v5984 = vtanh.pop %v5951
    %v5985 = vtanh.pop %v5953
    %v5986 = vtanh.pop %v3888
    %v5987 = vtanh.pop %v3890
    %v5988 = vtanh.pop %v4578
    %v5989 = vtanh.pop %v4580
    %v5990 = vtanh.pop %v5268
    %v5991 = vtanh.pop %v5270
    %v5992 = vtanh.pop %v5958
    %v5993 = vtanh.pop %v5960
    %5994 = vset.pattern.permute.xlu0 69
    %5995 = vperm.xlu0 %5994, %v54
    %v5996 = vpop.permute.xlu0 %5995
    %5998 = vset.pattern.permute.xlu0 69
    %5999 = vperm.xlu0 %5998, %v55
    %v6000 = vpop.permute.xlu0 %5999
    %6002 = vset.pattern.permute.xlu0 69
    %6003 = vperm.xlu0 %6002, %v56
    %v6004 = vpop.permute.xlu0 %6003
    %6006 = vset.pattern.permute.xlu0 69
    %6007 = vperm.xlu0 %6006, %v57
    %v6008 = vpop.permute.xlu0 %6007
    %v6010 = vmul.f32 %v5996, %v5962
    %v6011 = vmul.f32 %v5996, %v5963
    %v6012 = vmul.f32 %v5996, %v5964
    %v6013 = vmul.f32 %v5996, %v5965
    %v6014 = vmul.f32 %v5996, %v5966
    %v6015 = vmul.f32 %v5996, %v5967
    %v6016 = vmul.f32 %v5996, %v5968
    %v6017 = vmul.f32 %v5996, %v5969
    %v6018 = vmul.f32 %v6000, %v5970
    %v6019 = vmul.f32 %v6000, %v5971
    %v6020 = vmul.f32 %v6000, %v5972
    %v6021 = vmul.f32 %v6000, %v5973
    %v6022 = vmul.f32 %v6000, %v5974
    %v6023 = vmul.f32 %v6000, %v5975
    %v6024 = vmul.f32 %v6000, %v5976
    %v6025 = vmul.f32 %v6000, %v5977
    %v6026 = vmul.f32 %v6004, %v5978
    %v6027 = vmul.f32 %v6004, %v5979
    %v6028 = vmul.f32 %v6004, %v5980
    %v6029 = vmul.f32 %v6004, %v5981
    %v6030 = vmul.f32 %v6004, %v5982
    %v6031 = vmul.f32 %v6004, %v5983
    %v6032 = vmul.f32 %v6004, %v5984
    %v6033 = vmul.f32 %v6004, %v5985
    %v6034 = vmul.f32 %v6008, %v5986
    %v6035 = vmul.f32 %v6008, %v5987
    %v6036 = vmul.f32 %v6008, %v5988
    %v6037 = vmul.f32 %v6008, %v5989
    %v6038 = vmul.f32 %v6008, %v5990
    %v6039 = vmul.f32 %v6008, %v5991
    %v6040 = vmul.f32 %v6008, %v5992
    %v6041 = vmul.f32 %v6008, %v5993
    %v6042 = vadd.f32 %v6010, %v6018
    %v6043 = vadd.f32 %v6042, %v6026
    %v6044 = vadd.f32 %v6043, %v6034
    %v6045 = vrot.slane %v6044, 4
    %v6046 = vadd.f32 %v6044, %v6045
    %v6047 = vrot.slane %v6046, 2
    %v6048 = vadd.f32 %v6046, %v6047
    %v6049 = vrot.slane %v6048, 1
    %v6050 = vadd.f32 %v6048, %v6049
    %v6051 = vadd.f32 %v6011, %v6019
    %v6052 = vadd.f32 %v6051, %v6027
    %v6053 = vadd.f32 %v6052, %v6035
    %v6054 = vrot.slane %v6053, 4
    %v6055 = vadd.f32 %v6053, %v6054
    %v6056 = vrot.slane %v6055, 2
    %v6057 = vadd.f32 %v6055, %v6056
    %v6058 = vrot.slane %v6057, 1
    %v6059 = vadd.f32 %v6057, %v6058
    %v6060 = vadd.f32 %v6012, %v6020
    %v6061 = vadd.f32 %v6060, %v6028
    %v6062 = vadd.f32 %v6061, %v6036
    %v6063 = vrot.slane %v6062, 4
    %v6064 = vadd.f32 %v6062, %v6063
    %v6065 = vrot.slane %v6064, 2
    %v6066 = vadd.f32 %v6064, %v6065
    %v6067 = vrot.slane %v6066, 1
    %v6068 = vadd.f32 %v6066, %v6067
    %v6069 = vadd.f32 %v6013, %v6021
    %v6070 = vadd.f32 %v6069, %v6029
    %v6071 = vadd.f32 %v6070, %v6037
    %v6072 = vrot.slane %v6071, 4
    %v6073 = vadd.f32 %v6071, %v6072
    %v6074 = vrot.slane %v6073, 2
    %v6075 = vadd.f32 %v6073, %v6074
    %v6076 = vrot.slane %v6075, 1
    %v6077 = vadd.f32 %v6075, %v6076
    %v6078 = vadd.f32 %v6014, %v6022
    %v6079 = vadd.f32 %v6078, %v6030
    %v6080 = vadd.f32 %v6079, %v6038
    %v6081 = vrot.slane %v6080, 4
    %v6082 = vadd.f32 %v6080, %v6081
    %v6083 = vrot.slane %v6082, 2
    %v6084 = vadd.f32 %v6082, %v6083
    %v6085 = vrot.slane %v6084, 1
    %v6086 = vadd.f32 %v6084, %v6085
    %v6087 = vadd.f32 %v6015, %v6023
    %v6088 = vadd.f32 %v6087, %v6031
    %v6089 = vadd.f32 %v6088, %v6039
    %v6090 = vrot.slane %v6089, 4
    %v6091 = vadd.f32 %v6089, %v6090
    %v6092 = vrot.slane %v6091, 2
    %v6093 = vadd.f32 %v6091, %v6092
    %v6094 = vrot.slane %v6093, 1
    %v6095 = vadd.f32 %v6093, %v6094
    %v6096 = vadd.f32 %v6016, %v6024
    %v6097 = vadd.f32 %v6096, %v6032
    %v6098 = vadd.f32 %v6097, %v6040
    %v6099 = vrot.slane %v6098, 4
    %v6100 = vadd.f32 %v6098, %v6099
    %v6101 = vrot.slane %v6100, 2
    %v6102 = vadd.f32 %v6100, %v6101
    %v6103 = vrot.slane %v6102, 1
    %v6104 = vadd.f32 %v6102, %v6103
    %v6105 = vadd.f32 %v6017, %v6025
    %v6106 = vadd.f32 %v6105, %v6033
    %v6107 = vadd.f32 %v6106, %v6041
    %v6108 = vrot.slane %v6107, 4
    %v6109 = vadd.f32 %v6107, %v6108
    %v6110 = vrot.slane %v6109, 2
    %v6111 = vadd.f32 %v6109, %v6110
    %v6112 = vrot.slane %v6111, 1
    %v6113 = vadd.f32 %v6111, %v6112
    %6115 = vset.pattern.permute.xlu0 70
    %6116 = vperm.xlu0 %6115, %v58
    %v6117 = vpop.permute.xlu0 %6116
    %v6119 = vadd.f32 %v6050, %v6117
    %v6120 = vadd.f32 %v6059, %v6117
    %v6121 = vadd.f32 %v6068, %v6117
    %v6122 = vadd.f32 %v6077, %v6117
    %v6123 = vadd.f32 %v6086, %v6117
    %v6124 = vadd.f32 %v6095, %v6117
    %v6125 = vadd.f32 %v6104, %v6117
    %v6126 = vadd.f32 %v6113, %v6117
    %v6135 = vcombine.low %v6119, %v6120
    %v6136 = vcombine.low %v6121, %v6122
    %v6137 = vcombine.low %v6123, %v6124
    %v6138 = vcombine.low %v6125, %v6126
    %v6140 = vunpack.c.l.s4 1966171168
    %v6141 = vunpack.c.0.s8 %v6140
    %v6142 = vlaneseq
    %v6143 = vshrl.u32 %v6142, 7
    %v6144 = vsub.s32 %v6141, %v6143
    %v6145 = vrot.slane %v6135, %v6144
    %v6147 = vunpack.c.l.s4 1966171168
    %v6148 = vunpack.c.0.s8 %v6147
    %v6149 = vlaneseq
    %v6150 = vshrl.u32 %v6149, 7
    %v6151 = vsub.s32 %v6148, %v6150
    %v6152 = vrot.slane %v6136, %v6151
    %v6154 = vunpack.c.l.s4 1966171168
    %v6155 = vunpack.c.0.s8 %v6154
    %v6156 = vlaneseq
    %v6157 = vshrl.u32 %v6156, 7
    %v6158 = vsub.s32 %v6155, %v6157
    %v6159 = vrot.slane %v6137, %v6158
    %v6161 = vunpack.c.l.s4 1966171168
    %v6162 = vunpack.c.0.s8 %v6161
    %v6163 = vlaneseq
    %v6164 = vshrl.u32 %v6163, 7
    %v6165 = vsub.s32 %v6162, %v6164
    %v6166 = vrot.slane %v6138, %v6165
    %v6167 = vcombine.low %v6145, %v6152
    %v6168 = vcombine.low %v6159, %v6166
    %v6170 = vunpack.c.l.s4 1966171168
    %v6171 = vunpack.c.0.s8 %v6170
    %v6172 = vlaneseq
    %v6173 = vshrl.u32 %v6172, 7
    %v6174 = vsub.s32 %v6171, %v6173
    %v6175 = vrot.slane %v6167, %v6174
    %v6177 = vunpack.c.l.s4 1966171168
    %v6178 = vunpack.c.0.s8 %v6177
    %v6179 = vlaneseq
    %v6180 = vshrl.u32 %v6179, 7
    %v6181 = vsub.s32 %v6178, %v6180
    %v6182 = vrot.slane %v6168, %v6181
    %v6183 = vcombine.low %v6175, %v6182
    %6185 = vst [vmem:[#allocation8] sm:$0xff] %v6183
    // Predicated region
    $region26: #{tpu_custom_call.1} parent=1 // pred_check
      _
    $region27: #{tpu_custom_call.1} parent=1 // pred_check_branch
      %6187 = sbr.rel (0) target = $region29
    $region28: #{tpu_custom_call.1} parent=1 // pred_region
      %s6189 = ssub.s32 128, 128
      %6190 = vsyncadd [#allocation4], %s6189
      %s6192 = sshll.u32 [#allocation8], 4
      %s6193 = int_to_ptr.vmem [resolvable:$true] %s6192
      %6195 = dma.vmem_to_hbm [thread:$0]  %s6193, 128, %s3, [#allocation4]
    $region29: #{tpu_custom_call.1} parent=1 // pred_fallthru
      _
    // Predicated region
    $region30: #{tpu_custom_call.1} parent=1 // pred_check
      _
    $region31: #{tpu_custom_call.1} parent=1 // pred_check_branch
      %6197 = sbr.rel (0) target = $region33
    $region32: #{tpu_custom_call.1} parent=1 // pred_region
      %6198 = dma.done [#allocation4], 128
    $region33: #{tpu_custom_call.1} parent=1 // pred_fallthru
      _
    %6199 = vsyncpa [#allocation3], 1
    %6200 = vsyncpa [#allocation6], 1
    %6201 = vsyncpa [#allocation4], 1

</llo_original>
